<compile_context>
chip_gen: v7x
topology: tpu7x:2x2x1
jax: 0.10.0
libtpu: 0.0.40
codegen_flags: <defaults>
</compile_context>

<pallas_src>
import functools

import jax
import jax.numpy as jnp
import numpy as np
from jax.experimental import pallas as pl
from jax.experimental.pallas import tpu as pltpu


# ----------------------------------------------------------------------------
# in-kernel helpers
# ----------------------------------------------------------------------------
def _layernorm(x, gamma, beta, eps=1e-5):
    mu = jnp.mean(x, axis=-1, keepdims=True)
    xc = x - mu
    var = jnp.mean(xc * xc, axis=-1, keepdims=True)
    return xc * jax.lax.rsqrt(var + eps) * gamma + beta


def _gelu_tanh(x):
    # tanh-GELU: transcendental goes to the EUP slot (free-ish vs VALU chain).
    c = 0.7978845608028654  # sqrt(2/pi)
    return 0.5 * x * (1.0 + jnp.tanh(c * (x + 0.044715 * x * x * x)))


# ----------------------------------------------------------------------------
# Fused Transformer-block kernel (one batch element per grid step).
#   x1 = x + Wout @ MHA(LN1(x)) ; out = x1 + W2 @ GELU(W1 @ LN2(x1))
# ----------------------------------------------------------------------------
def _transformer_kernel(x_ref, ln1g_ref, ln1b_ref, wqkv_ref, bias_ref,
                        wout_ref, bout_ref, ln2g_ref, ln2b_ref,
                        w1_ref, b1_ref, w2_ref, b2_ref, out_ref,
                        *, heads, dim_head, scale):
    inner = heads * dim_head
    x = x_ref[0]                                   # (N, C)

    # ---------------- attention branch ----------------
    xn = _layernorm(x, ln1g_ref[...], ln1b_ref[...])
    qkv = jnp.dot(xn, wqkv_ref[...],               # (N, 3*inner)
                  preferred_element_type=jnp.float32)

    head_outs = []
    for h in range(heads):                         # static unroll over heads
        lo = h * dim_head
        qh = qkv[:, lo:lo + dim_head] * scale                      # (N, dh)
        kh = qkv[:, inner + lo:inner + lo + dim_head]              # (N, dh)
        vh = qkv[:, 2 * inner + lo:2 * inner + lo + dim_head]      # (N, dh)

        # scores: (N, N) = (q*scale) @ k^T + relative position bias
        dots = jnp.einsum('nd,md->nm', qh, kh,
                          preferred_element_type=jnp.float32)
        dots = dots + bias_ref[h]

        # softmax over the last (lane) axis; reciprocal on the EUP slot
        m = jnp.max(dots, axis=-1, keepdims=True)
        e = jnp.exp(dots - m)
        attn = e * pl.reciprocal(jnp.sum(e, axis=-1, keepdims=True),
                                 approx=True)

        head_outs.append(jnp.dot(attn, vh,
                                 preferred_element_type=jnp.float32))

    o = jnp.concatenate(head_outs, axis=-1)        # (N, inner)
    attn_out = jnp.dot(o, wout_ref[...],           # full K=inner contraction
                       preferred_element_type=jnp.float32) + bout_ref[...]
    x1 = x + attn_out                              # residual 1

    # ---------------- feed-forward branch ----------------
    x1n = _layernorm(x1, ln2g_ref[...], ln2b_ref[...])
    h1 = jnp.dot(x1n, w1_ref[...],
                 preferred_element_type=jnp.float32) + b1_ref[...]
    h1 = _gelu_tanh(h1)
    ff = jnp.dot(h1, w2_ref[...],
                 preferred_element_type=jnp.float32) + b2_ref[...]

    out_ref[0] = x1 + ff                           # residual 2


# ----------------------------------------------------------------------------
# Wrapper: NCHW -> (B, N, C), static relative-bias gather, one pallas_call.
# ----------------------------------------------------------------------------
@functools.partial(jax.jit, static_argnames=("heads", "dim_head"))
def transformer_forward(x_nchw, params, *, heads, dim_head):
    B, C, H, W = x_nchw.shape
    N = H * W
    inner = heads * dim_head
    hidden = params["w1"].shape[1]

    # 'b c ih iw -> b (ih iw) c'
    x_seq = jnp.transpose(x_nchw.reshape(B, C, N), (0, 2, 1)).astype(jnp.float32)

    # relative positional bias: static-index gather done once -> (heads, N, N)
    bias = params["rel_table"][params["rel_index"]]        # (N*N, heads)
    bias = bias.reshape(N, N, heads).transpose(2, 0, 1)    # (heads, N, N)

    kernel = functools.partial(_transformer_kernel, heads=heads,
                               dim_head=dim_head, scale=dim_head ** (-0.5))

    out_seq = pl.pallas_call(
        kernel,
        out_shape=jax.ShapeDtypeStruct((B, N, C), jnp.float32),
        grid=(B,),
        in_specs=[
            pl.BlockSpec((1, N, C), lambda b: (b, 0, 0)),          # x tokens
            pl.BlockSpec((1, C), lambda b: (0, 0)),                # LN1 gamma
            pl.BlockSpec((1, C), lambda b: (0, 0)),                # LN1 beta
            pl.BlockSpec((C, 3 * inner), lambda b: (0, 0)),        # to_qkv
            pl.BlockSpec((heads, N, N), lambda b: (0, 0, 0)),      # rel. bias
            pl.BlockSpec((inner, C), lambda b: (0, 0)),            # to_out W
            pl.BlockSpec((1, C), lambda b: (0, 0)),                # to_out b
            pl.BlockSpec((1, C), lambda b: (0, 0)),                # LN2 gamma
            pl.BlockSpec((1, C), lambda b: (0, 0)),                # LN2 beta
            pl.BlockSpec((C, hidden), lambda b: (0, 0)),           # FF W1
            pl.BlockSpec((1, hidden), lambda b: (0, 0)),           # FF b1
            pl.BlockSpec((hidden, C), lambda b: (0, 0)),           # FF W2
            pl.BlockSpec((1, C), lambda b: (0, 0)),                # FF b2
        ],
        out_specs=pl.BlockSpec((1, N, C), lambda b: (b, 0, 0)),
        compiler_params=pltpu.CompilerParams(
            dimension_semantics=("parallel",),
            vmem_limit_bytes=32 * 1024 * 1024),
    )(x_seq, params["ln1_g"], params["ln1_b"], params["wqkv"], bias,
      params["wout"], params["bout"], params["ln2_g"], params["ln2_b"],
      params["w1"], params["b1"], params["w2"], params["b2"])

    # 'b (ih iw) c -> b c ih iw'
    return jnp.transpose(out_seq, (0, 2, 1)).reshape(B, C, H, W)


# ----------------------------------------------------------------------------
# Static relative-index buffer (matches the PyTorch construction exactly).
# ----------------------------------------------------------------------------
def _make_relative_index(ih, iw):
    ci, cj = np.meshgrid(np.arange(ih), np.arange(iw), indexing="ij")
    coords = np.stack([ci, cj]).reshape(2, -1)             # (2, N)
    rel = coords[:, :, None] - coords[:, None, :]          # (2, N, N)
    rel[0] += ih - 1
    rel[1] += iw - 1
    rel[0] *= 2 * iw - 1
    return jnp.asarray(rel.sum(0).reshape(-1), jnp.int32)  # (N*N,)


# ----------------------------------------------------------------------------
# Pure-JAX reference (exact GELU, einsum attention) for a correctness check.
# ----------------------------------------------------------------------------
def _transformer_ref(x_nchw, params, heads, dim_head):
    B, C, H, W = x_nchw.shape
    N = H * W
    inner = heads * dim_head
    x = jnp.transpose(x_nchw.reshape(B, C, N), (0, 2, 1)).astype(jnp.float32)

    def ln(v, g, b):
        mu = v.mean(-1, keepdims=True)
        var = ((v - mu) ** 2).mean(-1, keepdims=True)
        return (v - mu) / jnp.sqrt(var + 1e-5) * g + b

    xn = ln(x, params["ln1_g"][0], params["ln1_b"][0])
    qkv = xn @ params["wqkv"]
    q, k, v = jnp.split(qkv, 3, axis=-1)
    split = lambda t: t.reshape(B, N, heads, dim_head).transpose(0, 2, 1, 3)
    q, k, v = split(q), split(k), split(v)
    dots = jnp.einsum('bhnd,bhmd->bhnm', q, k) * (dim_head ** (-0.5))
    bias = params["rel_table"][params["rel_index"]].reshape(N, N, heads)
    dots = dots + bias.transpose(2, 0, 1)[None]
    attn = jax.nn.softmax(dots, axis=-1)
    o = jnp.einsum('bhnm,bhmd->bhnd', attn, v)
    o = o.transpose(0, 2, 1, 3).reshape(B, N, inner)
    x1 = x + (o @ params["wout"] + params["bout"][0])

    x1n = ln(x1, params["ln2_g"][0], params["ln2_b"][0])
    h1 = x1n @ params["w1"] + params["b1"][0]
    h1 = 0.5 * h1 * (1.0 + jax.lax.erf(h1 * (2.0 ** -0.5)))    # exact GELU
    out = x1 + (h1 @ params["w2"] + params["b2"][0])
    return jnp.transpose(out, (0, 2, 1)).reshape(B, C, H, W)


if __name__ == "__main__":
    key = jax.random.PRNGKey(0)

    # Small shapes implied by the module defaults: heads=8, dim_head=32
    # (inner=256), hidden = 4*inp.  C=128 keeps the token layout lane-dense.
    B, C, H, W = 2, 128, 8, 8          # non-downsample path requires inp == oup
    heads, dim_head = 8, 32
    inner = heads * dim_head
    hidden = int(C * 4)
    N = H * W

    kx, kp = jax.random.split(key)
    ks = jax.random.split(kp, 14)
    nrm = lambda k, s: jax.random.normal(k, s, jnp.float32)

    params = dict(
        ln1_g=1.0 + 0.1 * nrm(ks[0], (1, C)),
        ln1_b=0.1 * nrm(ks[1], (1, C)),
        wqkv=0.09 * nrm(ks[2], (C, 3 * inner)),           # to_qkv (bias=False)
        rel_table=0.1 * nrm(ks[3], ((2 * H - 1) * (2 * W - 1), heads)),
        rel_index=_make_relative_index(H, W),
        wout=0.06 * nrm(ks[4], (inner, C)),               # to_out Linear
        bout=0.05 * nrm(ks[5], (1, C)),
        ln2_g=1.0 + 0.1 * nrm(ks[6], (1, C)),
        ln2_b=0.1 * nrm(ks[7], (1, C)),
        w1=0.09 * nrm(ks[8], (C, hidden)),                # FF Linear 1
        b1=0.05 * nrm(ks[9], (1, hidden)),
        w2=0.04 * nrm(ks[10], (hidden, C)),               # FF Linear 2
        b2=0.05 * nrm(ks[11], (1, C)),
    )

    x = jax.random.normal(kx, (B, C, H, W), jnp.float32)  # NCHW input

    y = transformer_forward(x, params, heads=heads, dim_head=dim_head)
    jax.block_until_ready(y)
    assert y.shape == (B, C, H, W)

    r = _transformer_ref(x, params, heads, dim_head)
    err = float(jnp.max(jnp.abs(y - r)))
    # 5e-2 tolerance covers default-precision (bf16-input) MXU matmuls in both
    # paths plus the tanh-GELU / approx-reciprocal softmax approximations.
    assert err < 5e-2, f"max abs err {err}"

    print("KERNEL_OK")
</pallas_src>

<mosaic_0001>
module attributes {stable_mosaic.version = 11 : i64} {
  func.func @_transformer_kernel(%arg0: i32, %arg1: memref<1x64x128xf32, #tpu.memory_space<vmem>>, %arg2: memref<1x128xf32, #tpu.memory_space<vmem>>, %arg3: memref<1x128xf32, #tpu.memory_space<vmem>>, %arg4: memref<128x768xf32, #tpu.memory_space<vmem>>, %arg5: memref<8x64x64xf32, #tpu.memory_space<vmem>>, %arg6: memref<256x128xf32, #tpu.memory_space<vmem>>, %arg7: memref<1x128xf32, #tpu.memory_space<vmem>>, %arg8: memref<1x128xf32, #tpu.memory_space<vmem>>, %arg9: memref<1x128xf32, #tpu.memory_space<vmem>>, %arg10: memref<128x512xf32, #tpu.memory_space<vmem>>, %arg11: memref<1x512xf32, #tpu.memory_space<vmem>>, %arg12: memref<512x128xf32, #tpu.memory_space<vmem>>, %arg13: memref<1x128xf32, #tpu.memory_space<vmem>>, %arg14: memref<1x64x128xf32, #tpu.memory_space<vmem>>) attributes {dimension_semantics = [#tpu.dimension_semantics<parallel>], iteration_bounds = array<i64: 2>, scalar_prefetch = 0 : i64, scratch_operands = 0 : i64, tpu.core_type = #tpu.core_type<tc>, window_params = [{transform_indices = @transform_0, window_bounds = array<i64: 1, 64, 128>}, {pipeline_mode = #tpu.pipeline_mode<synchronous>, transform_indices = @transform_1, window_bounds = array<i64: 1, 128>}, {pipeline_mode = #tpu.pipeline_mode<synchronous>, transform_indices = @transform_2, window_bounds = array<i64: 1, 128>}, {pipeline_mode = #tpu.pipeline_mode<synchronous>, transform_indices = @transform_3, window_bounds = array<i64: 128, 768>}, {pipeline_mode = #tpu.pipeline_mode<synchronous>, transform_indices = @transform_4, window_bounds = array<i64: 8, 64, 64>}, {pipeline_mode = #tpu.pipeline_mode<synchronous>, transform_indices = @transform_5, window_bounds = array<i64: 256, 128>}, {pipeline_mode = #tpu.pipeline_mode<synchronous>, transform_indices = @transform_6, window_bounds = array<i64: 1, 128>}, {pipeline_mode = #tpu.pipeline_mode<synchronous>, transform_indices = @transform_7, window_bounds = array<i64: 1, 128>}, {pipeline_mode = #tpu.pipeline_mode<synchronous>, transform_indices = @transform_8, window_bounds = array<i64: 1, 128>}, {pipeline_mode = #tpu.pipeline_mode<synchronous>, transform_indices = @transform_9, window_bounds = array<i64: 128, 512>}, {pipeline_mode = #tpu.pipeline_mode<synchronous>, transform_indices = @transform_10, window_bounds = array<i64: 1, 512>}, {pipeline_mode = #tpu.pipeline_mode<synchronous>, transform_indices = @transform_11, window_bounds = array<i64: 512, 128>}, {pipeline_mode = #tpu.pipeline_mode<synchronous>, transform_indices = @transform_12, window_bounds = array<i64: 1, 128>}, {transform_indices = @transform_13, window_bounds = array<i64: 1, 64, 128>}]} {
    %c0 = arith.constant 0 : index
    %c0_0 = arith.constant 0 : index
    %c0_1 = arith.constant 0 : index
    %0 = vector.load %arg1[%c0, %c0_0, %c0_1] : memref<1x64x128xf32, #tpu.memory_space<vmem>>, vector<1x64x128xf32>
    %1 = vector.shape_cast %0 : vector<1x64x128xf32> to vector<64x128xf32>
    %c0_2 = arith.constant 0 : index
    %c0_3 = arith.constant 0 : index
    %2 = vector.load %arg2[%c0_2, %c0_3] : memref<1x128xf32, #tpu.memory_space<vmem>>, vector<1x128xf32>
    %c0_4 = arith.constant 0 : index
    %c0_5 = arith.constant 0 : index
    %3 = vector.load %arg3[%c0_4, %c0_5] : memref<1x128xf32, #tpu.memory_space<vmem>>, vector<1x128xf32>
    %cst = arith.constant dense<0.000000e+00> : vector<64xf32>
    %4 = vector.multi_reduction <add>, %1, %cst [1] : vector<64x128xf32> to vector<64xf32>
    %5 = vector.shape_cast %4 : vector<64xf32> to vector<64x1xf32>
    %cst_6 = arith.constant 1.280000e+02 : f32
    %6 = vector.broadcast %cst_6 : f32 to vector<64x1xf32>
    %7 = arith.divf %5, %6 : vector<64x1xf32>
    %8 = vector.broadcast %7 : vector<64x1xf32> to vector<64x128xf32>
    %9 = arith.subf %1, %8 : vector<64x128xf32>
    %10 = arith.mulf %9, %9 : vector<64x128xf32>
    %cst_7 = arith.constant dense<0.000000e+00> : vector<64xf32>
    %11 = vector.multi_reduction <add>, %10, %cst_7 [1] : vector<64x128xf32> to vector<64xf32>
    %12 = vector.shape_cast %11 : vector<64xf32> to vector<64x1xf32>
    %cst_8 = arith.constant 1.280000e+02 : f32
    %13 = vector.broadcast %cst_8 : f32 to vector<64x1xf32>
    %14 = arith.divf %12, %13 : vector<64x1xf32>
    %cst_9 = arith.constant 9.99999974E-6 : f32
    %15 = vector.broadcast %cst_9 : f32 to vector<64x1xf32>
    %16 = arith.addf %14, %15 : vector<64x1xf32>
    %17 = math.rsqrt %16 : vector<64x1xf32>
    %18 = vector.broadcast %17 : vector<64x1xf32> to vector<64x128xf32>
    %19 = arith.mulf %9, %18 : vector<64x128xf32>
    %20 = vector.broadcast %2 : vector<1x128xf32> to vector<64x128xf32>
    %21 = arith.mulf %19, %20 : vector<64x128xf32>
    %22 = vector.broadcast %3 : vector<1x128xf32> to vector<64x128xf32>
    %23 = arith.addf %21, %22 : vector<64x128xf32>
    %c0_10 = arith.constant 0 : index
    %c0_11 = arith.constant 0 : index
    %24 = vector.load %arg4[%c0_10, %c0_11] : memref<128x768xf32, #tpu.memory_space<vmem>>, vector<128x768xf32>
    %cst_12 = arith.constant dense<0.000000e+00> : vector<64x768xf32>
    %25 = tpu.matmul %23, %24, %cst_12 {dimension_numbers = #tpu.dot_dimension_numbers<[1], [0], [0], [1], [0, 0, 1, 1], [], []>} : vector<64x128xf32>, vector<128x768xf32>, vector<64x768xf32> -> vector<64x768xf32>
    %26 = vector.extract_strided_slice %25 {offsets = [0, 0], sizes = [64, 32], strides = [1, 1]} : vector<64x768xf32> to vector<64x32xf32>
    %cst_13 = arith.constant 0.176776692 : f32
    %27 = vector.broadcast %cst_13 : f32 to vector<64x32xf32>
    %28 = arith.mulf %26, %27 : vector<64x32xf32>
    %29 = vector.extract_strided_slice %25 {offsets = [0, 256], sizes = [64, 32], strides = [1, 1]} : vector<64x768xf32> to vector<64x32xf32>
    %30 = vector.extract_strided_slice %25 {offsets = [0, 512], sizes = [64, 32], strides = [1, 1]} : vector<64x768xf32> to vector<64x32xf32>
    "tpu.trace_start"() <{level = 10 : i32, message = "nd,md->nm"}> : () -> ()
    %cst_14 = arith.constant dense<0.000000e+00> : vector<64x64xf32>
    %31 = tpu.matmul %28, %29, %cst_14 {dimension_numbers = #tpu.dot_dimension_numbers<[1], [1], [0], [0], [0, 0, 1, 0], [], []>} : vector<64x32xf32>, vector<64x32xf32>, vector<64x64xf32> -> vector<64x64xf32>
    "tpu.trace_stop"() : () -> ()
    %c0_15 = arith.constant 0 : index
    %c0_16 = arith.constant 0 : index
    %c0_17 = arith.constant 0 : index
    %32 = vector.load %arg5[%c0_15, %c0_16, %c0_17] : memref<8x64x64xf32, #tpu.memory_space<vmem>>, vector<1x64x64xf32>
    %33 = vector.shape_cast %32 : vector<1x64x64xf32> to vector<64x64xf32>
    %34 = arith.addf %31, %33 : vector<64x64xf32>
    %cst_18 = arith.constant dense<0xFF800000> : vector<64xf32>
    %35 = vector.multi_reduction <maximumf>, %34, %cst_18 [1] : vector<64x64xf32> to vector<64xf32>
    %36 = vector.shape_cast %35 : vector<64xf32> to vector<64x1xf32>
    %37 = vector.broadcast %36 : vector<64x1xf32> to vector<64x64xf32>
    %38 = arith.subf %34, %37 : vector<64x64xf32>
    %39 = math.exp %38 : vector<64x64xf32>
    %cst_19 = arith.constant dense<0.000000e+00> : vector<64xf32>
    %40 = vector.multi_reduction <add>, %39, %cst_19 [1] : vector<64x64xf32> to vector<64xf32>
    %41 = vector.shape_cast %40 : vector<64xf32> to vector<64x1xf32>
    %42 = tpu.reciprocal %41 {approx = true} : vector<64x1xf32> -> vector<64x1xf32>
    %43 = vector.broadcast %42 : vector<64x1xf32> to vector<64x64xf32>
    %44 = arith.mulf %39, %43 : vector<64x64xf32>
    %cst_20 = arith.constant dense<0.000000e+00> : vector<64x32xf32>
    %45 = tpu.matmul %44, %30, %cst_20 {dimension_numbers = #tpu.dot_dimension_numbers<[1], [0], [0], [1], [0, 0, 1, 1], [], []>} : vector<64x64xf32>, vector<64x32xf32>, vector<64x32xf32> -> vector<64x32xf32>
    %46 = vector.extract_strided_slice %25 {offsets = [0, 32], sizes = [64, 32], strides = [1, 1]} : vector<64x768xf32> to vector<64x32xf32>
    %cst_21 = arith.constant 0.176776692 : f32
    %47 = vector.broadcast %cst_21 : f32 to vector<64x32xf32>
    %48 = arith.mulf %46, %47 : vector<64x32xf32>
    %49 = vector.extract_strided_slice %25 {offsets = [0, 288], sizes = [64, 32], strides = [1, 1]} : vector<64x768xf32> to vector<64x32xf32>
    %50 = vector.extract_strided_slice %25 {offsets = [0, 544], sizes = [64, 32], strides = [1, 1]} : vector<64x768xf32> to vector<64x32xf32>
    "tpu.trace_start"() <{level = 10 : i32, message = "nd,md->nm"}> : () -> ()
    %cst_22 = arith.constant dense<0.000000e+00> : vector<64x64xf32>
    %51 = tpu.matmul %48, %49, %cst_22 {dimension_numbers = #tpu.dot_dimension_numbers<[1], [1], [0], [0], [0, 0, 1, 0], [], []>} : vector<64x32xf32>, vector<64x32xf32>, vector<64x64xf32> -> vector<64x64xf32>
    "tpu.trace_stop"() : () -> ()
    %c1 = arith.constant 1 : index
    %c0_23 = arith.constant 0 : index
    %c0_24 = arith.constant 0 : index
    %52 = vector.load %arg5[%c1, %c0_23, %c0_24] : memref<8x64x64xf32, #tpu.memory_space<vmem>>, vector<1x64x64xf32>
    %53 = vector.shape_cast %52 : vector<1x64x64xf32> to vector<64x64xf32>
    %54 = arith.addf %51, %53 : vector<64x64xf32>
    %cst_25 = arith.constant dense<0xFF800000> : vector<64xf32>
    %55 = vector.multi_reduction <maximumf>, %54, %cst_25 [1] : vector<64x64xf32> to vector<64xf32>
    %56 = vector.shape_cast %55 : vector<64xf32> to vector<64x1xf32>
    %57 = vector.broadcast %56 : vector<64x1xf32> to vector<64x64xf32>
    %58 = arith.subf %54, %57 : vector<64x64xf32>
    %59 = math.exp %58 : vector<64x64xf32>
    %cst_26 = arith.constant dense<0.000000e+00> : vector<64xf32>
    %60 = vector.multi_reduction <add>, %59, %cst_26 [1] : vector<64x64xf32> to vector<64xf32>
    %61 = vector.shape_cast %60 : vector<64xf32> to vector<64x1xf32>
    %62 = tpu.reciprocal %61 {approx = true} : vector<64x1xf32> -> vector<64x1xf32>
    %63 = vector.broadcast %62 : vector<64x1xf32> to vector<64x64xf32>
    %64 = arith.mulf %59, %63 : vector<64x64xf32>
    %cst_27 = arith.constant dense<0.000000e+00> : vector<64x32xf32>
    %65 = tpu.matmul %64, %50, %cst_27 {dimension_numbers = #tpu.dot_dimension_numbers<[1], [0], [0], [1], [0, 0, 1, 1], [], []>} : vector<64x64xf32>, vector<64x32xf32>, vector<64x32xf32> -> vector<64x32xf32>
    %66 = vector.extract_strided_slice %25 {offsets = [0, 64], sizes = [64, 32], strides = [1, 1]} : vector<64x768xf32> to vector<64x32xf32>
    %cst_28 = arith.constant 0.176776692 : f32
    %67 = vector.broadcast %cst_28 : f32 to vector<64x32xf32>
    %68 = arith.mulf %66, %67 : vector<64x32xf32>
    %69 = vector.extract_strided_slice %25 {offsets = [0, 320], sizes = [64, 32], strides = [1, 1]} : vector<64x768xf32> to vector<64x32xf32>
    %70 = vector.extract_strided_slice %25 {offsets = [0, 576], sizes = [64, 32], strides = [1, 1]} : vector<64x768xf32> to vector<64x32xf32>
    "tpu.trace_start"() <{level = 10 : i32, message = "nd,md->nm"}> : () -> ()
    %cst_29 = arith.constant dense<0.000000e+00> : vector<64x64xf32>
    %71 = tpu.matmul %68, %69, %cst_29 {dimension_numbers = #tpu.dot_dimension_numbers<[1], [1], [0], [0], [0, 0, 1, 0], [], []>} : vector<64x32xf32>, vector<64x32xf32>, vector<64x64xf32> -> vector<64x64xf32>
    "tpu.trace_stop"() : () -> ()
    %c2 = arith.constant 2 : index
    %c0_30 = arith.constant 0 : index
    %c0_31 = arith.constant 0 : index
    %72 = vector.load %arg5[%c2, %c0_30, %c0_31] : memref<8x64x64xf32, #tpu.memory_space<vmem>>, vector<1x64x64xf32>
    %73 = vector.shape_cast %72 : vector<1x64x64xf32> to vector<64x64xf32>
    %74 = arith.addf %71, %73 : vector<64x64xf32>
    %cst_32 = arith.constant dense<0xFF800000> : vector<64xf32>
    %75 = vector.multi_reduction <maximumf>, %74, %cst_32 [1] : vector<64x64xf32> to vector<64xf32>
    %76 = vector.shape_cast %75 : vector<64xf32> to vector<64x1xf32>
    %77 = vector.broadcast %76 : vector<64x1xf32> to vector<64x64xf32>
    %78 = arith.subf %74, %77 : vector<64x64xf32>
    %79 = math.exp %78 : vector<64x64xf32>
    %cst_33 = arith.constant dense<0.000000e+00> : vector<64xf32>
    %80 = vector.multi_reduction <add>, %79, %cst_33 [1] : vector<64x64xf32> to vector<64xf32>
    %81 = vector.shape_cast %80 : vector<64xf32> to vector<64x1xf32>
    %82 = tpu.reciprocal %81 {approx = true} : vector<64x1xf32> -> vector<64x1xf32>
    %83 = vector.broadcast %82 : vector<64x1xf32> to vector<64x64xf32>
    %84 = arith.mulf %79, %83 : vector<64x64xf32>
    %cst_34 = arith.constant dense<0.000000e+00> : vector<64x32xf32>
    %85 = tpu.matmul %84, %70, %cst_34 {dimension_numbers = #tpu.dot_dimension_numbers<[1], [0], [0], [1], [0, 0, 1, 1], [], []>} : vector<64x64xf32>, vector<64x32xf32>, vector<64x32xf32> -> vector<64x32xf32>
    %86 = vector.extract_strided_slice %25 {offsets = [0, 96], sizes = [64, 32], strides = [1, 1]} : vector<64x768xf32> to vector<64x32xf32>
    %cst_35 = arith.constant 0.176776692 : f32
    %87 = vector.broadcast %cst_35 : f32 to vector<64x32xf32>
    %88 = arith.mulf %86, %87 : vector<64x32xf32>
    %89 = vector.extract_strided_slice %25 {offsets = [0, 352], sizes = [64, 32], strides = [1, 1]} : vector<64x768xf32> to vector<64x32xf32>
    %90 = vector.extract_strided_slice %25 {offsets = [0, 608], sizes = [64, 32], strides = [1, 1]} : vector<64x768xf32> to vector<64x32xf32>
    "tpu.trace_start"() <{level = 10 : i32, message = "nd,md->nm"}> : () -> ()
    %cst_36 = arith.constant dense<0.000000e+00> : vector<64x64xf32>
    %91 = tpu.matmul %88, %89, %cst_36 {dimension_numbers = #tpu.dot_dimension_numbers<[1], [1], [0], [0], [0, 0, 1, 0], [], []>} : vector<64x32xf32>, vector<64x32xf32>, vector<64x64xf32> -> vector<64x64xf32>
    "tpu.trace_stop"() : () -> ()
    %c3 = arith.constant 3 : index
    %c0_37 = arith.constant 0 : index
    %c0_38 = arith.constant 0 : index
    %92 = vector.load %arg5[%c3, %c0_37, %c0_38] : memref<8x64x64xf32, #tpu.memory_space<vmem>>, vector<1x64x64xf32>
    %93 = vector.shape_cast %92 : vector<1x64x64xf32> to vector<64x64xf32>
    %94 = arith.addf %91, %93 : vector<64x64xf32>
    %cst_39 = arith.constant dense<0xFF800000> : vector<64xf32>
    %95 = vector.multi_reduction <maximumf>, %94, %cst_39 [1] : vector<64x64xf32> to vector<64xf32>
    %96 = vector.shape_cast %95 : vector<64xf32> to vector<64x1xf32>
    %97 = vector.broadcast %96 : vector<64x1xf32> to vector<64x64xf32>
    %98 = arith.subf %94, %97 : vector<64x64xf32>
    %99 = math.exp %98 : vector<64x64xf32>
    %cst_40 = arith.constant dense<0.000000e+00> : vector<64xf32>
    %100 = vector.multi_reduction <add>, %99, %cst_40 [1] : vector<64x64xf32> to vector<64xf32>
    %101 = vector.shape_cast %100 : vector<64xf32> to vector<64x1xf32>
    %102 = tpu.reciprocal %101 {approx = true} : vector<64x1xf32> -> vector<64x1xf32>
    %103 = vector.broadcast %102 : vector<64x1xf32> to vector<64x64xf32>
    %104 = arith.mulf %99, %103 : vector<64x64xf32>
    %cst_41 = arith.constant dense<0.000000e+00> : vector<64x32xf32>
    %105 = tpu.matmul %104, %90, %cst_41 {dimension_numbers = #tpu.dot_dimension_numbers<[1], [0], [0], [1], [0, 0, 1, 1], [], []>} : vector<64x64xf32>, vector<64x32xf32>, vector<64x32xf32> -> vector<64x32xf32>
    %106 = vector.extract_strided_slice %25 {offsets = [0, 128], sizes = [64, 32], strides = [1, 1]} : vector<64x768xf32> to vector<64x32xf32>
    %cst_42 = arith.constant 0.176776692 : f32
    %107 = vector.broadcast %cst_42 : f32 to vector<64x32xf32>
    %108 = arith.mulf %106, %107 : vector<64x32xf32>
    %109 = vector.extract_strided_slice %25 {offsets = [0, 384], sizes = [64, 32], strides = [1, 1]} : vector<64x768xf32> to vector<64x32xf32>
    %110 = vector.extract_strided_slice %25 {offsets = [0, 640], sizes = [64, 32], strides = [1, 1]} : vector<64x768xf32> to vector<64x32xf32>
    "tpu.trace_start"() <{level = 10 : i32, message = "nd,md->nm"}> : () -> ()
    %cst_43 = arith.constant dense<0.000000e+00> : vector<64x64xf32>
    %111 = tpu.matmul %108, %109, %cst_43 {dimension_numbers = #tpu.dot_dimension_numbers<[1], [1], [0], [0], [0, 0, 1, 0], [], []>} : vector<64x32xf32>, vector<64x32xf32>, vector<64x64xf32> -> vector<64x64xf32>
    "tpu.trace_stop"() : () -> ()
    %c4 = arith.constant 4 : index
    %c0_44 = arith.constant 0 : index
    %c0_45 = arith.constant 0 : index
    %112 = vector.load %arg5[%c4, %c0_44, %c0_45] : memref<8x64x64xf32, #tpu.memory_space<vmem>>, vector<1x64x64xf32>
    %113 = vector.shape_cast %112 : vector<1x64x64xf32> to vector<64x64xf32>
    %114 = arith.addf %111, %113 : vector<64x64xf32>
    %cst_46 = arith.constant dense<0xFF800000> : vector<64xf32>
    %115 = vector.multi_reduction <maximumf>, %114, %cst_46 [1] : vector<64x64xf32> to vector<64xf32>
    %116 = vector.shape_cast %115 : vector<64xf32> to vector<64x1xf32>
    %117 = vector.broadcast %116 : vector<64x1xf32> to vector<64x64xf32>
    %118 = arith.subf %114, %117 : vector<64x64xf32>
    %119 = math.exp %118 : vector<64x64xf32>
    %cst_47 = arith.constant dense<0.000000e+00> : vector<64xf32>
    %120 = vector.multi_reduction <add>, %119, %cst_47 [1] : vector<64x64xf32> to vector<64xf32>
    %121 = vector.shape_cast %120 : vector<64xf32> to vector<64x1xf32>
    %122 = tpu.reciprocal %121 {approx = true} : vector<64x1xf32> -> vector<64x1xf32>
    %123 = vector.broadcast %122 : vector<64x1xf32> to vector<64x64xf32>
    %124 = arith.mulf %119, %123 : vector<64x64xf32>
    %cst_48 = arith.constant dense<0.000000e+00> : vector<64x32xf32>
    %125 = tpu.matmul %124, %110, %cst_48 {dimension_numbers = #tpu.dot_dimension_numbers<[1], [0], [0], [1], [0, 0, 1, 1], [], []>} : vector<64x64xf32>, vector<64x32xf32>, vector<64x32xf32> -> vector<64x32xf32>
    %126 = vector.extract_strided_slice %25 {offsets = [0, 160], sizes = [64, 32], strides = [1, 1]} : vector<64x768xf32> to vector<64x32xf32>
    %cst_49 = arith.constant 0.176776692 : f32
    %127 = vector.broadcast %cst_49 : f32 to vector<64x32xf32>
    %128 = arith.mulf %126, %127 : vector<64x32xf32>
    %129 = vector.extract_strided_slice %25 {offsets = [0, 416], sizes = [64, 32], strides = [1, 1]} : vector<64x768xf32> to vector<64x32xf32>
    %130 = vector.extract_strided_slice %25 {offsets = [0, 672], sizes = [64, 32], strides = [1, 1]} : vector<64x768xf32> to vector<64x32xf32>
    "tpu.trace_start"() <{level = 10 : i32, message = "nd,md->nm"}> : () -> ()
    %cst_50 = arith.constant dense<0.000000e+00> : vector<64x64xf32>
    %131 = tpu.matmul %128, %129, %cst_50 {dimension_numbers = #tpu.dot_dimension_numbers<[1], [1], [0], [0], [0, 0, 1, 0], [], []>} : vector<64x32xf32>, vector<64x32xf32>, vector<64x64xf32> -> vector<64x64xf32>
    "tpu.trace_stop"() : () -> ()
    %c5 = arith.constant 5 : index
    %c0_51 = arith.constant 0 : index
    %c0_52 = arith.constant 0 : index
    %132 = vector.load %arg5[%c5, %c0_51, %c0_52] : memref<8x64x64xf32, #tpu.memory_space<vmem>>, vector<1x64x64xf32>
    %133 = vector.shape_cast %132 : vector<1x64x64xf32> to vector<64x64xf32>
    %134 = arith.addf %131, %133 : vector<64x64xf32>
    %cst_53 = arith.constant dense<0xFF800000> : vector<64xf32>
    %135 = vector.multi_reduction <maximumf>, %134, %cst_53 [1] : vector<64x64xf32> to vector<64xf32>
    %136 = vector.shape_cast %135 : vector<64xf32> to vector<64x1xf32>
    %137 = vector.broadcast %136 : vector<64x1xf32> to vector<64x64xf32>
    %138 = arith.subf %134, %137 : vector<64x64xf32>
    %139 = math.exp %138 : vector<64x64xf32>
    %cst_54 = arith.constant dense<0.000000e+00> : vector<64xf32>
    %140 = vector.multi_reduction <add>, %139, %cst_54 [1] : vector<64x64xf32> to vector<64xf32>
    %141 = vector.shape_cast %140 : vector<64xf32> to vector<64x1xf32>
    %142 = tpu.reciprocal %141 {approx = true} : vector<64x1xf32> -> vector<64x1xf32>
    %143 = vector.broadcast %142 : vector<64x1xf32> to vector<64x64xf32>
    %144 = arith.mulf %139, %143 : vector<64x64xf32>
    %cst_55 = arith.constant dense<0.000000e+00> : vector<64x32xf32>
    %145 = tpu.matmul %144, %130, %cst_55 {dimension_numbers = #tpu.dot_dimension_numbers<[1], [0], [0], [1], [0, 0, 1, 1], [], []>} : vector<64x64xf32>, vector<64x32xf32>, vector<64x32xf32> -> vector<64x32xf32>
    %146 = vector.extract_strided_slice %25 {offsets = [0, 192], sizes = [64, 32], strides = [1, 1]} : vector<64x768xf32> to vector<64x32xf32>
    %cst_56 = arith.constant 0.176776692 : f32
    %147 = vector.broadcast %cst_56 : f32 to vector<64x32xf32>
    %148 = arith.mulf %146, %147 : vector<64x32xf32>
    %149 = vector.extract_strided_slice %25 {offsets = [0, 448], sizes = [64, 32], strides = [1, 1]} : vector<64x768xf32> to vector<64x32xf32>
    %150 = vector.extract_strided_slice %25 {offsets = [0, 704], sizes = [64, 32], strides = [1, 1]} : vector<64x768xf32> to vector<64x32xf32>
    "tpu.trace_start"() <{level = 10 : i32, message = "nd,md->nm"}> : () -> ()
    %cst_57 = arith.constant dense<0.000000e+00> : vector<64x64xf32>
    %151 = tpu.matmul %148, %149, %cst_57 {dimension_numbers = #tpu.dot_dimension_numbers<[1], [1], [0], [0], [0, 0, 1, 0], [], []>} : vector<64x32xf32>, vector<64x32xf32>, vector<64x64xf32> -> vector<64x64xf32>
    "tpu.trace_stop"() : () -> ()
    %c6 = arith.constant 6 : index
    %c0_58 = arith.constant 0 : index
    %c0_59 = arith.constant 0 : index
    %152 = vector.load %arg5[%c6, %c0_58, %c0_59] : memref<8x64x64xf32, #tpu.memory_space<vmem>>, vector<1x64x64xf32>
    %153 = vector.shape_cast %152 : vector<1x64x64xf32> to vector<64x64xf32>
    %154 = arith.addf %151, %153 : vector<64x64xf32>
    %cst_60 = arith.constant dense<0xFF800000> : vector<64xf32>
    %155 = vector.multi_reduction <maximumf>, %154, %cst_60 [1] : vector<64x64xf32> to vector<64xf32>
    %156 = vector.shape_cast %155 : vector<64xf32> to vector<64x1xf32>
    %157 = vector.broadcast %156 : vector<64x1xf32> to vector<64x64xf32>
    %158 = arith.subf %154, %157 : vector<64x64xf32>
    %159 = math.exp %158 : vector<64x64xf32>
    %cst_61 = arith.constant dense<0.000000e+00> : vector<64xf32>
    %160 = vector.multi_reduction <add>, %159, %cst_61 [1] : vector<64x64xf32> to vector<64xf32>
    %161 = vector.shape_cast %160 : vector<64xf32> to vector<64x1xf32>
    %162 = tpu.reciprocal %161 {approx = true} : vector<64x1xf32> -> vector<64x1xf32>
    %163 = vector.broadcast %162 : vector<64x1xf32> to vector<64x64xf32>
    %164 = arith.mulf %159, %163 : vector<64x64xf32>
    %cst_62 = arith.constant dense<0.000000e+00> : vector<64x32xf32>
    %165 = tpu.matmul %164, %150, %cst_62 {dimension_numbers = #tpu.dot_dimension_numbers<[1], [0], [0], [1], [0, 0, 1, 1], [], []>} : vector<64x64xf32>, vector<64x32xf32>, vector<64x32xf32> -> vector<64x32xf32>
    %166 = vector.extract_strided_slice %25 {offsets = [0, 224], sizes = [64, 32], strides = [1, 1]} : vector<64x768xf32> to vector<64x32xf32>
    %cst_63 = arith.constant 0.176776692 : f32
    %167 = vector.broadcast %cst_63 : f32 to vector<64x32xf32>
    %168 = arith.mulf %166, %167 : vector<64x32xf32>
    %169 = vector.extract_strided_slice %25 {offsets = [0, 480], sizes = [64, 32], strides = [1, 1]} : vector<64x768xf32> to vector<64x32xf32>
    %170 = vector.extract_strided_slice %25 {offsets = [0, 736], sizes = [64, 32], strides = [1, 1]} : vector<64x768xf32> to vector<64x32xf32>
    "tpu.trace_start"() <{level = 10 : i32, message = "nd,md->nm"}> : () -> ()
    %cst_64 = arith.constant dense<0.000000e+00> : vector<64x64xf32>
    %171 = tpu.matmul %168, %169, %cst_64 {dimension_numbers = #tpu.dot_dimension_numbers<[1], [1], [0], [0], [0, 0, 1, 0], [], []>} : vector<64x32xf32>, vector<64x32xf32>, vector<64x64xf32> -> vector<64x64xf32>
    "tpu.trace_stop"() : () -> ()
    %c7 = arith.constant 7 : index
    %c0_65 = arith.constant 0 : index
    %c0_66 = arith.constant 0 : index
    %172 = vector.load %arg5[%c7, %c0_65, %c0_66] : memref<8x64x64xf32, #tpu.memory_space<vmem>>, vector<1x64x64xf32>
    %173 = vector.shape_cast %172 : vector<1x64x64xf32> to vector<64x64xf32>
    %174 = arith.addf %171, %173 : vector<64x64xf32>
    %cst_67 = arith.constant dense<0xFF800000> : vector<64xf32>
    %175 = vector.multi_reduction <maximumf>, %174, %cst_67 [1] : vector<64x64xf32> to vector<64xf32>
    %176 = vector.shape_cast %175 : vector<64xf32> to vector<64x1xf32>
    %177 = vector.broadcast %176 : vector<64x1xf32> to vector<64x64xf32>
    %178 = arith.subf %174, %177 : vector<64x64xf32>
    %179 = math.exp %178 : vector<64x64xf32>
    %cst_68 = arith.constant dense<0.000000e+00> : vector<64xf32>
    %180 = vector.multi_reduction <add>, %179, %cst_68 [1] : vector<64x64xf32> to vector<64xf32>
    %181 = vector.shape_cast %180 : vector<64xf32> to vector<64x1xf32>
    %182 = tpu.reciprocal %181 {approx = true} : vector<64x1xf32> -> vector<64x1xf32>
    %183 = vector.broadcast %182 : vector<64x1xf32> to vector<64x64xf32>
    %184 = arith.mulf %179, %183 : vector<64x64xf32>
    %cst_69 = arith.constant dense<0.000000e+00> : vector<64x32xf32>
    %185 = tpu.matmul %184, %170, %cst_69 {dimension_numbers = #tpu.dot_dimension_numbers<[1], [0], [0], [1], [0, 0, 1, 1], [], []>} : vector<64x64xf32>, vector<64x32xf32>, vector<64x32xf32> -> vector<64x32xf32>
    %186 = tpu.concatenate %45, %65, %85, %105, %125, %145, %165, %185 in 1 : vector<64x32xf32>, vector<64x32xf32>, vector<64x32xf32>, vector<64x32xf32>, vector<64x32xf32>, vector<64x32xf32>, vector<64x32xf32>, vector<64x32xf32> -> vector<64x256xf32>
    %c0_70 = arith.constant 0 : index
    %c0_71 = arith.constant 0 : index
    %187 = vector.load %arg6[%c0_70, %c0_71] : memref<256x128xf32, #tpu.memory_space<vmem>>, vector<256x128xf32>
    %cst_72 = arith.constant dense<0.000000e+00> : vector<64x128xf32>
    %188 = tpu.matmul %186, %187, %cst_72 {dimension_numbers = #tpu.dot_dimension_numbers<[1], [0], [0], [1], [0, 0, 1, 1], [], []>} : vector<64x256xf32>, vector<256x128xf32>, vector<64x128xf32> -> vector<64x128xf32>
    %c0_73 = arith.constant 0 : index
    %c0_74 = arith.constant 0 : index
    %189 = vector.load %arg7[%c0_73, %c0_74] : memref<1x128xf32, #tpu.memory_space<vmem>>, vector<1x128xf32>
    %190 = vector.broadcast %189 : vector<1x128xf32> to vector<64x128xf32>
    %191 = arith.addf %188, %190 : vector<64x128xf32>
    %192 = arith.addf %1, %191 : vector<64x128xf32>
    %c0_75 = arith.constant 0 : index
    %c0_76 = arith.constant 0 : index
    %193 = vector.load %arg8[%c0_75, %c0_76] : memref<1x128xf32, #tpu.memory_space<vmem>>, vector<1x128xf32>
    %c0_77 = arith.constant 0 : index
    %c0_78 = arith.constant 0 : index
    %194 = vector.load %arg9[%c0_77, %c0_78] : memref<1x128xf32, #tpu.memory_space<vmem>>, vector<1x128xf32>
    %cst_79 = arith.constant dense<0.000000e+00> : vector<64xf32>
    %195 = vector.multi_reduction <add>, %192, %cst_79 [1] : vector<64x128xf32> to vector<64xf32>
    %196 = vector.shape_cast %195 : vector<64xf32> to vector<64x1xf32>
    %cst_80 = arith.constant 1.280000e+02 : f32
    %197 = vector.broadcast %cst_80 : f32 to vector<64x1xf32>
    %198 = arith.divf %196, %197 : vector<64x1xf32>
    %199 = vector.broadcast %198 : vector<64x1xf32> to vector<64x128xf32>
    %200 = arith.subf %192, %199 : vector<64x128xf32>
    %201 = arith.mulf %200, %200 : vector<64x128xf32>
    %cst_81 = arith.constant dense<0.000000e+00> : vector<64xf32>
    %202 = vector.multi_reduction <add>, %201, %cst_81 [1] : vector<64x128xf32> to vector<64xf32>
    %203 = vector.shape_cast %202 : vector<64xf32> to vector<64x1xf32>
    %cst_82 = arith.constant 1.280000e+02 : f32
    %204 = vector.broadcast %cst_82 : f32 to vector<64x1xf32>
    %205 = arith.divf %203, %204 : vector<64x1xf32>
    %cst_83 = arith.constant 9.99999974E-6 : f32
    %206 = vector.broadcast %cst_83 : f32 to vector<64x1xf32>
    %207 = arith.addf %205, %206 : vector<64x1xf32>
    %208 = math.rsqrt %207 : vector<64x1xf32>
    %209 = vector.broadcast %208 : vector<64x1xf32> to vector<64x128xf32>
    %210 = arith.mulf %200, %209 : vector<64x128xf32>
    %211 = vector.broadcast %193 : vector<1x128xf32> to vector<64x128xf32>
    %212 = arith.mulf %210, %211 : vector<64x128xf32>
    %213 = vector.broadcast %194 : vector<1x128xf32> to vector<64x128xf32>
    %214 = arith.addf %212, %213 : vector<64x128xf32>
    %c0_84 = arith.constant 0 : index
    %c0_85 = arith.constant 0 : index
    %215 = vector.load %arg10[%c0_84, %c0_85] : memref<128x512xf32, #tpu.memory_space<vmem>>, vector<128x512xf32>
    %cst_86 = arith.constant dense<0.000000e+00> : vector<64x512xf32>
    %216 = tpu.matmul %214, %215, %cst_86 {dimension_numbers = #tpu.dot_dimension_numbers<[1], [0], [0], [1], [0, 0, 1, 1], [], []>} : vector<64x128xf32>, vector<128x512xf32>, vector<64x512xf32> -> vector<64x512xf32>
    %c0_87 = arith.constant 0 : index
    %c0_88 = arith.constant 0 : index
    %217 = vector.load %arg11[%c0_87, %c0_88] : memref<1x512xf32, #tpu.memory_space<vmem>>, vector<1x512xf32>
    %218 = vector.broadcast %217 : vector<1x512xf32> to vector<64x512xf32>
    %219 = arith.addf %216, %218 : vector<64x512xf32>
    %cst_89 = arith.constant 5.000000e-01 : f32
    %220 = vector.broadcast %cst_89 : f32 to vector<64x512xf32>
    %221 = arith.mulf %220, %219 : vector<64x512xf32>
    %cst_90 = arith.constant 4.471500e-02 : f32
    %222 = vector.broadcast %cst_90 : f32 to vector<64x512xf32>
    %223 = arith.mulf %222, %219 : vector<64x512xf32>
    %224 = arith.mulf %223, %219 : vector<64x512xf32>
    %225 = arith.mulf %224, %219 : vector<64x512xf32>
    %226 = arith.addf %219, %225 : vector<64x512xf32>
    %cst_91 = arith.constant 0.797884583 : f32
    %227 = vector.broadcast %cst_91 : f32 to vector<64x512xf32>
    %228 = arith.mulf %227, %226 : vector<64x512xf32>
    %229 = math.tanh %228 : vector<64x512xf32>
    %cst_92 = arith.constant 1.000000e+00 : f32
    %230 = vector.broadcast %cst_92 : f32 to vector<64x512xf32>
    %231 = arith.addf %230, %229 : vector<64x512xf32>
    %232 = arith.mulf %221, %231 : vector<64x512xf32>
    %c0_93 = arith.constant 0 : index
    %c0_94 = arith.constant 0 : index
    %233 = vector.load %arg12[%c0_93, %c0_94] : memref<512x128xf32, #tpu.memory_space<vmem>>, vector<512x128xf32>
    %cst_95 = arith.constant dense<0.000000e+00> : vector<64x128xf32>
    %234 = tpu.matmul %232, %233, %cst_95 {dimension_numbers = #tpu.dot_dimension_numbers<[1], [0], [0], [1], [0, 0, 1, 1], [], []>} : vector<64x512xf32>, vector<512x128xf32>, vector<64x128xf32> -> vector<64x128xf32>
    %c0_96 = arith.constant 0 : index
    %c0_97 = arith.constant 0 : index
    %235 = vector.load %arg13[%c0_96, %c0_97] : memref<1x128xf32, #tpu.memory_space<vmem>>, vector<1x128xf32>
    %236 = vector.broadcast %235 : vector<1x128xf32> to vector<64x128xf32>
    %237 = arith.addf %234, %236 : vector<64x128xf32>
    %238 = arith.addf %192, %237 : vector<64x128xf32>
    %c0_98 = arith.constant 0 : index
    %c0_99 = arith.constant 0 : index
    %c0_100 = arith.constant 0 : index
    %239 = vector.load %arg14[%c0_98, %c0_99, %c0_100] : memref<1x64x128xf32, #tpu.memory_space<vmem>>, vector<1x64x128xf32>
    %240 = vector.shape_cast %239 : vector<1x64x128xf32> to vector<64x128xf32>
    %241 = vector.shape_cast %238 : vector<64x128xf32> to vector<1x64x128xf32>
    tpu.vector_store %arg14[%c0_98, %c0_99, %c0_100], %241 {strides = array<i32>} : memref<1x64x128xf32, #tpu.memory_space<vmem>>, vector<1x64x128xf32>,
    return
  }
  func.func @transform_0(%arg0: i32) -> (i32, i32, i32) {
    %c0_i32 = arith.constant 0 : i32
    %c0_i32_0 = arith.constant 0 : i32
    %c0_i32_1 = arith.constant 0 : i32
    return %arg0, %c0_i32, %c0_i32_0 : i32, i32, i32
  }
  func.func @transform_1(%arg0: i32) -> (i32, i32) {
    %c0_i32 = arith.constant 0 : i32
    %c0_i32_0 = arith.constant 0 : i32
    %c0_i32_1 = arith.constant 0 : i32
    return %c0_i32, %c0_i32_0 : i32, i32
  }
  func.func @transform_2(%arg0: i32) -> (i32, i32) {
    %c0_i32 = arith.constant 0 : i32
    %c0_i32_0 = arith.constant 0 : i32
    %c0_i32_1 = arith.constant 0 : i32
    return %c0_i32, %c0_i32_0 : i32, i32
  }
  func.func @transform_3(%arg0: i32) -> (i32, i32) {
    %c0_i32 = arith.constant 0 : i32
    %c0_i32_0 = arith.constant 0 : i32
    %c0_i32_1 = arith.constant 0 : i32
    return %c0_i32, %c0_i32_0 : i32, i32
  }
  func.func @transform_4(%arg0: i32) -> (i32, i32, i32) {
    %c0_i32 = arith.constant 0 : i32
    %c0_i32_0 = arith.constant 0 : i32
    %c0_i32_1 = arith.constant 0 : i32
    %c0_i32_2 = arith.constant 0 : i32
    return %c0_i32, %c0_i32_0, %c0_i32_1 : i32, i32, i32
  }
  func.func @transform_5(%arg0: i32) -> (i32, i32) {
    %c0_i32 = arith.constant 0 : i32
    %c0_i32_0 = arith.constant 0 : i32
    %c0_i32_1 = arith.constant 0 : i32
    return %c0_i32, %c0_i32_0 : i32, i32
  }
  func.func @transform_6(%arg0: i32) -> (i32, i32) {
    %c0_i32 = arith.constant 0 : i32
    %c0_i32_0 = arith.constant 0 : i32
    %c0_i32_1 = arith.constant 0 : i32
    return %c0_i32, %c0_i32_0 : i32, i32
  }
  func.func @transform_7(%arg0: i32) -> (i32, i32) {
    %c0_i32 = arith.constant 0 : i32
    %c0_i32_0 = arith.constant 0 : i32
    %c0_i32_1 = arith.constant 0 : i32
    return %c0_i32, %c0_i32_0 : i32, i32
  }
  func.func @transform_8(%arg0: i32) -> (i32, i32) {
    %c0_i32 = arith.constant 0 : i32
    %c0_i32_0 = arith.constant 0 : i32
    %c0_i32_1 = arith.constant 0 : i32
    return %c0_i32, %c0_i32_0 : i32, i32
  }
  func.func @transform_9(%arg0: i32) -> (i32, i32) {
    %c0_i32 = arith.constant 0 : i32
    %c0_i32_0 = arith.constant 0 : i32
    %c0_i32_1 = arith.constant 0 : i32
    return %c0_i32, %c0_i32_0 : i32, i32
  }
  func.func @transform_10(%arg0: i32) -> (i32, i32) {
    %c0_i32 = arith.constant 0 : i32
    %c0_i32_0 = arith.constant 0 : i32
    %c0_i32_1 = arith.constant 0 : i32
    return %c0_i32, %c0_i32_0 : i32, i32
  }
  func.func @transform_11(%arg0: i32) -> (i32, i32) {
    %c0_i32 = arith.constant 0 : i32
    %c0_i32_0 = arith.constant 0 : i32
    %c0_i32_1 = arith.constant 0 : i32
    return %c0_i32, %c0_i32_0 : i32, i32
  }
  func.func @transform_12(%arg0: i32) -> (i32, i32) {
    %c0_i32 = arith.constant 0 : i32
    %c0_i32_0 = arith.constant 0 : i32
    %c0_i32_1 = arith.constant 0 : i32
    return %c0_i32, %c0_i32_0 : i32, i32
  }
  func.func @transform_13(%arg0: i32) -> (i32, i32, i32) {
    %c0_i32 = arith.constant 0 : i32
    %c0_i32_0 = arith.constant 0 : i32
    %c0_i32_1 = arith.constant 0 : i32
    return %arg0, %c0_i32, %c0_i32_0 : i32, i32, i32
  }
}

</mosaic_0001>

<llo_original>
// kernel: transformer_forward.1
$region0: #{transformer_forward.1}
  #allocation0 [shape = 'u32[]', space=smem, size = 0x4, offset = 0x4, fixed_abs, tag = 'smem constant byte address 0x4 - core index']
  #allocation1 [shape = 'u32[144,128]{1,0:T(1,128)}', space=vmem, size = 0x12000, scoped, tag = 'internal scratch']
  %s0 = inlined_call_operand.vmem [shape: f32[2,64,128], index: 0, kind: input, shape index: {}]
  %s1 = inlined_call_operand.vmem [shape: f32[1,128], index: 1, kind: input, shape index: {}]
  %s2 = inlined_call_operand.vmem [shape: f32[1,128], index: 2, kind: input, shape index: {}]
  %s3 = inlined_call_operand.vmem [shape: f32[128,768], index: 3, kind: input, shape index: {}]
  %s4 = inlined_call_operand.vmem [shape: f32[8,64,64], index: 4, kind: input, shape index: {}]
  %s5 = inlined_call_operand.vmem [shape: f32[256,128], index: 5, kind: input, shape index: {}]
  %s6 = inlined_call_operand.vmem [shape: f32[1,128], index: 6, kind: input, shape index: {}]
  %s7 = inlined_call_operand.vmem [shape: f32[1,128], index: 7, kind: input, shape index: {}]
  %s8 = inlined_call_operand.vmem [shape: f32[1,128], index: 8, kind: input, shape index: {}]
  %s9 = inlined_call_operand.vmem [shape: f32[128,512], index: 9, kind: input, shape index: {}]
  %s10 = inlined_call_operand.vmem [shape: f32[1,512], index: 10, kind: input, shape index: {}]
  %s11 = inlined_call_operand.vmem [shape: f32[512,128], index: 11, kind: input, shape index: {}]
  %s12 = inlined_call_operand.vmem [shape: f32[1,128], index: 12, kind: input, shape index: {}]
  %s13 = inlined_call_operand.hbm [shape: f32[2,64,128], index: 13, kind: output, shape index: {}]
  %s14 = sld [smem:[#allocation0]]
  $region85: #{transformer_forward.1} parent=0
    _
  %s16 = ssub.s32 1, %s14
  %s17 = scalar_select 0, %s16, %s14
  $region1: #{transformer_forward.1} parent=0
    #allocation2 [shape = 'u8[65536]{0}', space=vmem, size = 0x10000, scoped, tag = 'output window, operand 0']
    #allocation3 [shape = 's32[2]{0}', space=sflag, size = 0x8, scoped, tag = 'scoped memory for transformer_forward.1']
    %18 = vsyncpa [#allocation3], 0
    %s19 = scalar_lea.sflag [#allocation3], 1
    %20 = vsyncpa %s19, 0
    loop: start=0, step=1, limit=4
    $region2: #{transformer_forward.1} parent=1 // loop_pre_header
      _
    $region3: #{transformer_forward.1} parent=1 // loop_header
      %s22 = sphi 0, %s26
      %p23 = scmp.ge.s32.totalorder %s22, 4
      %s32 = sphi 0, %s34
      %s35 = sphi 0, %s32
      %s36 = sphi 0, %s35
      %s52 = sphi 0, %s36
      %s56 = sphi 0, %s56
      %s58 = sphi 0, %s56
      %s59 = sphi 0, %s58
      %s73 = sphi 0, %s59
      %s77 = sphi 0, %s77
      %s79 = sphi 0, %s77
      %s80 = sphi 0, %s79
      %s94 = sphi 0, %s80
      %s98 = sphi 0, %s98
      %s100 = sphi 0, %s98
      %s101 = sphi 0, %s100
      %s115 = sphi 0, %s101
      %s119 = sphi 0, %s119
      %s121 = sphi 0, %s119
      %s122 = sphi 0, %s121
      %s136 = sphi 0, %s122
      %s140 = sphi 0, %s140
      %s142 = sphi 0, %s140
      %s143 = sphi 0, %s142
      %s157 = sphi 0, %s143
      %s161 = sphi 0, %s161
      %s163 = sphi 0, %s161
      %s164 = sphi 0, %s163
      %s178 = sphi 0, %s164
      %s182 = sphi 0, %s182
      %s184 = sphi 0, %s182
      %s185 = sphi 0, %s184
      %s199 = sphi 0, %s185
      %s203 = sphi 0, %s203
      %s205 = sphi 0, %s203
      %s206 = sphi 0, %s205
      %s220 = sphi 0, %s206
      %s224 = sphi 0, %s224
      %s226 = sphi 0, %s224
      %s227 = sphi 0, %s226
      %s241 = sphi 0, %s227
      %s245 = sphi 0, %s245
      %s247 = sphi 0, %s245
      %s248 = sphi 0, %s247
      %s262 = sphi 0, %s248
      %s266 = sphi 0, %s266
      %s268 = sphi 0, %s266
      %s269 = sphi 0, %s268
      %s283 = sphi 0, %s269
      %s287 = sphi 0, %s287
      %s289 = sphi 0, %s287
      %s290 = sphi 0, %s289
      %s304 = sphi 0, %s290
      %s310 = sphi 0, %s312
      %s313 = sphi 0, %s310
      %s314 = sphi 0, %s313
      %s330 = sphi 0, %s314
    $region4: #{transformer_forward.1} parent=1 // loop_header_branch
      %25 = sbr.rel (%p23) target = $region8
    $region5: #{transformer_forward.1} parent=1 // loop_body
      %s27 = ssub.s32 %s22, 1
      %s28 = ssub.s32 %s22, 2
      %s29 = sadd.s32 %s22, 1
      %s30 = ssub.s32 %s22, %s29
      %p31 = scmp.eq.s32.totalorder %s30, 0
      %s33 = sadd.s32 %s32, 1
      %s34 = scalar_select %p31, %s32, %s33
      %p37 = pneg %p31
      %p38 = scmp.eq.s32.totalorder %s22, 1
      %p39 = por %p37, %p38
      %p40 = scmp.ne.s32.totalorder %s32, %s35
      %p41 = scmp.eq.s32.totalorder %s22, 0
      %p42 = por %p40, %p41
      %p43 = scmp.ne.s32.totalorder %s32, %s35
      %p44 = scmp.eq.s32.totalorder %s27, 1
      %p45 = por %p43, %p44
      %p46 = scmp.ne.s32.totalorder %s35, %s36
      %p47 = scmp.eq.s32.totalorder %s27, 0
      %p48 = por %p46, %p47
      %p49 = scmp.ne.s32.totalorder %s35, %s36
      %p50 = scmp.eq.s32.totalorder %s28, 1
      %p51 = por %p49, %p50
      %p53 = scmp.ne.s32.totalorder %s36, %s52
      %p54 = scmp.eq.s32.totalorder %s28, 0
      %p55 = por %p53, %p54
      %s57 = sadd.s32 %s56, 1
      %p60 = scmp.eq.s32.totalorder %s22, 1
      %p61 = scmp.ne.s32.totalorder %s56, %s58
      %p62 = scmp.eq.s32.totalorder %s22, 0
      %p63 = por %p61, %p62
      %p64 = scmp.ne.s32.totalorder %s56, %s58
      %p65 = scmp.eq.s32.totalorder %s27, 1
      %p66 = por %p64, %p65
      %p67 = scmp.ne.s32.totalorder %s58, %s59
      %p68 = scmp.eq.s32.totalorder %s27, 0
      %p69 = por %p67, %p68
      %p70 = scmp.ne.s32.totalorder %s58, %s59
      %p71 = scmp.eq.s32.totalorder %s28, 1
      %p72 = por %p70, %p71
      %p74 = scmp.ne.s32.totalorder %s59, %s73
      %p75 = scmp.eq.s32.totalorder %s28, 0
      %p76 = por %p74, %p75
      %s78 = sadd.s32 %s77, 1
      %p81 = scmp.eq.s32.totalorder %s22, 1
      %p82 = scmp.ne.s32.totalorder %s77, %s79
      %p83 = scmp.eq.s32.totalorder %s22, 0
      %p84 = por %p82, %p83
      %p85 = scmp.ne.s32.totalorder %s77, %s79
      %p86 = scmp.eq.s32.totalorder %s27, 1
      %p87 = por %p85, %p86
      %p88 = scmp.ne.s32.totalorder %s79, %s80
      %p89 = scmp.eq.s32.totalorder %s27, 0
      %p90 = por %p88, %p89
      %p91 = scmp.ne.s32.totalorder %s79, %s80
      %p92 = scmp.eq.s32.totalorder %s28, 1
      %p93 = por %p91, %p92
      %p95 = scmp.ne.s32.totalorder %s80, %s94
      %p96 = scmp.eq.s32.totalorder %s28, 0
      %p97 = por %p95, %p96
      %s99 = sadd.s32 %s98, 1
      %p102 = scmp.eq.s32.totalorder %s22, 1
      %p103 = scmp.ne.s32.totalorder %s98, %s100
      %p104 = scmp.eq.s32.totalorder %s22, 0
      %p105 = por %p103, %p104
      %p106 = scmp.ne.s32.totalorder %s98, %s100
      %p107 = scmp.eq.s32.totalorder %s27, 1
      %p108 = por %p106, %p107
      %p109 = scmp.ne.s32.totalorder %s100, %s101
      %p110 = scmp.eq.s32.totalorder %s27, 0
      %p111 = por %p109, %p110
      %p112 = scmp.ne.s32.totalorder %s100, %s101
      %p113 = scmp.eq.s32.totalorder %s28, 1
      %p114 = por %p112, %p113
      %p116 = scmp.ne.s32.totalorder %s101, %s115
      %p117 = scmp.eq.s32.totalorder %s28, 0
      %p118 = por %p116, %p117
      %s120 = sadd.s32 %s119, 1
      %p123 = scmp.eq.s32.totalorder %s22, 1
      %p124 = scmp.ne.s32.totalorder %s119, %s121
      %p125 = scmp.eq.s32.totalorder %s22, 0
      %p126 = por %p124, %p125
      %p127 = scmp.ne.s32.totalorder %s119, %s121
      %p128 = scmp.eq.s32.totalorder %s27, 1
      %p129 = por %p127, %p128
      %p130 = scmp.ne.s32.totalorder %s121, %s122
      %p131 = scmp.eq.s32.totalorder %s27, 0
      %p132 = por %p130, %p131
      %p133 = scmp.ne.s32.totalorder %s121, %s122
      %p134 = scmp.eq.s32.totalorder %s28, 1
      %p135 = por %p133, %p134
      %p137 = scmp.ne.s32.totalorder %s122, %s136
      %p138 = scmp.eq.s32.totalorder %s28, 0
      %p139 = por %p137, %p138
      %s141 = sadd.s32 %s140, 1
      %p144 = scmp.eq.s32.totalorder %s22, 1
      %p145 = scmp.ne.s32.totalorder %s140, %s142
      %p146 = scmp.eq.s32.totalorder %s22, 0
      %p147 = por %p145, %p146
      %p148 = scmp.ne.s32.totalorder %s140, %s142
      %p149 = scmp.eq.s32.totalorder %s27, 1
      %p150 = por %p148, %p149
      %p151 = scmp.ne.s32.totalorder %s142, %s143
      %p152 = scmp.eq.s32.totalorder %s27, 0
      %p153 = por %p151, %p152
      %p154 = scmp.ne.s32.totalorder %s142, %s143
      %p155 = scmp.eq.s32.totalorder %s28, 1
      %p156 = por %p154, %p155
      %p158 = scmp.ne.s32.totalorder %s143, %s157
      %p159 = scmp.eq.s32.totalorder %s28, 0
      %p160 = por %p158, %p159
      %s162 = sadd.s32 %s161, 1
      %p165 = scmp.eq.s32.totalorder %s22, 1
      %p166 = scmp.ne.s32.totalorder %s161, %s163
      %p167 = scmp.eq.s32.totalorder %s22, 0
      %p168 = por %p166, %p167
      %p169 = scmp.ne.s32.totalorder %s161, %s163
      %p170 = scmp.eq.s32.totalorder %s27, 1
      %p171 = por %p169, %p170
      %p172 = scmp.ne.s32.totalorder %s163, %s164
      %p173 = scmp.eq.s32.totalorder %s27, 0
      %p174 = por %p172, %p173
      %p175 = scmp.ne.s32.totalorder %s163, %s164
      %p176 = scmp.eq.s32.totalorder %s28, 1
      %p177 = por %p175, %p176
      %p179 = scmp.ne.s32.totalorder %s164, %s178
      %p180 = scmp.eq.s32.totalorder %s28, 0
      %p181 = por %p179, %p180
      %s183 = sadd.s32 %s182, 1
      %p186 = scmp.eq.s32.totalorder %s22, 1
      %p187 = scmp.ne.s32.totalorder %s182, %s184
      %p188 = scmp.eq.s32.totalorder %s22, 0
      %p189 = por %p187, %p188
      %p190 = scmp.ne.s32.totalorder %s182, %s184
      %p191 = scmp.eq.s32.totalorder %s27, 1
      %p192 = por %p190, %p191
      %p193 = scmp.ne.s32.totalorder %s184, %s185
      %p194 = scmp.eq.s32.totalorder %s27, 0
      %p195 = por %p193, %p194
      %p196 = scmp.ne.s32.totalorder %s184, %s185
      %p197 = scmp.eq.s32.totalorder %s28, 1
      %p198 = por %p196, %p197
      %p200 = scmp.ne.s32.totalorder %s185, %s199
      %p201 = scmp.eq.s32.totalorder %s28, 0
      %p202 = por %p200, %p201
      %s204 = sadd.s32 %s203, 1
      %p207 = scmp.eq.s32.totalorder %s22, 1
      %p208 = scmp.ne.s32.totalorder %s203, %s205
      %p209 = scmp.eq.s32.totalorder %s22, 0
      %p210 = por %p208, %p209
      %p211 = scmp.ne.s32.totalorder %s203, %s205
      %p212 = scmp.eq.s32.totalorder %s27, 1
      %p213 = por %p211, %p212
      %p214 = scmp.ne.s32.totalorder %s205, %s206
      %p215 = scmp.eq.s32.totalorder %s27, 0
      %p216 = por %p214, %p215
      %p217 = scmp.ne.s32.totalorder %s205, %s206
      %p218 = scmp.eq.s32.totalorder %s28, 1
      %p219 = por %p217, %p218
      %p221 = scmp.ne.s32.totalorder %s206, %s220
      %p222 = scmp.eq.s32.totalorder %s28, 0
      %p223 = por %p221, %p222
      %s225 = sadd.s32 %s224, 1
      %p228 = scmp.eq.s32.totalorder %s22, 1
      %p229 = scmp.ne.s32.totalorder %s224, %s226
      %p230 = scmp.eq.s32.totalorder %s22, 0
      %p231 = por %p229, %p230
      %p232 = scmp.ne.s32.totalorder %s224, %s226
      %p233 = scmp.eq.s32.totalorder %s27, 1
      %p234 = por %p232, %p233
      %p235 = scmp.ne.s32.totalorder %s226, %s227
      %p236 = scmp.eq.s32.totalorder %s27, 0
      %p237 = por %p235, %p236
      %p238 = scmp.ne.s32.totalorder %s226, %s227
      %p239 = scmp.eq.s32.totalorder %s28, 1
      %p240 = por %p238, %p239
      %p242 = scmp.ne.s32.totalorder %s227, %s241
      %p243 = scmp.eq.s32.totalorder %s28, 0
      %p244 = por %p242, %p243
      %s246 = sadd.s32 %s245, 1
      %p249 = scmp.eq.s32.totalorder %s22, 1
      %p250 = scmp.ne.s32.totalorder %s245, %s247
      %p251 = scmp.eq.s32.totalorder %s22, 0
      %p252 = por %p250, %p251
      %p253 = scmp.ne.s32.totalorder %s245, %s247
      %p254 = scmp.eq.s32.totalorder %s27, 1
      %p255 = por %p253, %p254
      %p256 = scmp.ne.s32.totalorder %s247, %s248
      %p257 = scmp.eq.s32.totalorder %s27, 0
      %p258 = por %p256, %p257
      %p259 = scmp.ne.s32.totalorder %s247, %s248
      %p260 = scmp.eq.s32.totalorder %s28, 1
      %p261 = por %p259, %p260
      %p263 = scmp.ne.s32.totalorder %s248, %s262
      %p264 = scmp.eq.s32.totalorder %s28, 0
      %p265 = por %p263, %p264
      %s267 = sadd.s32 %s266, 1
      %p270 = scmp.eq.s32.totalorder %s22, 1
      %p271 = scmp.ne.s32.totalorder %s266, %s268
      %p272 = scmp.eq.s32.totalorder %s22, 0
      %p273 = por %p271, %p272
      %p274 = scmp.ne.s32.totalorder %s266, %s268
      %p275 = scmp.eq.s32.totalorder %s27, 1
      %p276 = por %p274, %p275
      %p277 = scmp.ne.s32.totalorder %s268, %s269
      %p278 = scmp.eq.s32.totalorder %s27, 0
      %p279 = por %p277, %p278
      %p280 = scmp.ne.s32.totalorder %s268, %s269
      %p281 = scmp.eq.s32.totalorder %s28, 1
      %p282 = por %p280, %p281
      %p284 = scmp.ne.s32.totalorder %s269, %s283
      %p285 = scmp.eq.s32.totalorder %s28, 0
      %p286 = por %p284, %p285
      %s288 = sadd.s32 %s287, 1
      %p291 = scmp.eq.s32.totalorder %s22, 1
      %p292 = scmp.ne.s32.totalorder %s287, %s289
      %p293 = scmp.eq.s32.totalorder %s22, 0
      %p294 = por %p292, %p293
      %p295 = scmp.ne.s32.totalorder %s287, %s289
      %p296 = scmp.eq.s32.totalorder %s27, 1
      %p297 = por %p295, %p296
      %p298 = scmp.ne.s32.totalorder %s289, %s290
      %p299 = scmp.eq.s32.totalorder %s27, 0
      %p300 = por %p298, %p299
      %p301 = scmp.ne.s32.totalorder %s289, %s290
      %p302 = scmp.eq.s32.totalorder %s28, 1
      %p303 = por %p301, %p302
      %p305 = scmp.ne.s32.totalorder %s290, %s304
      %p306 = scmp.eq.s32.totalorder %s28, 0
      %p307 = por %p305, %p306
      %s308 = ssub.s32 %s22, %s29
      %p309 = scmp.eq.s32.totalorder %s308, 0
      %s311 = sadd.s32 %s310, 1
      %s312 = scalar_select %p309, %s310, %s311
      %p315 = pneg %p309
      %p316 = scmp.eq.s32.totalorder %s22, 1
      %p317 = por %p315, %p316
      %p318 = scmp.ne.s32.totalorder %s310, %s313
      %p319 = scmp.eq.s32.totalorder %s22, 0
      %p320 = por %p318, %p319
      %p321 = scmp.ne.s32.totalorder %s310, %s313
      %p322 = scmp.eq.s32.totalorder %s27, 1
      %p323 = por %p321, %p322
      %p324 = scmp.ne.s32.totalorder %s313, %s314
      %p325 = scmp.eq.s32.totalorder %s27, 0
      %p326 = por %p324, %p325
      %p327 = scmp.ne.s32.totalorder %s313, %s314
      %p328 = scmp.eq.s32.totalorder %s28, 1
      %p329 = por %p327, %p328
      %p331 = scmp.ne.s32.totalorder %s314, %s330
      %p332 = scmp.eq.s32.totalorder %s28, 0
      %p333 = por %p331, %p332
      %p334 = scmp.le.s32.totalorder 1, %s22
      %p335 = scmp.lt.s32.totalorder %s22, 3
      %p336 = pnand %p334, %p335
      %p337 = pneg %p336
      // Predicated region
      $region9: #{transformer_forward.1} parent=5 // pred_check
        _
      $region10: #{transformer_forward.1} parent=5 // pred_check_branch
        %339 = sbr.rel (%p336) target = $region12
      $region11: #{transformer_forward.1} parent=5 // pred_region
        %s340 = ssub.s32 %s22, 1
        // Predicated region
        $region13: #{transformer_forward.1} parent=11 // pred_check
          %p341 = pneg %p69
        $region14: #{transformer_forward.1} parent=11 // pred_check_branch
          %343 = sbr.rel (%p341) target = $region16
        $region15: #{transformer_forward.1} parent=11 // pred_region
          _
        $region16: #{transformer_forward.1} parent=11 // pred_fallthru
          _
        // Predicated region
        $region17: #{transformer_forward.1} parent=11 // pred_check
          %p344 = pneg %p90
        $region18: #{transformer_forward.1} parent=11 // pred_check_branch
          %346 = sbr.rel (%p344) target = $region20
        $region19: #{transformer_forward.1} parent=11 // pred_region
          _
        $region20: #{transformer_forward.1} parent=11 // pred_fallthru
          _
        // Predicated region
        $region21: #{transformer_forward.1} parent=11 // pred_check
          %p347 = pneg %p111
        $region22: #{transformer_forward.1} parent=11 // pred_check_branch
          %349 = sbr.rel (%p347) target = $region24
        $region23: #{transformer_forward.1} parent=11 // pred_region
          _
        $region24: #{transformer_forward.1} parent=11 // pred_fallthru
          _
        // Predicated region
        $region25: #{transformer_forward.1} parent=11 // pred_check
          %p350 = pneg %p132
        $region26: #{transformer_forward.1} parent=11 // pred_check_branch
          %352 = sbr.rel (%p350) target = $region28
        $region27: #{transformer_forward.1} parent=11 // pred_region
          _
        $region28: #{transformer_forward.1} parent=11 // pred_fallthru
          _
        // Predicated region
        $region29: #{transformer_forward.1} parent=11 // pred_check
          %p353 = pneg %p153
        $region30: #{transformer_forward.1} parent=11 // pred_check_branch
          %355 = sbr.rel (%p353) target = $region32
        $region31: #{transformer_forward.1} parent=11 // pred_region
          _
        $region32: #{transformer_forward.1} parent=11 // pred_fallthru
          _
        // Predicated region
        $region33: #{transformer_forward.1} parent=11 // pred_check
          %p356 = pneg %p174
        $region34: #{transformer_forward.1} parent=11 // pred_check_branch
          %358 = sbr.rel (%p356) target = $region36
        $region35: #{transformer_forward.1} parent=11 // pred_region
          _
        $region36: #{transformer_forward.1} parent=11 // pred_fallthru
          _
        // Predicated region
        $region37: #{transformer_forward.1} parent=11 // pred_check
          %p359 = pneg %p195
        $region38: #{transformer_forward.1} parent=11 // pred_check_branch
          %361 = sbr.rel (%p359) target = $region40
        $region39: #{transformer_forward.1} parent=11 // pred_region
          _
        $region40: #{transformer_forward.1} parent=11 // pred_fallthru
          _
        // Predicated region
        $region41: #{transformer_forward.1} parent=11 // pred_check
          %p362 = pneg %p216
        $region42: #{transformer_forward.1} parent=11 // pred_check_branch
          %364 = sbr.rel (%p362) target = $region44
        $region43: #{transformer_forward.1} parent=11 // pred_region
          _
        $region44: #{transformer_forward.1} parent=11 // pred_fallthru
          _
        // Predicated region
        $region45: #{transformer_forward.1} parent=11 // pred_check
          %p365 = pneg %p237
        $region46: #{transformer_forward.1} parent=11 // pred_check_branch
          %367 = sbr.rel (%p365) target = $region48
        $region47: #{transformer_forward.1} parent=11 // pred_region
          _
        $region48: #{transformer_forward.1} parent=11 // pred_fallthru
          _
        // Predicated region
        $region49: #{transformer_forward.1} parent=11 // pred_check
          %p368 = pneg %p258
        $region50: #{transformer_forward.1} parent=11 // pred_check_branch
          %370 = sbr.rel (%p368) target = $region52
        $region51: #{transformer_forward.1} parent=11 // pred_region
          _
        $region52: #{transformer_forward.1} parent=11 // pred_fallthru
          _
        // Predicated region
        $region53: #{transformer_forward.1} parent=11 // pred_check
          %p371 = pneg %p279
        $region54: #{transformer_forward.1} parent=11 // pred_check_branch
          %373 = sbr.rel (%p371) target = $region56
        $region55: #{transformer_forward.1} parent=11 // pred_region
          _
        $region56: #{transformer_forward.1} parent=11 // pred_fallthru
          _
        // Predicated region
        $region57: #{transformer_forward.1} parent=11 // pred_check
          %p374 = pneg %p300
        $region58: #{transformer_forward.1} parent=11 // pred_check_branch
          %376 = sbr.rel (%p374) target = $region60
        $region59: #{transformer_forward.1} parent=11 // pred_region
          _
        $region60: #{transformer_forward.1} parent=11 // pred_fallthru
          _
      $region12: #{transformer_forward.1} parent=5 // pred_fallthru
        _
      %p377 = scmp.lt.s32.totalorder %s22, 2
      // Predicated region
      $region61: #{transformer_forward.1} parent=5 // pred_check
        %p378 = pneg %p377
      $region62: #{transformer_forward.1} parent=5 // pred_check_branch
        %380 = sbr.rel (%p378) target = $region64
      $region63: #{transformer_forward.1} parent=5 // pred_region
        // Predicated region
        $region65: #{transformer_forward.1} parent=63 // pred_check
          %p381 = pneg %p42
        $region66: #{transformer_forward.1} parent=63 // pred_check_branch
          %383 = sbr.rel (%p381) target = $region68
        $region67: #{transformer_forward.1} parent=63 // pred_region
          %p384 = scmp.lt.s32.totalorder %s22, 1
          %s385 = scalar_select %p384, %s22, 1
          %s386 = smul.addr %s385, 8
          %s387 = smul.addr %s386, 8
          %s388 = scalar_lea.vmem %s0, %s387
        $region68: #{transformer_forward.1} parent=63 // pred_fallthru
          _
      $region64: #{transformer_forward.1} parent=5 // pred_fallthru
        _
      %p389 = scmp.le.s32.totalorder 1, %s22
      %p390 = scmp.lt.s32.totalorder %s22, 3
      %p391 = pnand %p389, %p390
      %p392 = pneg %p391
      // Predicated region
      $region69: #{transformer_forward.1} parent=5 // pred_check
        _
      $region70: #{transformer_forward.1} parent=5 // pred_check_branch
        %394 = sbr.rel (%p391) target = $region72
      $region71: #{transformer_forward.1} parent=5 // pred_region
        %s395 = ssub.s32 %s22, 1
        %p396 = scmp.lt.s32.totalorder %s27, 1
        %s397 = scalar_select %p396, %s27, 1
        %s398 = smul.addr %s397, 8
        %s399 = smul.addr %s398, 8
        %s400 = scalar_lea.vmem %s0, %s399
        %p401 = pneg %p48
        %p402 = pneg %p45
        %p403 = pneg %p69
        %p404 = pneg %p66
        %p405 = pneg %p90
        %p406 = pneg %p87
        %p407 = pneg %p111
        %p408 = pneg %p108
        %p409 = pneg %p132
        %p410 = pneg %p129
        %p411 = pneg %p153
        %p412 = pneg %p150
        %p413 = pneg %p174
        %p414 = pneg %p171
        %p415 = pneg %p195
        %p416 = pneg %p192
        %p417 = pneg %p216
        %p418 = pneg %p213
        %p419 = pneg %p237
        %p420 = pneg %p234
        %p421 = pneg %p258
        %p422 = pneg %p255
        %p423 = pneg %p279
        %p424 = pneg %p276
        %p425 = pneg %p300
        %p426 = pneg %p297
        %p427 = pneg %p326
        %p428 = pneg %p323
        %s429 = sand.u32 %s313, 1
        %s430 = scalar_lea.sflag [#allocation3], %s429
        %s431 = sand.u32 %s313, 1
        %s432 = smul.addr %s431, 64
        %s433 = scalar_lea.vmem [#allocation2], %s432
        %p434 = scmp.lt.s32.totalorder %s27, 1
        %s435 = scalar_select %p434, %s27, 1
        %s436 = smul.addr %s435, 8
        %s437 = smul.addr %s436, 8
        %s438 = scalar_lea.vmem %s0, %s437
        %v439 = vld [vmem:[%s438] sm:$0xff]
        %v440 = vld [vmem:[%s438 + $0x8] sm:$0xff]
        %v441 = vld [vmem:[%s438 + $0x10] sm:$0xff]
        %v442 = vld [vmem:[%s438 + $0x18] sm:$0xff]
        %v443 = vld [vmem:[%s438 + $0x20] sm:$0xff]
        %v444 = vld [vmem:[%s438 + $0x28] sm:$0xff]
        %v445 = vld [vmem:[%s438 + $0x30] sm:$0xff]
        %v446 = vld [vmem:[%s438 + $0x38] sm:$0xff]
        %v447 = vld [vmem:[%s1] sm:$0x1]
        %v448 = vld [vmem:[%s2] sm:$0x1]
        %449 = vadd.xlane.f32.xlu0 %v439
        %v450 = vpop.xlane.xlu0 %449
        %451 = vadd.xlane.f32.xlu0 %v440
        %v452 = vpop.xlane.xlu0 %451
        %453 = vadd.xlane.f32.xlu0 %v441
        %v454 = vpop.xlane.xlu0 %453
        %455 = vadd.xlane.f32.xlu0 %v442
        %v456 = vpop.xlane.xlu0 %455
        %457 = vadd.xlane.f32.xlu0 %v443
        %v458 = vpop.xlane.xlu0 %457
        %459 = vadd.xlane.f32.xlu0 %v444
        %v460 = vpop.xlane.xlu0 %459
        %461 = vadd.xlane.f32.xlu0 %v445
        %v462 = vpop.xlane.xlu0 %461
        %463 = vadd.xlane.f32.xlu0 %v446
        %v464 = vpop.xlane.xlu0 %463
        %v465 = vrcp.pop 128.0
        %v466 = vmul.f32 %v450, %v465
        %v467 = vmul.f32 %v452, %v465
        %v468 = vmul.f32 %v454, %v465
        %v469 = vmul.f32 %v456, %v465
        %v470 = vmul.f32 %v458, %v465
        %v471 = vmul.f32 %v460, %v465
        %v472 = vmul.f32 %v462, %v465
        %v473 = vmul.f32 %v464, %v465
        %v474 = vsub.f32 %v439, %v466
        %v475 = vsub.f32 %v440, %v467
        %v476 = vsub.f32 %v441, %v468
        %v477 = vsub.f32 %v442, %v469
        %v478 = vsub.f32 %v443, %v470
        %v479 = vsub.f32 %v444, %v471
        %v480 = vsub.f32 %v445, %v472
        %v481 = vsub.f32 %v446, %v473
        %v482 = vmul.f32 %v474, %v474
        %v483 = vmul.f32 %v475, %v475
        %v484 = vmul.f32 %v476, %v476
        %v485 = vmul.f32 %v477, %v477
        %v486 = vmul.f32 %v478, %v478
        %v487 = vmul.f32 %v479, %v479
        %v488 = vmul.f32 %v480, %v480
        %v489 = vmul.f32 %v481, %v481
        %490 = vadd.xlane.f32.xlu0 %v482
        %v491 = vpop.xlane.xlu0 %490
        %492 = vadd.xlane.f32.xlu0 %v483
        %v493 = vpop.xlane.xlu0 %492
        %494 = vadd.xlane.f32.xlu0 %v484
        %v495 = vpop.xlane.xlu0 %494
        %496 = vadd.xlane.f32.xlu0 %v485
        %v497 = vpop.xlane.xlu0 %496
        %498 = vadd.xlane.f32.xlu0 %v486
        %v499 = vpop.xlane.xlu0 %498
        %500 = vadd.xlane.f32.xlu0 %v487
        %v501 = vpop.xlane.xlu0 %500
        %502 = vadd.xlane.f32.xlu0 %v488
        %v503 = vpop.xlane.xlu0 %502
        %504 = vadd.xlane.f32.xlu0 %v489
        %v505 = vpop.xlane.xlu0 %504
        %v506 = vmul.f32 %v491, %v465
        %v507 = vmul.f32 %v493, %v465
        %v508 = vmul.f32 %v495, %v465
        %v509 = vmul.f32 %v497, %v465
        %v510 = vmul.f32 %v499, %v465
        %v511 = vmul.f32 %v501, %v465
        %v512 = vmul.f32 %v503, %v465
        %v513 = vmul.f32 %v505, %v465
        %v514 = vadd.f32 %v506, 1e-05
        %v515 = vadd.f32 %v507, 1e-05
        %v516 = vadd.f32 %v508, 1e-05
        %v517 = vadd.f32 %v509, 1e-05
        %v518 = vadd.f32 %v510, 1e-05
        %v519 = vadd.f32 %v511, 1e-05
        %v520 = vadd.f32 %v512, 1e-05
        %v521 = vadd.f32 %v513, 1e-05
        %v522 = vrsqrt.pop %v514
        %v523 = vrsqrt.pop %v515
        %v524 = vrsqrt.pop %v516
        %v525 = vrsqrt.pop %v517
        %v526 = vrsqrt.pop %v518
        %v527 = vrsqrt.pop %v519
        %v528 = vrsqrt.pop %v520
        %v529 = vrsqrt.pop %v521
        %v530 = vmul.f32 %v474, %v522
        %v531 = vmul.f32 %v475, %v523
        %v532 = vmul.f32 %v476, %v524
        %v533 = vmul.f32 %v477, %v525
        %v534 = vmul.f32 %v478, %v526
        %v535 = vmul.f32 %v479, %v527
        %v536 = vmul.f32 %v480, %v528
        %v537 = vmul.f32 %v481, %v529
        %v539 = vlaneseq
        %v540 = vshrl.u32 %v539, 7
        %v541 = vsub.s32 0, %v540
        %v542 = vrot.slane %v447, %v541
        %v544 = vmul.f32 %v530, %v542
        %v545 = vmul.f32 %v531, %v542
        %v546 = vmul.f32 %v532, %v542
        %v547 = vmul.f32 %v533, %v542
        %v548 = vmul.f32 %v534, %v542
        %v549 = vmul.f32 %v535, %v542
        %v550 = vmul.f32 %v536, %v542
        %v551 = vmul.f32 %v537, %v542
        %v553 = vlaneseq
        %v554 = vshrl.u32 %v553, 7
        %v555 = vsub.s32 0, %v554
        %v556 = vrot.slane %v448, %v555
        %v558 = vadd.f32 %v544, %v556
        %v559 = vadd.f32 %v545, %v556
        %v560 = vadd.f32 %v546, %v556
        %v561 = vadd.f32 %v547, %v556
        %v562 = vadd.f32 %v548, %v556
        %v563 = vadd.f32 %v549, %v556
        %v564 = vadd.f32 %v550, %v556
        %v565 = vadd.f32 %v551, %v556
        %v566 = vld [vmem:[%s3] sm:$0xff]
        %v567 = vld [vmem:[%s3 + $0x8] sm:$0xff]
        %v568 = vld [vmem:[%s3 + $0x10] sm:$0xff]
        %v569 = vld [vmem:[%s3 + $0x18] sm:$0xff]
        %v570 = vld [vmem:[%s3 + $0x20] sm:$0xff]
        %v571 = vld [vmem:[%s3 + $0x28] sm:$0xff]
        %v572 = vld [vmem:[%s3 + $0x30] sm:$0xff]
        %v573 = vld [vmem:[%s3 + $0x38] sm:$0xff]
        %v574 = vld [vmem:[%s3 + $0x40] sm:$0xff]
        %v575 = vld [vmem:[%s3 + $0x48] sm:$0xff]
        %v576 = vld [vmem:[%s3 + $0x50] sm:$0xff]
        %v577 = vld [vmem:[%s3 + $0x58] sm:$0xff]
        %v578 = vld [vmem:[%s3 + $0x60] sm:$0xff]
        %v579 = vld [vmem:[%s3 + $0x68] sm:$0xff]
        %v580 = vld [vmem:[%s3 + $0x70] sm:$0xff]
        %v581 = vld [vmem:[%s3 + $0x78] sm:$0xff]
        %v582 = vld [vmem:[%s3 + $0x80] sm:$0xff]
        %v583 = vld [vmem:[%s3 + $0x88] sm:$0xff]
        %v584 = vld [vmem:[%s3 + $0x90] sm:$0xff]
        %v585 = vld [vmem:[%s3 + $0x98] sm:$0xff]
        %v586 = vld [vmem:[%s3 + $0xa0] sm:$0xff]
        %v587 = vld [vmem:[%s3 + $0xa8] sm:$0xff]
        %v588 = vld [vmem:[%s3 + $0xb0] sm:$0xff]
        %v589 = vld [vmem:[%s3 + $0xb8] sm:$0xff]
        %v590 = vld [vmem:[%s3 + $0xc0] sm:$0xff]
        %v591 = vld [vmem:[%s3 + $0xc8] sm:$0xff]
        %v592 = vld [vmem:[%s3 + $0xd0] sm:$0xff]
        %v593 = vld [vmem:[%s3 + $0xd8] sm:$0xff]
        %v594 = vld [vmem:[%s3 + $0xe0] sm:$0xff]
        %v595 = vld [vmem:[%s3 + $0xe8] sm:$0xff]
        %v596 = vld [vmem:[%s3 + $0xf0] sm:$0xff]
        %v597 = vld [vmem:[%s3 + $0xf8] sm:$0xff]
        %v598 = vld [vmem:[%s3 + $0x100] sm:$0xff]
        %v599 = vld [vmem:[%s3 + $0x108] sm:$0xff]
        %v600 = vld [vmem:[%s3 + $0x110] sm:$0xff]
        %v601 = vld [vmem:[%s3 + $0x118] sm:$0xff]
        %v602 = vld [vmem:[%s3 + $0x120] sm:$0xff]
        %v603 = vld [vmem:[%s3 + $0x128] sm:$0xff]
        %v604 = vld [vmem:[%s3 + $0x130] sm:$0xff]
        %v605 = vld [vmem:[%s3 + $0x138] sm:$0xff]
        %v606 = vld [vmem:[%s3 + $0x140] sm:$0xff]
        %v607 = vld [vmem:[%s3 + $0x148] sm:$0xff]
        %v608 = vld [vmem:[%s3 + $0x150] sm:$0xff]
        %v609 = vld [vmem:[%s3 + $0x158] sm:$0xff]
        %v610 = vld [vmem:[%s3 + $0x160] sm:$0xff]
        %v611 = vld [vmem:[%s3 + $0x168] sm:$0xff]
        %v612 = vld [vmem:[%s3 + $0x170] sm:$0xff]
        %v613 = vld [vmem:[%s3 + $0x178] sm:$0xff]
        %v614 = vld [vmem:[%s3 + $0x180] sm:$0xff]
        %v615 = vld [vmem:[%s3 + $0x188] sm:$0xff]
        %v616 = vld [vmem:[%s3 + $0x190] sm:$0xff]
        %v617 = vld [vmem:[%s3 + $0x198] sm:$0xff]
        %v618 = vld [vmem:[%s3 + $0x1a0] sm:$0xff]
        %v619 = vld [vmem:[%s3 + $0x1a8] sm:$0xff]
        %v620 = vld [vmem:[%s3 + $0x1b0] sm:$0xff]
        %v621 = vld [vmem:[%s3 + $0x1b8] sm:$0xff]
        %v622 = vld [vmem:[%s3 + $0x1c0] sm:$0xff]
        %v623 = vld [vmem:[%s3 + $0x1c8] sm:$0xff]
        %v624 = vld [vmem:[%s3 + $0x1d0] sm:$0xff]
        %v625 = vld [vmem:[%s3 + $0x1d8] sm:$0xff]
        %v626 = vld [vmem:[%s3 + $0x1e0] sm:$0xff]
        %v627 = vld [vmem:[%s3 + $0x1e8] sm:$0xff]
        %v628 = vld [vmem:[%s3 + $0x1f0] sm:$0xff]
        %v629 = vld [vmem:[%s3 + $0x1f8] sm:$0xff]
        %v630 = vld [vmem:[%s3 + $0x200] sm:$0xff]
        %v631 = vld [vmem:[%s3 + $0x208] sm:$0xff]
        %v632 = vld [vmem:[%s3 + $0x210] sm:$0xff]
        %v633 = vld [vmem:[%s3 + $0x218] sm:$0xff]
        %v634 = vld [vmem:[%s3 + $0x220] sm:$0xff]
        %v635 = vld [vmem:[%s3 + $0x228] sm:$0xff]
        %v636 = vld [vmem:[%s3 + $0x230] sm:$0xff]
        %v637 = vld [vmem:[%s3 + $0x238] sm:$0xff]
        %v638 = vld [vmem:[%s3 + $0x240] sm:$0xff]
        %v639 = vld [vmem:[%s3 + $0x248] sm:$0xff]
        %v640 = vld [vmem:[%s3 + $0x250] sm:$0xff]
        %v641 = vld [vmem:[%s3 + $0x258] sm:$0xff]
        %v642 = vld [vmem:[%s3 + $0x260] sm:$0xff]
        %v643 = vld [vmem:[%s3 + $0x268] sm:$0xff]
        %v644 = vld [vmem:[%s3 + $0x270] sm:$0xff]
        %v645 = vld [vmem:[%s3 + $0x278] sm:$0xff]
        %v646 = vld [vmem:[%s3 + $0x280] sm:$0xff]
        %v647 = vld [vmem:[%s3 + $0x288] sm:$0xff]
        %v648 = vld [vmem:[%s3 + $0x290] sm:$0xff]
        %v649 = vld [vmem:[%s3 + $0x298] sm:$0xff]
        %v650 = vld [vmem:[%s3 + $0x2a0] sm:$0xff]
        %v651 = vld [vmem:[%s3 + $0x2a8] sm:$0xff]
        %v652 = vld [vmem:[%s3 + $0x2b0] sm:$0xff]
        %v653 = vld [vmem:[%s3 + $0x2b8] sm:$0xff]
        %v654 = vld [vmem:[%s3 + $0x2c0] sm:$0xff]
        %v655 = vld [vmem:[%s3 + $0x2c8] sm:$0xff]
        %v656 = vld [vmem:[%s3 + $0x2d0] sm:$0xff]
        %v657 = vld [vmem:[%s3 + $0x2d8] sm:$0xff]
        %v658 = vld [vmem:[%s3 + $0x2e0] sm:$0xff]
        %v659 = vld [vmem:[%s3 + $0x2e8] sm:$0xff]
        %v660 = vld [vmem:[%s3 + $0x2f0] sm:$0xff]
        %v661 = vld [vmem:[%s3 + $0x2f8] sm:$0xff]
        %662 = vmatprep.subr.mxu0 %v567
        %663 = vmatpush1.msra.mxu0 %v566
        %664 = vmatprep.subr.mxu0 %v573
        %665 = vmatpush1.msra.mxu0 %v572
        %666 = vmatprep.subr.mxu0 %v579
        %667 = vmatpush1.msra.mxu0 %v578
        %668 = vmatprep.subr.mxu0 %v585
        %669 = vmatpush1.msra.mxu0 %v584
        %670 = vmatprep.subr.mxu0 %v591
        %671 = vmatpush1.msra.mxu0 %v590
        %672 = vmatprep.subr.mxu0 %v597
        %673 = vmatpush1.msra.mxu0 %v596
        %674 = vmatprep.subr.mxu0 %v603
        %675 = vmatpush1.msra.mxu0 %v602
        %676 = vmatprep.subr.mxu0 %v609
        %677 = vmatpush1.msra.mxu0 %v608
        %678 = vmatprep.subr.mxu0 %v615
        %679 = vmatpush1.msra.mxu0 %v614
        %680 = vmatprep.subr.mxu0 %v621
        %681 = vmatpush1.msra.mxu0 %v620
        %682 = vmatprep.subr.mxu0 %v627
        %683 = vmatpush1.msra.mxu0 %v626
        %684 = vmatprep.subr.mxu0 %v633
        %685 = vmatpush1.msra.mxu0 %v632
        %686 = vmatprep.subr.mxu0 %v639
        %687 = vmatpush1.msra.mxu0 %v638
        %688 = vmatprep.subr.mxu0 %v645
        %689 = vmatpush1.msra.mxu0 %v644
        %690 = vmatprep.subr.mxu0 %v651
        %691 = vmatpush1.msra.mxu0 %v650
        %692 = vmatprep.subr.mxu0 %v657
        %693 = vmatpush1.msra.mxu0 %v656
        %694 = vmatprep.subr.mxu0 0.0
        %695 = vmatpush1.msra.mxu0 0.0
        %696 = vmatprep.subr.mxu0 0.0
        %697 = vmatpush1.msra.mxu0 0.0
        %698 = vmatprep.subr.mxu0 0.0
        %699 = vmatpush1.msra.mxu0 0.0
        %700 = vmatprep.subr.mxu0 0.0
        %701 = vmatpush1.msra.mxu0 0.0
        %702 = vmatprep.subr.mxu0 0.0
        %703 = vmatpush1.msra.mxu0 0.0
        %704 = vmatprep.subr.mxu0 0.0
        %705 = vmatpush1.msra.mxu0 0.0
        %706 = vmatprep.subr.mxu0 0.0
        %707 = vmatpush1.msra.mxu0 0.0
        %708 = vmatprep.subr.mxu0 0.0
        %709 = vmatpush1.msra.mxu0 0.0
        %710 = vmatprep.subr.mxu0 0.0
        %711 = vmatpush1.msra.mxu0 0.0
        %712 = vmatprep.subr.mxu0 0.0
        %713 = vmatpush1.msra.mxu0 0.0
        %714 = vmatprep.subr.mxu0 0.0
        %715 = vmatpush1.msra.mxu0 0.0
        %716 = vmatprep.subr.mxu0 0.0
        %717 = vmatpush1.msra.mxu0 0.0
        %718 = vmatprep.subr.mxu0 0.0
        %719 = vmatpush1.msra.mxu0 0.0
        %720 = vmatprep.subr.mxu0 0.0
        %721 = vmatpush1.msra.mxu0 0.0
        %722 = vmatprep.subr.mxu0 0.0
        %723 = vmatpush1.msra.mxu0 0.0
        %724 = vmatprep.subr.mxu0 0.0
        %725 = vmatpush1.msra.mxu0 0.0
        %726 = vmatprep.mubr.f32.mxu0 0.0
        %727 = vmatmul.mubr.f32.gmra.mrb[0].mxu0 %v558
        %v728 = vpop.f32.mrb[0].mxu0
        %v729 = vadd.f32 0.0, %v728
        %v730 = vpop.f32.mrb[0].mxu0
        %v731 = vadd.f32 0.0, %v730
        %732 = vmatprep.mubr.f32.mxu0 0.0
        %733 = vmatmul.mubr.f32.gmra.mrb[0].mxu0 %v559
        %v734 = vpop.f32.mrb[0].mxu0
        %v735 = vadd.f32 0.0, %v734
        %v736 = vpop.f32.mrb[0].mxu0
        %v737 = vadd.f32 0.0, %v736
        %738 = vmatprep.mubr.f32.mxu0 0.0
        %739 = vmatmul.mubr.f32.gmra.mrb[0].mxu0 %v560
        %v740 = vpop.f32.mrb[0].mxu0
        %v741 = vadd.f32 0.0, %v740
        %v742 = vpop.f32.mrb[0].mxu0
        %v743 = vadd.f32 0.0, %v742
        %744 = vmatprep.mubr.f32.mxu0 0.0
        %745 = vmatmul.mubr.f32.gmra.mrb[0].mxu0 %v561
        %v746 = vpop.f32.mrb[0].mxu0
        %v747 = vadd.f32 0.0, %v746
        %v748 = vpop.f32.mrb[0].mxu0
        %v749 = vadd.f32 0.0, %v748
        %750 = vmatprep.mubr.f32.mxu0 0.0
        %751 = vmatmul.mubr.f32.gmra.mrb[0].mxu0 %v562
        %v752 = vpop.f32.mrb[0].mxu0
        %v753 = vadd.f32 0.0, %v752
        %v754 = vpop.f32.mrb[0].mxu0
        %v755 = vadd.f32 0.0, %v754
        %756 = vmatprep.mubr.f32.mxu0 0.0
        %757 = vmatmul.mubr.f32.gmra.mrb[0].mxu0 %v563
        %v758 = vpop.f32.mrb[0].mxu0
        %v759 = vadd.f32 0.0, %v758
        %v760 = vpop.f32.mrb[0].mxu0
        %v761 = vadd.f32 0.0, %v760
        %762 = vmatprep.mubr.f32.mxu0 0.0
        %763 = vmatmul.mubr.f32.gmra.mrb[0].mxu0 %v564
        %v764 = vpop.f32.mrb[0].mxu0
        %v765 = vadd.f32 0.0, %v764
        %v766 = vpop.f32.mrb[0].mxu0
        %v767 = vadd.f32 0.0, %v766
        %768 = vmatprep.mubr.f32.mxu0 0.0
        %769 = vmatmul.mubr.f32.gmra.mrb[0].mxu0 %v565
        %v770 = vpop.f32.mrb[0].mxu0
        %v771 = vadd.f32 0.0, %v770
        %v772 = vpop.f32.mrb[0].mxu0
        %v773 = vadd.f32 0.0, %v772
        %774 = vdwg.mxu0
        %775 = vmatprep.subr.mxu0 %v569
        %776 = vmatpush1.msra.mxu0 %v568
        %777 = vmatprep.subr.mxu0 %v575
        %778 = vmatpush1.msra.mxu0 %v574
        %779 = vmatprep.subr.mxu0 %v581
        %780 = vmatpush1.msra.mxu0 %v580
        %781 = vmatprep.subr.mxu0 %v587
        %782 = vmatpush1.msra.mxu0 %v586
        %783 = vmatprep.subr.mxu0 %v593
        %784 = vmatpush1.msra.mxu0 %v592
        %785 = vmatprep.subr.mxu0 %v599
        %786 = vmatpush1.msra.mxu0 %v598
        %787 = vmatprep.subr.mxu0 %v605
        %788 = vmatpush1.msra.mxu0 %v604
        %789 = vmatprep.subr.mxu0 %v611
        %790 = vmatpush1.msra.mxu0 %v610
        %791 = vmatprep.subr.mxu0 %v617
        %792 = vmatpush1.msra.mxu0 %v616
        %793 = vmatprep.subr.mxu0 %v623
        %794 = vmatpush1.msra.mxu0 %v622
        %795 = vmatprep.subr.mxu0 %v629
        %796 = vmatpush1.msra.mxu0 %v628
        %797 = vmatprep.subr.mxu0 %v635
        %798 = vmatpush1.msra.mxu0 %v634
        %799 = vmatprep.subr.mxu0 %v641
        %800 = vmatpush1.msra.mxu0 %v640
        %801 = vmatprep.subr.mxu0 %v647
        %802 = vmatpush1.msra.mxu0 %v646
        %803 = vmatprep.subr.mxu0 %v653
        %804 = vmatpush1.msra.mxu0 %v652
        %805 = vmatprep.subr.mxu0 %v659
        %806 = vmatpush1.msra.mxu0 %v658
        %807 = vmatprep.subr.mxu0 0.0
        %808 = vmatpush1.msra.mxu0 0.0
        %809 = vmatprep.subr.mxu0 0.0
        %810 = vmatpush1.msra.mxu0 0.0
        %811 = vmatprep.subr.mxu0 0.0
        %812 = vmatpush1.msra.mxu0 0.0
        %813 = vmatprep.subr.mxu0 0.0
        %814 = vmatpush1.msra.mxu0 0.0
        %815 = vmatprep.subr.mxu0 0.0
        %816 = vmatpush1.msra.mxu0 0.0
        %817 = vmatprep.subr.mxu0 0.0
        %818 = vmatpush1.msra.mxu0 0.0
        %819 = vmatprep.subr.mxu0 0.0
        %820 = vmatpush1.msra.mxu0 0.0
        %821 = vmatprep.subr.mxu0 0.0
        %822 = vmatpush1.msra.mxu0 0.0
        %823 = vmatprep.subr.mxu0 0.0
        %824 = vmatpush1.msra.mxu0 0.0
        %825 = vmatprep.subr.mxu0 0.0
        %826 = vmatpush1.msra.mxu0 0.0
        %827 = vmatprep.subr.mxu0 0.0
        %828 = vmatpush1.msra.mxu0 0.0
        %829 = vmatprep.subr.mxu0 0.0
        %830 = vmatpush1.msra.mxu0 0.0
        %831 = vmatprep.subr.mxu0 0.0
        %832 = vmatpush1.msra.mxu0 0.0
        %833 = vmatprep.subr.mxu0 0.0
        %834 = vmatpush1.msra.mxu0 0.0
        %835 = vmatprep.subr.mxu0 0.0
        %836 = vmatpush1.msra.mxu0 0.0
        %837 = vmatprep.subr.mxu0 0.0
        %838 = vmatpush1.msra.mxu0 0.0
        %839 = vmatprep.mubr.f32.mxu0 0.0
        %840 = vmatmul.mubr.f32.gmra.mrb[0].mxu0 %v558
        %v841 = vpop.f32.mrb[0].mxu0
        %v842 = vadd.f32 0.0, %v841
        %v843 = vpop.f32.mrb[0].mxu0
        %v844 = vadd.f32 0.0, %v843
        %845 = vmatprep.mubr.f32.mxu0 0.0
        %846 = vmatmul.mubr.f32.gmra.mrb[0].mxu0 %v559
        %v847 = vpop.f32.mrb[0].mxu0
        %v848 = vadd.f32 0.0, %v847
        %v849 = vpop.f32.mrb[0].mxu0
        %v850 = vadd.f32 0.0, %v849
        %851 = vmatprep.mubr.f32.mxu0 0.0
        %852 = vmatmul.mubr.f32.gmra.mrb[0].mxu0 %v560
        %v853 = vpop.f32.mrb[0].mxu0
        %v854 = vadd.f32 0.0, %v853
        %v855 = vpop.f32.mrb[0].mxu0
        %v856 = vadd.f32 0.0, %v855
        %857 = vmatprep.mubr.f32.mxu0 0.0
        %858 = vmatmul.mubr.f32.gmra.mrb[0].mxu0 %v561
        %v859 = vpop.f32.mrb[0].mxu0
        %v860 = vadd.f32 0.0, %v859
        %v861 = vpop.f32.mrb[0].mxu0
        %v862 = vadd.f32 0.0, %v861
        %863 = vmatprep.mubr.f32.mxu0 0.0
        %864 = vmatmul.mubr.f32.gmra.mrb[0].mxu0 %v562
        %v865 = vpop.f32.mrb[0].mxu0
        %v866 = vadd.f32 0.0, %v865
        %v867 = vpop.f32.mrb[0].mxu0
        %v868 = vadd.f32 0.0, %v867
        %869 = vmatprep.mubr.f32.mxu0 0.0
        %870 = vmatmul.mubr.f32.gmra.mrb[0].mxu0 %v563
        %v871 = vpop.f32.mrb[0].mxu0
        %v872 = vadd.f32 0.0, %v871
        %v873 = vpop.f32.mrb[0].mxu0
        %v874 = vadd.f32 0.0, %v873
        %875 = vmatprep.mubr.f32.mxu0 0.0
        %876 = vmatmul.mubr.f32.gmra.mrb[0].mxu0 %v564
        %v877 = vpop.f32.mrb[0].mxu0
        %v878 = vadd.f32 0.0, %v877
        %v879 = vpop.f32.mrb[0].mxu0
        %v880 = vadd.f32 0.0, %v879
        %881 = vmatprep.mubr.f32.mxu0 0.0
        %882 = vmatmul.mubr.f32.gmra.mrb[0].mxu0 %v565
        %v883 = vpop.f32.mrb[0].mxu0
        %v884 = vadd.f32 0.0, %v883
        %v885 = vpop.f32.mrb[0].mxu0
        %v886 = vadd.f32 0.0, %v885
        %887 = vdwg.mxu0
        %888 = vmatprep.subr.mxu0 %v571
        %889 = vmatpush1.msra.mxu0 %v570
        %890 = vmatprep.subr.mxu0 %v577
        %891 = vmatpush1.msra.mxu0 %v576
        %892 = vmatprep.subr.mxu0 %v583
        %893 = vmatpush1.msra.mxu0 %v582
        %894 = vmatprep.subr.mxu0 %v589
        %895 = vmatpush1.msra.mxu0 %v588
        %896 = vmatprep.subr.mxu0 %v595
        %897 = vmatpush1.msra.mxu0 %v594
        %898 = vmatprep.subr.mxu0 %v601
        %899 = vmatpush1.msra.mxu0 %v600
        %900 = vmatprep.subr.mxu0 %v607
        %901 = vmatpush1.msra.mxu0 %v606
        %902 = vmatprep.subr.mxu0 %v613
        %903 = vmatpush1.msra.mxu0 %v612
        %904 = vmatprep.subr.mxu0 %v619
        %905 = vmatpush1.msra.mxu0 %v618
        %906 = vmatprep.subr.mxu0 %v625
        %907 = vmatpush1.msra.mxu0 %v624
        %908 = vmatprep.subr.mxu0 %v631
        %909 = vmatpush1.msra.mxu0 %v630
        %910 = vmatprep.subr.mxu0 %v637
        %911 = vmatpush1.msra.mxu0 %v636
        %912 = vmatprep.subr.mxu0 %v643
        %913 = vmatpush1.msra.mxu0 %v642
        %914 = vmatprep.subr.mxu0 %v649
        %915 = vmatpush1.msra.mxu0 %v648
        %916 = vmatprep.subr.mxu0 %v655
        %917 = vmatpush1.msra.mxu0 %v654
        %918 = vmatprep.subr.mxu0 %v661
        %919 = vmatpush1.msra.mxu0 %v660
        %920 = vmatprep.subr.mxu0 0.0
        %921 = vmatpush1.msra.mxu0 0.0
        %922 = vmatprep.subr.mxu0 0.0
        %923 = vmatpush1.msra.mxu0 0.0
        %924 = vmatprep.subr.mxu0 0.0
        %925 = vmatpush1.msra.mxu0 0.0
        %926 = vmatprep.subr.mxu0 0.0
        %927 = vmatpush1.msra.mxu0 0.0
        %928 = vmatprep.subr.mxu0 0.0
        %929 = vmatpush1.msra.mxu0 0.0
        %930 = vmatprep.subr.mxu0 0.0
        %931 = vmatpush1.msra.mxu0 0.0
        %932 = vmatprep.subr.mxu0 0.0
        %933 = vmatpush1.msra.mxu0 0.0
        %934 = vmatprep.subr.mxu0 0.0
        %935 = vmatpush1.msra.mxu0 0.0
        %936 = vmatprep.subr.mxu0 0.0
        %937 = vmatpush1.msra.mxu0 0.0
        %938 = vmatprep.subr.mxu0 0.0
        %939 = vmatpush1.msra.mxu0 0.0
        %940 = vmatprep.subr.mxu0 0.0
        %941 = vmatpush1.msra.mxu0 0.0
        %942 = vmatprep.subr.mxu0 0.0
        %943 = vmatpush1.msra.mxu0 0.0
        %944 = vmatprep.subr.mxu0 0.0
        %945 = vmatpush1.msra.mxu0 0.0
        %946 = vmatprep.subr.mxu0 0.0
        %947 = vmatpush1.msra.mxu0 0.0
        %948 = vmatprep.subr.mxu0 0.0
        %949 = vmatpush1.msra.mxu0 0.0
        %950 = vmatprep.subr.mxu0 0.0
        %951 = vmatpush1.msra.mxu0 0.0
        %952 = vmatprep.mubr.f32.mxu0 0.0
        %953 = vmatmul.mubr.f32.gmra.mrb[0].mxu0 %v558
        %v954 = vpop.f32.mrb[0].mxu0
        %v955 = vadd.f32 0.0, %v954
        %v956 = vpop.f32.mrb[0].mxu0
        %v957 = vadd.f32 0.0, %v956
        %958 = vmatprep.mubr.f32.mxu0 0.0
        %959 = vmatmul.mubr.f32.gmra.mrb[0].mxu0 %v559
        %v960 = vpop.f32.mrb[0].mxu0
        %v961 = vadd.f32 0.0, %v960
        %v962 = vpop.f32.mrb[0].mxu0
        %v963 = vadd.f32 0.0, %v962
        %964 = vmatprep.mubr.f32.mxu0 0.0
        %965 = vmatmul.mubr.f32.gmra.mrb[0].mxu0 %v560
        %v966 = vpop.f32.mrb[0].mxu0
        %v967 = vadd.f32 0.0, %v966
        %v968 = vpop.f32.mrb[0].mxu0
        %v969 = vadd.f32 0.0, %v968
        %970 = vmatprep.mubr.f32.mxu0 0.0
        %971 = vmatmul.mubr.f32.gmra.mrb[0].mxu0 %v561
        %v972 = vpop.f32.mrb[0].mxu0
        %v973 = vadd.f32 0.0, %v972
        %v974 = vpop.f32.mrb[0].mxu0
        %v975 = vadd.f32 0.0, %v974
        %976 = vmatprep.mubr.f32.mxu0 0.0
        %977 = vmatmul.mubr.f32.gmra.mrb[0].mxu0 %v562
        %v978 = vpop.f32.mrb[0].mxu0
        %v979 = vadd.f32 0.0, %v978
        %v980 = vpop.f32.mrb[0].mxu0
        %v981 = vadd.f32 0.0, %v980
        %982 = vmatprep.mubr.f32.mxu0 0.0
        %983 = vmatmul.mubr.f32.gmra.mrb[0].mxu0 %v563
        %v984 = vpop.f32.mrb[0].mxu0
        %v985 = vadd.f32 0.0, %v984
        %v986 = vpop.f32.mrb[0].mxu0
        %v987 = vadd.f32 0.0, %v986
        %988 = vmatprep.mubr.f32.mxu0 0.0
        %989 = vmatmul.mubr.f32.gmra.mrb[0].mxu0 %v564
        %v990 = vpop.f32.mrb[0].mxu0
        %v991 = vadd.f32 0.0, %v990
        %v992 = vpop.f32.mrb[0].mxu0
        %v993 = vadd.f32 0.0, %v992
        %994 = vmatprep.mubr.f32.mxu0 0.0
        %995 = vmatmul.mubr.f32.gmra.mrb[0].mxu0 %v565
        %v996 = vpop.f32.mrb[0].mxu0
        %v997 = vadd.f32 0.0, %v996
        %v998 = vpop.f32.mrb[0].mxu0
        %v999 = vadd.f32 0.0, %v998
        %1000 = vdwg.mxu0
        %v1001 = vmul.f32 %v729, 0.17677669
        %v1002 = vmul.f32 %v735, 0.17677669
        %v1003 = vmul.f32 %v741, 0.17677669
        %v1004 = vmul.f32 %v747, 0.17677669
        %v1005 = vmul.f32 %v753, 0.17677669
        %v1006 = vmul.f32 %v759, 0.17677669
        %v1007 = vmul.f32 %v765, 0.17677669
        %v1008 = vmul.f32 %v771, 0.17677669
        %v1009 = vld [vmem:[%s4] sm:$0xff]
        %v1010 = vld [vmem:[%s4 + $0x8] sm:$0xff]
        %v1011 = vld [vmem:[%s4 + $0x10] sm:$0xff]
        %v1012 = vld [vmem:[%s4 + $0x18] sm:$0xff]
        %v1013 = vld [vmem:[%s4 + $0x20] sm:$0xff]
        %v1014 = vld [vmem:[%s4 + $0x28] sm:$0xff]
        %v1015 = vld [vmem:[%s4 + $0x30] sm:$0xff]
        %v1016 = vld [vmem:[%s4 + $0x38] sm:$0xff]
        %vm1017 = vcmask 261120
        %v1019 = vsel %vm1017, %v1001, 0
        %v1022 = vsel %vm1017, %v1002, 0
        %v1025 = vsel %vm1017, %v1003, 0
        %v1028 = vsel %vm1017, %v1004, 0
        %v1031 = vsel %vm1017, %v1005, 0
        %v1034 = vsel %vm1017, %v1006, 0
        %v1037 = vsel %vm1017, %v1007, 0
        %v1040 = vsel %vm1017, %v1008, 0
        %v1043 = vsel %vm1017, %v842, 0
        %v1046 = vsel %vm1017, %v848, 0
        %v1049 = vsel %vm1017, %v854, 0
        %v1052 = vsel %vm1017, %v860, 0
        %v1055 = vsel %vm1017, %v866, 0
        %v1058 = vsel %vm1017, %v872, 0
        %v1061 = vsel %vm1017, %v878, 0
        %v1064 = vsel %vm1017, %v884, 0
        %1066 = vmatprep.subr.mxu0 0.0
        %1067 = vmatpush1.xpose.msra.mxu0 %v1043
        %1068 = vmatprep.subr.mxu0 0.0
        %1069 = vmatpush1.xpose.msra.mxu0 %v1046
        %1070 = vmatprep.subr.mxu0 0.0
        %1071 = vmatpush1.xpose.msra.mxu0 %v1049
        %1072 = vmatprep.subr.mxu0 0.0
        %1073 = vmatpush1.xpose.msra.mxu0 %v1052
        %1074 = vmatprep.subr.mxu0 0.0
        %1075 = vmatpush1.xpose.msra.mxu0 %v1055
        %1076 = vmatprep.subr.mxu0 0.0
        %1077 = vmatpush1.xpose.msra.mxu0 %v1058
        %1078 = vmatprep.subr.mxu0 0.0
        %1079 = vmatpush1.xpose.msra.mxu0 %v1061
        %1080 = vmatprep.subr.mxu0 0.0
        %1081 = vmatpush1.xpose.msra.mxu0 %v1064
        %1082 = vmatprep.subr.mxu0 0.0
        %1083 = vmatpush1.xpose.msra.mxu0 0.0
        %1084 = vmatprep.subr.mxu0 0.0
        %1085 = vmatpush1.xpose.msra.mxu0 0.0
        %1086 = vmatprep.subr.mxu0 0.0
        %1087 = vmatpush1.xpose.msra.mxu0 0.0
        %1088 = vmatprep.subr.mxu0 0.0
        %1089 = vmatpush1.xpose.msra.mxu0 0.0
        %1090 = vmatprep.subr.mxu0 0.0
        %1091 = vmatpush1.xpose.msra.mxu0 0.0
        %1092 = vmatprep.subr.mxu0 0.0
        %1093 = vmatpush1.xpose.msra.mxu0 0.0
        %1094 = vmatprep.subr.mxu0 0.0
        %1095 = vmatpush1.xpose.msra.mxu0 0.0
        %1096 = vmatprep.subr.mxu0 0.0
        %1097 = vmatpush1.xpose.msra.mxu0 0.0
        %1098 = vmatprep.subr.mxu0 0.0
        %1099 = vmatpush1.xpose.msra.mxu0 0.0
        %1100 = vmatprep.subr.mxu0 0.0
        %1101 = vmatpush1.xpose.msra.mxu0 0.0
        %1102 = vmatprep.subr.mxu0 0.0
        %1103 = vmatpush1.xpose.msra.mxu0 0.0
        %1104 = vmatprep.subr.mxu0 0.0
        %1105 = vmatpush1.xpose.msra.mxu0 0.0
        %1106 = vmatprep.subr.mxu0 0.0
        %1107 = vmatpush1.xpose.msra.mxu0 0.0
        %1108 = vmatprep.subr.mxu0 0.0
        %1109 = vmatpush1.xpose.msra.mxu0 0.0
        %1110 = vmatprep.subr.mxu0 0.0
        %1111 = vmatpush1.xpose.msra.mxu0 0.0
        %1112 = vmatprep.subr.mxu0 0.0
        %1113 = vmatpush1.xpose.msra.mxu0 0.0
        %1114 = vmatprep.subr.mxu0 0.0
        %1115 = vmatpush1.xpose.msra.mxu0 0.0
        %1116 = vmatprep.subr.mxu0 0.0
        %1117 = vmatpush1.xpose.msra.mxu0 0.0
        %1118 = vmatprep.subr.mxu0 0.0
        %1119 = vmatpush1.xpose.msra.mxu0 0.0
        %1120 = vmatprep.subr.mxu0 0.0
        %1121 = vmatpush1.xpose.msra.mxu0 0.0
        %1122 = vmatprep.subr.mxu0 0.0
        %1123 = vmatpush1.xpose.msra.mxu0 0.0
        %1124 = vmatprep.subr.mxu0 0.0
        %1125 = vmatpush1.xpose.msra.mxu0 0.0
        %1126 = vmatprep.subr.mxu0 0.0
        %1127 = vmatpush1.xpose.msra.mxu0 0.0
        %1128 = vmatprep.subr.mxu0 0.0
        %1129 = vmatpush1.xpose.msra.mxu0 0.0
        %1130 = vmatprep.mubr.f32.mxu0 0.0
        %1131 = vmatmul.mubr.f32.gmra.mrb[0].mxu0 %v1019
        %v1132 = vpop.f32.mrb[0].mxu0
        %v1133 = vadd.f32 %v1009, %v1132
        %v1134 = vpop.f32.mrb[0].mxu0
        %1135 = vmatprep.mubr.f32.mxu0 0.0
        %1136 = vmatmul.mubr.f32.gmra.mrb[0].mxu0 %v1022
        %v1137 = vpop.f32.mrb[0].mxu0
        %v1138 = vadd.f32 %v1010, %v1137
        %v1139 = vpop.f32.mrb[0].mxu0
        %1140 = vmatprep.mubr.f32.mxu0 0.0
        %1141 = vmatmul.mubr.f32.gmra.mrb[0].mxu0 %v1025
        %v1142 = vpop.f32.mrb[0].mxu0
        %v1143 = vadd.f32 %v1011, %v1142
        %v1144 = vpop.f32.mrb[0].mxu0
        %1145 = vmatprep.mubr.f32.mxu0 0.0
        %1146 = vmatmul.mubr.f32.gmra.mrb[0].mxu0 %v1028
        %v1147 = vpop.f32.mrb[0].mxu0
        %v1148 = vadd.f32 %v1012, %v1147
        %v1149 = vpop.f32.mrb[0].mxu0
        %1150 = vmatprep.mubr.f32.mxu0 0.0
        %1151 = vmatmul.mubr.f32.gmra.mrb[0].mxu0 %v1031
        %v1152 = vpop.f32.mrb[0].mxu0
        %v1153 = vadd.f32 %v1013, %v1152
        %v1154 = vpop.f32.mrb[0].mxu0
        %1155 = vmatprep.mubr.f32.mxu0 0.0
        %1156 = vmatmul.mubr.f32.gmra.mrb[0].mxu0 %v1034
        %v1157 = vpop.f32.mrb[0].mxu0
        %v1158 = vadd.f32 %v1014, %v1157
        %v1159 = vpop.f32.mrb[0].mxu0
        %1160 = vmatprep.mubr.f32.mxu0 0.0
        %1161 = vmatmul.mubr.f32.gmra.mrb[0].mxu0 %v1037
        %v1162 = vpop.f32.mrb[0].mxu0
        %v1163 = vadd.f32 %v1015, %v1162
        %v1164 = vpop.f32.mrb[0].mxu0
        %1165 = vmatprep.mubr.f32.mxu0 0.0
        %1166 = vmatmul.mubr.f32.gmra.mrb[0].mxu0 %v1040
        %v1167 = vpop.f32.mrb[0].mxu0
        %v1168 = vadd.f32 %v1016, %v1167
        %v1169 = vpop.f32.mrb[0].mxu0
        %1170 = vdwg.mxu0
        %vm1171 = vcmask 523264
        %v1172 = vsel %vm1171, %v1133, -inf
        %1173 = vmax.xlane.f32.xlu0 %v1172
        %v1174 = vpop.xlane.xlu0 %1173
        %v1175 = vsel %vm1171, %v1138, -inf
        %1176 = vmax.xlane.f32.xlu0 %v1175
        %v1177 = vpop.xlane.xlu0 %1176
        %v1178 = vsel %vm1171, %v1143, -inf
        %1179 = vmax.xlane.f32.xlu0 %v1178
        %v1180 = vpop.xlane.xlu0 %1179
        %v1181 = vsel %vm1171, %v1148, -inf
        %1182 = vmax.xlane.f32.xlu0 %v1181
        %v1183 = vpop.xlane.xlu0 %1182
        %v1184 = vsel %vm1171, %v1153, -inf
        %1185 = vmax.xlane.f32.xlu0 %v1184
        %v1186 = vpop.xlane.xlu0 %1185
        %v1187 = vsel %vm1171, %v1158, -inf
        %1188 = vmax.xlane.f32.xlu0 %v1187
        %v1189 = vpop.xlane.xlu0 %1188
        %v1190 = vsel %vm1171, %v1163, -inf
        %1191 = vmax.xlane.f32.xlu0 %v1190
        %v1192 = vpop.xlane.xlu0 %1191
        %v1193 = vsel %vm1171, %v1168, -inf
        %1194 = vmax.xlane.f32.xlu0 %v1193
        %v1195 = vpop.xlane.xlu0 %1194
        %v1196 = vsub.f32 %v1133, %v1174
        %v1197 = vsub.f32 %v1138, %v1177
        %v1198 = vsub.f32 %v1143, %v1180
        %v1199 = vsub.f32 %v1148, %v1183
        %v1200 = vsub.f32 %v1153, %v1186
        %v1201 = vsub.f32 %v1158, %v1189
        %v1202 = vsub.f32 %v1163, %v1192
        %v1203 = vsub.f32 %v1168, %v1195
        %v1204 = vmul.f32 %v1196, 1.442695
        %v1205 = vpow.pop %v1204
        %v1206 = vmul.f32 %v1197, 1.442695
        %v1207 = vpow.pop %v1206
        %v1208 = vmul.f32 %v1198, 1.442695
        %v1209 = vpow.pop %v1208
        %v1210 = vmul.f32 %v1199, 1.442695
        %v1211 = vpow.pop %v1210
        %v1212 = vmul.f32 %v1200, 1.442695
        %v1213 = vpow.pop %v1212
        %v1214 = vmul.f32 %v1201, 1.442695
        %v1215 = vpow.pop %v1214
        %v1216 = vmul.f32 %v1202, 1.442695
        %v1217 = vpow.pop %v1216
        %v1218 = vmul.f32 %v1203, 1.442695
        %v1219 = vpow.pop %v1218
        %v1220 = vsel %vm1171, %v1205, 0.0
        %1221 = vadd.xlane.f32.xlu0 %v1220
        %v1222 = vpop.xlane.xlu0 %1221
        %v1223 = vsel %vm1171, %v1207, 0.0
        %1224 = vadd.xlane.f32.xlu0 %v1223
        %v1225 = vpop.xlane.xlu0 %1224
        %v1226 = vsel %vm1171, %v1209, 0.0
        %1227 = vadd.xlane.f32.xlu0 %v1226
        %v1228 = vpop.xlane.xlu0 %1227
        %v1229 = vsel %vm1171, %v1211, 0.0
        %1230 = vadd.xlane.f32.xlu0 %v1229
        %v1231 = vpop.xlane.xlu0 %1230
        %v1232 = vsel %vm1171, %v1213, 0.0
        %1233 = vadd.xlane.f32.xlu0 %v1232
        %v1234 = vpop.xlane.xlu0 %1233
        %v1235 = vsel %vm1171, %v1215, 0.0
        %1236 = vadd.xlane.f32.xlu0 %v1235
        %v1237 = vpop.xlane.xlu0 %1236
        %v1238 = vsel %vm1171, %v1217, 0.0
        %1239 = vadd.xlane.f32.xlu0 %v1238
        %v1240 = vpop.xlane.xlu0 %1239
        %v1241 = vsel %vm1171, %v1219, 0.0
        %1242 = vadd.xlane.f32.xlu0 %v1241
        %v1243 = vpop.xlane.xlu0 %1242
        %v1244 = vrcp.pop %v1222
        %v1245 = vrcp.pop %v1225
        %v1246 = vrcp.pop %v1228
        %v1247 = vrcp.pop %v1231
        %v1248 = vrcp.pop %v1234
        %v1249 = vrcp.pop %v1237
        %v1250 = vrcp.pop %v1240
        %v1251 = vrcp.pop %v1243
        %v1252 = vmul.f32 %v1205, %v1244
        %v1253 = vmul.f32 %v1207, %v1245
        %v1254 = vmul.f32 %v1209, %v1246
        %v1255 = vmul.f32 %v1211, %v1247
        %v1256 = vmul.f32 %v1213, %v1248
        %v1257 = vmul.f32 %v1215, %v1249
        %v1258 = vmul.f32 %v1217, %v1250
        %v1259 = vmul.f32 %v1219, %v1251
        %v1261 = vsel %vm1171, %v1252, 0
        %v1264 = vsel %vm1171, %v1253, 0
        %v1267 = vsel %vm1171, %v1254, 0
        %v1270 = vsel %vm1171, %v1255, 0
        %v1273 = vsel %vm1171, %v1256, 0
        %v1276 = vsel %vm1171, %v1257, 0
        %v1279 = vsel %vm1171, %v1258, 0
        %v1282 = vsel %vm1171, %v1259, 0
        %1284 = vmatprep.subr.mxu0 0.0
        %1285 = vmatpush1.msra.mxu0 %v955
        %1286 = vmatprep.subr.mxu0 0.0
        %1287 = vmatpush1.msra.mxu0 %v961
        %1288 = vmatprep.subr.mxu0 0.0
        %1289 = vmatpush1.msra.mxu0 %v967
        %1290 = vmatprep.subr.mxu0 0.0
        %1291 = vmatpush1.msra.mxu0 %v973
        %1292 = vmatprep.subr.mxu0 0.0
        %1293 = vmatpush1.msra.mxu0 %v979
        %1294 = vmatprep.subr.mxu0 0.0
        %1295 = vmatpush1.msra.mxu0 %v985
        %1296 = vmatprep.subr.mxu0 0.0
        %1297 = vmatpush1.msra.mxu0 %v991
        %1298 = vmatprep.subr.mxu0 0.0
        %1299 = vmatpush1.msra.mxu0 %v997
        %1300 = vmatprep.subr.mxu0 0.0
        %1301 = vmatpush1.msra.mxu0 0.0
        %1302 = vmatprep.subr.mxu0 0.0
        %1303 = vmatpush1.msra.mxu0 0.0
        %1304 = vmatprep.subr.mxu0 0.0
        %1305 = vmatpush1.msra.mxu0 0.0
        %1306 = vmatprep.subr.mxu0 0.0
        %1307 = vmatpush1.msra.mxu0 0.0
        %1308 = vmatprep.subr.mxu0 0.0
        %1309 = vmatpush1.msra.mxu0 0.0
        %1310 = vmatprep.subr.mxu0 0.0
        %1311 = vmatpush1.msra.mxu0 0.0
        %1312 = vmatprep.subr.mxu0 0.0
        %1313 = vmatpush1.msra.mxu0 0.0
        %1314 = vmatprep.subr.mxu0 0.0
        %1315 = vmatpush1.msra.mxu0 0.0
        %1316 = vmatprep.subr.mxu0 0.0
        %1317 = vmatpush1.msra.mxu0 0.0
        %1318 = vmatprep.subr.mxu0 0.0
        %1319 = vmatpush1.msra.mxu0 0.0
        %1320 = vmatprep.subr.mxu0 0.0
        %1321 = vmatpush1.msra.mxu0 0.0
        %1322 = vmatprep.subr.mxu0 0.0
        %1323 = vmatpush1.msra.mxu0 0.0
        %1324 = vmatprep.subr.mxu0 0.0
        %1325 = vmatpush1.msra.mxu0 0.0
        %1326 = vmatprep.subr.mxu0 0.0
        %1327 = vmatpush1.msra.mxu0 0.0
        %1328 = vmatprep.subr.mxu0 0.0
        %1329 = vmatpush1.msra.mxu0 0.0
        %1330 = vmatprep.subr.mxu0 0.0
        %1331 = vmatpush1.msra.mxu0 0.0
        %1332 = vmatprep.subr.mxu0 0.0
        %1333 = vmatpush1.msra.mxu0 0.0
        %1334 = vmatprep.subr.mxu0 0.0
        %1335 = vmatpush1.msra.mxu0 0.0
        %1336 = vmatprep.subr.mxu0 0.0
        %1337 = vmatpush1.msra.mxu0 0.0
        %1338 = vmatprep.subr.mxu0 0.0
        %1339 = vmatpush1.msra.mxu0 0.0
        %1340 = vmatprep.subr.mxu0 0.0
        %1341 = vmatpush1.msra.mxu0 0.0
        %1342 = vmatprep.subr.mxu0 0.0
        %1343 = vmatpush1.msra.mxu0 0.0
        %1344 = vmatprep.subr.mxu0 0.0
        %1345 = vmatpush1.msra.mxu0 0.0
        %1346 = vmatprep.subr.mxu0 0.0
        %1347 = vmatpush1.msra.mxu0 0.0
        %1348 = vmatprep.mubr.f32.mxu0 0.0
        %1349 = vmatmul.mubr.f32.gmra.mrb[0].mxu0 %v1261
        %v1350 = vpop.f32.mrb[0].mxu0
        %v1351 = vadd.f32 0.0, %v1350
        %v1352 = vpop.f32.mrb[0].mxu0
        %1353 = vmatprep.mubr.f32.mxu0 0.0
        %1354 = vmatmul.mubr.f32.gmra.mrb[0].mxu0 %v1264
        %v1355 = vpop.f32.mrb[0].mxu0
        %v1356 = vadd.f32 0.0, %v1355
        %v1357 = vpop.f32.mrb[0].mxu0
        %1358 = vmatprep.mubr.f32.mxu0 0.0
        %1359 = vmatmul.mubr.f32.gmra.mrb[0].mxu0 %v1267
        %v1360 = vpop.f32.mrb[0].mxu0
        %v1361 = vadd.f32 0.0, %v1360
        %v1362 = vpop.f32.mrb[0].mxu0
        %1363 = vmatprep.mubr.f32.mxu0 0.0
        %1364 = vmatmul.mubr.f32.gmra.mrb[0].mxu0 %v1270
        %v1365 = vpop.f32.mrb[0].mxu0
        %v1366 = vadd.f32 0.0, %v1365
        %v1367 = vpop.f32.mrb[0].mxu0
        %1368 = vmatprep.mubr.f32.mxu0 0.0
        %1369 = vmatmul.mubr.f32.gmra.mrb[0].mxu0 %v1273
        %v1370 = vpop.f32.mrb[0].mxu0
        %v1371 = vadd.f32 0.0, %v1370
        %v1372 = vpop.f32.mrb[0].mxu0
        %1373 = vmatprep.mubr.f32.mxu0 0.0
        %1374 = vmatmul.mubr.f32.gmra.mrb[0].mxu0 %v1276
        %v1375 = vpop.f32.mrb[0].mxu0
        %v1376 = vadd.f32 0.0, %v1375
        %v1377 = vpop.f32.mrb[0].mxu0
        %1378 = vmatprep.mubr.f32.mxu0 0.0
        %1379 = vmatmul.mubr.f32.gmra.mrb[0].mxu0 %v1279
        %v1380 = vpop.f32.mrb[0].mxu0
        %v1381 = vadd.f32 0.0, %v1380
        %v1382 = vpop.f32.mrb[0].mxu0
        %1383 = vmatprep.mubr.f32.mxu0 0.0
        %1384 = vmatmul.mubr.f32.gmra.mrb[0].mxu0 %v1282
        %v1385 = vpop.f32.mrb[0].mxu0
        %v1386 = vadd.f32 0.0, %v1385
        %v1387 = vpop.f32.mrb[0].mxu0
        %1388 = vdwg.mxu0
        %s1389 = scalar_lea.vmem %s4, 64
        %v1390 = vld [vmem:[%s1389] sm:$0xff]
        %v1391 = vld [vmem:[%s1389 + $0x8] sm:$0xff]
        %v1392 = vld [vmem:[%s1389 + $0x10] sm:$0xff]
        %v1393 = vld [vmem:[%s1389 + $0x18] sm:$0xff]
        %v1394 = vld [vmem:[%s1389 + $0x20] sm:$0xff]
        %v1395 = vld [vmem:[%s1389 + $0x28] sm:$0xff]
        %v1396 = vld [vmem:[%s1389 + $0x30] sm:$0xff]
        %v1397 = vld [vmem:[%s1389 + $0x38] sm:$0xff]
        %1398 = vrot.lane.b32.xlu0 %v1001, 96
        %v1399 = vpop.permute.xlu0 %1398
        %1400 = vrot.lane.b32.xlu0 %v1002, 96
        %v1401 = vpop.permute.xlu0 %1400
        %1402 = vrot.lane.b32.xlu0 %v1003, 96
        %v1403 = vpop.permute.xlu0 %1402
        %1404 = vrot.lane.b32.xlu0 %v1004, 96
        %v1405 = vpop.permute.xlu0 %1404
        %1406 = vrot.lane.b32.xlu0 %v1005, 96
        %v1407 = vpop.permute.xlu0 %1406
        %1408 = vrot.lane.b32.xlu0 %v1006, 96
        %v1409 = vpop.permute.xlu0 %1408
        %1410 = vrot.lane.b32.xlu0 %v1007, 96
        %v1411 = vpop.permute.xlu0 %1410
        %1412 = vrot.lane.b32.xlu0 %v1008, 96
        %v1413 = vpop.permute.xlu0 %1412
        %1414 = vrot.lane.b32.xlu0 %v842, 96
        %v1415 = vpop.permute.xlu0 %1414
        %1416 = vrot.lane.b32.xlu0 %v848, 96
        %v1417 = vpop.permute.xlu0 %1416
        %1418 = vrot.lane.b32.xlu0 %v854, 96
        %v1419 = vpop.permute.xlu0 %1418
        %1420 = vrot.lane.b32.xlu0 %v860, 96
        %v1421 = vpop.permute.xlu0 %1420
        %1422 = vrot.lane.b32.xlu0 %v866, 96
        %v1423 = vpop.permute.xlu0 %1422
        %1424 = vrot.lane.b32.xlu0 %v872, 96
        %v1425 = vpop.permute.xlu0 %1424
        %1426 = vrot.lane.b32.xlu0 %v878, 96
        %v1427 = vpop.permute.xlu0 %1426
        %1428 = vrot.lane.b32.xlu0 %v884, 96
        %v1429 = vpop.permute.xlu0 %1428
        %v1430 = vsel %vm1017, %v1399, 0
        %v1432 = vsel %vm1017, %v1401, 0
        %v1434 = vsel %vm1017, %v1403, 0
        %v1436 = vsel %vm1017, %v1405, 0
        %v1438 = vsel %vm1017, %v1407, 0
        %v1440 = vsel %vm1017, %v1409, 0
        %v1442 = vsel %vm1017, %v1411, 0
        %v1444 = vsel %vm1017, %v1413, 0
        %v1446 = vsel %vm1017, %v1415, 0
        %v1448 = vsel %vm1017, %v1417, 0
        %v1450 = vsel %vm1017, %v1419, 0
        %v1452 = vsel %vm1017, %v1421, 0
        %v1454 = vsel %vm1017, %v1423, 0
        %v1456 = vsel %vm1017, %v1425, 0
        %v1458 = vsel %vm1017, %v1427, 0
        %v1460 = vsel %vm1017, %v1429, 0
        %1462 = vmatprep.subr.mxu0 0.0
        %1463 = vmatpush1.xpose.msra.mxu0 %v1446
        %1464 = vmatprep.subr.mxu0 0.0
        %1465 = vmatpush1.xpose.msra.mxu0 %v1448
        %1466 = vmatprep.subr.mxu0 0.0
        %1467 = vmatpush1.xpose.msra.mxu0 %v1450
        %1468 = vmatprep.subr.mxu0 0.0
        %1469 = vmatpush1.xpose.msra.mxu0 %v1452
        %1470 = vmatprep.subr.mxu0 0.0
        %1471 = vmatpush1.xpose.msra.mxu0 %v1454
        %1472 = vmatprep.subr.mxu0 0.0
        %1473 = vmatpush1.xpose.msra.mxu0 %v1456
        %1474 = vmatprep.subr.mxu0 0.0
        %1475 = vmatpush1.xpose.msra.mxu0 %v1458
        %1476 = vmatprep.subr.mxu0 0.0
        %1477 = vmatpush1.xpose.msra.mxu0 %v1460
        %1478 = vmatprep.subr.mxu0 0.0
        %1479 = vmatpush1.xpose.msra.mxu0 0.0
        %1480 = vmatprep.subr.mxu0 0.0
        %1481 = vmatpush1.xpose.msra.mxu0 0.0
        %1482 = vmatprep.subr.mxu0 0.0
        %1483 = vmatpush1.xpose.msra.mxu0 0.0
        %1484 = vmatprep.subr.mxu0 0.0
        %1485 = vmatpush1.xpose.msra.mxu0 0.0
        %1486 = vmatprep.subr.mxu0 0.0
        %1487 = vmatpush1.xpose.msra.mxu0 0.0
        %1488 = vmatprep.subr.mxu0 0.0
        %1489 = vmatpush1.xpose.msra.mxu0 0.0
        %1490 = vmatprep.subr.mxu0 0.0
        %1491 = vmatpush1.xpose.msra.mxu0 0.0
        %1492 = vmatprep.subr.mxu0 0.0
        %1493 = vmatpush1.xpose.msra.mxu0 0.0
        %1494 = vmatprep.subr.mxu0 0.0
        %1495 = vmatpush1.xpose.msra.mxu0 0.0
        %1496 = vmatprep.subr.mxu0 0.0
        %1497 = vmatpush1.xpose.msra.mxu0 0.0
        %1498 = vmatprep.subr.mxu0 0.0
        %1499 = vmatpush1.xpose.msra.mxu0 0.0
        %1500 = vmatprep.subr.mxu0 0.0
        %1501 = vmatpush1.xpose.msra.mxu0 0.0
        %1502 = vmatprep.subr.mxu0 0.0
        %1503 = vmatpush1.xpose.msra.mxu0 0.0
        %1504 = vmatprep.subr.mxu0 0.0
        %1505 = vmatpush1.xpose.msra.mxu0 0.0
        %1506 = vmatprep.subr.mxu0 0.0
        %1507 = vmatpush1.xpose.msra.mxu0 0.0
        %1508 = vmatprep.subr.mxu0 0.0
        %1509 = vmatpush1.xpose.msra.mxu0 0.0
        %1510 = vmatprep.subr.mxu0 0.0
        %1511 = vmatpush1.xpose.msra.mxu0 0.0
        %1512 = vmatprep.subr.mxu0 0.0
        %1513 = vmatpush1.xpose.msra.mxu0 0.0
        %1514 = vmatprep.subr.mxu0 0.0
        %1515 = vmatpush1.xpose.msra.mxu0 0.0
        %1516 = vmatprep.subr.mxu0 0.0
        %1517 = vmatpush1.xpose.msra.mxu0 0.0
        %1518 = vmatprep.subr.mxu0 0.0
        %1519 = vmatpush1.xpose.msra.mxu0 0.0
        %1520 = vmatprep.subr.mxu0 0.0
        %1521 = vmatpush1.xpose.msra.mxu0 0.0
        %1522 = vmatprep.subr.mxu0 0.0
        %1523 = vmatpush1.xpose.msra.mxu0 0.0
        %1524 = vmatprep.subr.mxu0 0.0
        %1525 = vmatpush1.xpose.msra.mxu0 0.0
        %1526 = vmatprep.mubr.f32.mxu0 0.0
        %1527 = vmatmul.mubr.f32.gmra.mrb[0].mxu0 %v1430
        %v1528 = vpop.f32.mrb[0].mxu0
        %v1529 = vadd.f32 %v1390, %v1528
        %v1530 = vpop.f32.mrb[0].mxu0
        %1531 = vmatprep.mubr.f32.mxu0 0.0
        %1532 = vmatmul.mubr.f32.gmra.mrb[0].mxu0 %v1432
        %v1533 = vpop.f32.mrb[0].mxu0
        %v1534 = vadd.f32 %v1391, %v1533
        %v1535 = vpop.f32.mrb[0].mxu0
        %1536 = vmatprep.mubr.f32.mxu0 0.0
        %1537 = vmatmul.mubr.f32.gmra.mrb[0].mxu0 %v1434
        %v1538 = vpop.f32.mrb[0].mxu0
        %v1539 = vadd.f32 %v1392, %v1538
        %v1540 = vpop.f32.mrb[0].mxu0
        %1541 = vmatprep.mubr.f32.mxu0 0.0
        %1542 = vmatmul.mubr.f32.gmra.mrb[0].mxu0 %v1436
        %v1543 = vpop.f32.mrb[0].mxu0
        %v1544 = vadd.f32 %v1393, %v1543
        %v1545 = vpop.f32.mrb[0].mxu0
        %1546 = vmatprep.mubr.f32.mxu0 0.0
        %1547 = vmatmul.mubr.f32.gmra.mrb[0].mxu0 %v1438
        %v1548 = vpop.f32.mrb[0].mxu0
        %v1549 = vadd.f32 %v1394, %v1548
        %v1550 = vpop.f32.mrb[0].mxu0
        %1551 = vmatprep.mubr.f32.mxu0 0.0
        %1552 = vmatmul.mubr.f32.gmra.mrb[0].mxu0 %v1440
        %v1553 = vpop.f32.mrb[0].mxu0
        %v1554 = vadd.f32 %v1395, %v1553
        %v1555 = vpop.f32.mrb[0].mxu0
        %1556 = vmatprep.mubr.f32.mxu0 0.0
        %1557 = vmatmul.mubr.f32.gmra.mrb[0].mxu0 %v1442
        %v1558 = vpop.f32.mrb[0].mxu0
        %v1559 = vadd.f32 %v1396, %v1558
        %v1560 = vpop.f32.mrb[0].mxu0
        %1561 = vmatprep.mubr.f32.mxu0 0.0
        %1562 = vmatmul.mubr.f32.gmra.mrb[0].mxu0 %v1444
        %v1563 = vpop.f32.mrb[0].mxu0
        %v1564 = vadd.f32 %v1397, %v1563
        %v1565 = vpop.f32.mrb[0].mxu0
        %1566 = vdwg.mxu0
        %v1567 = vsel %vm1171, %v1529, -inf
        %1568 = vmax.xlane.f32.xlu0 %v1567
        %v1569 = vpop.xlane.xlu0 %1568
        %v1570 = vsel %vm1171, %v1534, -inf
        %1571 = vmax.xlane.f32.xlu0 %v1570
        %v1572 = vpop.xlane.xlu0 %1571
        %v1573 = vsel %vm1171, %v1539, -inf
        %1574 = vmax.xlane.f32.xlu0 %v1573
        %v1575 = vpop.xlane.xlu0 %1574
        %v1576 = vsel %vm1171, %v1544, -inf
        %1577 = vmax.xlane.f32.xlu0 %v1576
        %v1578 = vpop.xlane.xlu0 %1577
        %v1579 = vsel %vm1171, %v1549, -inf
        %1580 = vmax.xlane.f32.xlu0 %v1579
        %v1581 = vpop.xlane.xlu0 %1580
        %v1582 = vsel %vm1171, %v1554, -inf
        %1583 = vmax.xlane.f32.xlu0 %v1582
        %v1584 = vpop.xlane.xlu0 %1583
        %v1585 = vsel %vm1171, %v1559, -inf
        %1586 = vmax.xlane.f32.xlu0 %v1585
        %v1587 = vpop.xlane.xlu0 %1586
        %v1588 = vsel %vm1171, %v1564, -inf
        %1589 = vmax.xlane.f32.xlu0 %v1588
        %v1590 = vpop.xlane.xlu0 %1589
        %v1591 = vsub.f32 %v1529, %v1569
        %v1592 = vsub.f32 %v1534, %v1572
        %v1593 = vsub.f32 %v1539, %v1575
        %v1594 = vsub.f32 %v1544, %v1578
        %v1595 = vsub.f32 %v1549, %v1581
        %v1596 = vsub.f32 %v1554, %v1584
        %v1597 = vsub.f32 %v1559, %v1587
        %v1598 = vsub.f32 %v1564, %v1590
        %v1599 = vmul.f32 %v1591, 1.442695
        %v1600 = vpow.pop %v1599
        %v1601 = vmul.f32 %v1592, 1.442695
        %v1602 = vpow.pop %v1601
        %v1603 = vmul.f32 %v1593, 1.442695
        %v1604 = vpow.pop %v1603
        %v1605 = vmul.f32 %v1594, 1.442695
        %v1606 = vpow.pop %v1605
        %v1607 = vmul.f32 %v1595, 1.442695
        %v1608 = vpow.pop %v1607
        %v1609 = vmul.f32 %v1596, 1.442695
        %v1610 = vpow.pop %v1609
        %v1611 = vmul.f32 %v1597, 1.442695
        %v1612 = vpow.pop %v1611
        %v1613 = vmul.f32 %v1598, 1.442695
        %v1614 = vpow.pop %v1613
        %v1615 = vsel %vm1171, %v1600, 0.0
        %1616 = vadd.xlane.f32.xlu0 %v1615
        %v1617 = vpop.xlane.xlu0 %1616
        %v1618 = vsel %vm1171, %v1602, 0.0
        %1619 = vadd.xlane.f32.xlu0 %v1618
        %v1620 = vpop.xlane.xlu0 %1619
        %v1621 = vsel %vm1171, %v1604, 0.0
        %1622 = vadd.xlane.f32.xlu0 %v1621
        %v1623 = vpop.xlane.xlu0 %1622
        %v1624 = vsel %vm1171, %v1606, 0.0
        %1625 = vadd.xlane.f32.xlu0 %v1624
        %v1626 = vpop.xlane.xlu0 %1625
        %v1627 = vsel %vm1171, %v1608, 0.0
        %1628 = vadd.xlane.f32.xlu0 %v1627
        %v1629 = vpop.xlane.xlu0 %1628
        %v1630 = vsel %vm1171, %v1610, 0.0
        %1631 = vadd.xlane.f32.xlu0 %v1630
        %v1632 = vpop.xlane.xlu0 %1631
        %v1633 = vsel %vm1171, %v1612, 0.0
        %1634 = vadd.xlane.f32.xlu0 %v1633
        %v1635 = vpop.xlane.xlu0 %1634
        %v1636 = vsel %vm1171, %v1614, 0.0
        %1637 = vadd.xlane.f32.xlu0 %v1636
        %v1638 = vpop.xlane.xlu0 %1637
        %v1639 = vrcp.pop %v1617
        %v1640 = vrcp.pop %v1620
        %v1641 = vrcp.pop %v1623
        %v1642 = vrcp.pop %v1626
        %v1643 = vrcp.pop %v1629
        %v1644 = vrcp.pop %v1632
        %v1645 = vrcp.pop %v1635
        %v1646 = vrcp.pop %v1638
        %v1647 = vmul.f32 %v1600, %v1639
        %v1648 = vmul.f32 %v1602, %v1640
        %v1649 = vmul.f32 %v1604, %v1641
        %v1650 = vmul.f32 %v1606, %v1642
        %v1651 = vmul.f32 %v1608, %v1643
        %v1652 = vmul.f32 %v1610, %v1644
        %v1653 = vmul.f32 %v1612, %v1645
        %v1654 = vmul.f32 %v1614, %v1646
        %1663 = vrot.lane.b32.xlu0 %v955, 96
        %v1664 = vpop.permute.xlu0 %1663
        %1665 = vrot.lane.b32.xlu0 %v961, 96
        %v1666 = vpop.permute.xlu0 %1665
        %1667 = vrot.lane.b32.xlu0 %v967, 96
        %v1668 = vpop.permute.xlu0 %1667
        %1669 = vrot.lane.b32.xlu0 %v973, 96
        %v1670 = vpop.permute.xlu0 %1669
        %1671 = vrot.lane.b32.xlu0 %v979, 96
        %v1672 = vpop.permute.xlu0 %1671
        %1673 = vrot.lane.b32.xlu0 %v985, 96
        %v1674 = vpop.permute.xlu0 %1673
        %1675 = vrot.lane.b32.xlu0 %v991, 96
        %v1676 = vpop.permute.xlu0 %1675
        %1677 = vrot.lane.b32.xlu0 %v997, 96
        %v1678 = vpop.permute.xlu0 %1677
        %v1688 = vsel %vm1171, %v1647, 0
        %v1691 = vsel %vm1171, %v1648, 0
        %v1694 = vsel %vm1171, %v1649, 0
        %v1697 = vsel %vm1171, %v1650, 0
        %v1700 = vsel %vm1171, %v1651, 0
        %v1703 = vsel %vm1171, %v1652, 0
        %v1706 = vsel %vm1171, %v1653, 0
        %v1709 = vsel %vm1171, %v1654, 0
        %1711 = vmatprep.subr.mxu0 0.0
        %1712 = vmatpush1.msra.mxu0 %v1664
        %1713 = vmatprep.subr.mxu0 0.0
        %1714 = vmatpush1.msra.mxu0 %v1666
        %1715 = vmatprep.subr.mxu0 0.0
        %1716 = vmatpush1.msra.mxu0 %v1668
        %1717 = vmatprep.subr.mxu0 0.0
        %1718 = vmatpush1.msra.mxu0 %v1670
        %1719 = vmatprep.subr.mxu0 0.0
        %1720 = vmatpush1.msra.mxu0 %v1672
        %1721 = vmatprep.subr.mxu0 0.0
        %1722 = vmatpush1.msra.mxu0 %v1674
        %1723 = vmatprep.subr.mxu0 0.0
        %1724 = vmatpush1.msra.mxu0 %v1676
        %1725 = vmatprep.subr.mxu0 0.0
        %1726 = vmatpush1.msra.mxu0 %v1678
        %1727 = vmatprep.subr.mxu0 0.0
        %1728 = vmatpush1.msra.mxu0 0.0
        %1729 = vmatprep.subr.mxu0 0.0
        %1730 = vmatpush1.msra.mxu0 0.0
        %1731 = vmatprep.subr.mxu0 0.0
        %1732 = vmatpush1.msra.mxu0 0.0
        %1733 = vmatprep.subr.mxu0 0.0
        %1734 = vmatpush1.msra.mxu0 0.0
        %1735 = vmatprep.subr.mxu0 0.0
        %1736 = vmatpush1.msra.mxu0 0.0
        %1737 = vmatprep.subr.mxu0 0.0
        %1738 = vmatpush1.msra.mxu0 0.0
        %1739 = vmatprep.subr.mxu0 0.0
        %1740 = vmatpush1.msra.mxu0 0.0
        %1741 = vmatprep.subr.mxu0 0.0
        %1742 = vmatpush1.msra.mxu0 0.0
        %1743 = vmatprep.subr.mxu0 0.0
        %1744 = vmatpush1.msra.mxu0 0.0
        %1745 = vmatprep.subr.mxu0 0.0
        %1746 = vmatpush1.msra.mxu0 0.0
        %1747 = vmatprep.subr.mxu0 0.0
        %1748 = vmatpush1.msra.mxu0 0.0
        %1749 = vmatprep.subr.mxu0 0.0
        %1750 = vmatpush1.msra.mxu0 0.0
        %1751 = vmatprep.subr.mxu0 0.0
        %1752 = vmatpush1.msra.mxu0 0.0
        %1753 = vmatprep.subr.mxu0 0.0
        %1754 = vmatpush1.msra.mxu0 0.0
        %1755 = vmatprep.subr.mxu0 0.0
        %1756 = vmatpush1.msra.mxu0 0.0
        %1757 = vmatprep.subr.mxu0 0.0
        %1758 = vmatpush1.msra.mxu0 0.0
        %1759 = vmatprep.subr.mxu0 0.0
        %1760 = vmatpush1.msra.mxu0 0.0
        %1761 = vmatprep.subr.mxu0 0.0
        %1762 = vmatpush1.msra.mxu0 0.0
        %1763 = vmatprep.subr.mxu0 0.0
        %1764 = vmatpush1.msra.mxu0 0.0
        %1765 = vmatprep.subr.mxu0 0.0
        %1766 = vmatpush1.msra.mxu0 0.0
        %1767 = vmatprep.subr.mxu0 0.0
        %1768 = vmatpush1.msra.mxu0 0.0
        %1769 = vmatprep.subr.mxu0 0.0
        %1770 = vmatpush1.msra.mxu0 0.0
        %1771 = vmatprep.subr.mxu0 0.0
        %1772 = vmatpush1.msra.mxu0 0.0
        %1773 = vmatprep.subr.mxu0 0.0
        %1774 = vmatpush1.msra.mxu0 0.0
        %1775 = vmatprep.mubr.f32.mxu0 0.0
        %1776 = vmatmul.mubr.f32.gmra.mrb[0].mxu0 %v1688
        %v1777 = vpop.f32.mrb[0].mxu0
        %v1778 = vadd.f32 0.0, %v1777
        %v1779 = vpop.f32.mrb[0].mxu0
        %1780 = vmatprep.mubr.f32.mxu0 0.0
        %1781 = vmatmul.mubr.f32.gmra.mrb[0].mxu0 %v1691
        %v1782 = vpop.f32.mrb[0].mxu0
        %v1783 = vadd.f32 0.0, %v1782
        %v1784 = vpop.f32.mrb[0].mxu0
        %1785 = vmatprep.mubr.f32.mxu0 0.0
        %1786 = vmatmul.mubr.f32.gmra.mrb[0].mxu0 %v1694
        %v1787 = vpop.f32.mrb[0].mxu0
        %v1788 = vadd.f32 0.0, %v1787
        %v1789 = vpop.f32.mrb[0].mxu0
        %1790 = vmatprep.mubr.f32.mxu0 0.0
        %1791 = vmatmul.mubr.f32.gmra.mrb[0].mxu0 %v1697
        %v1792 = vpop.f32.mrb[0].mxu0
        %v1793 = vadd.f32 0.0, %v1792
        %v1794 = vpop.f32.mrb[0].mxu0
        %1795 = vmatprep.mubr.f32.mxu0 0.0
        %1796 = vmatmul.mubr.f32.gmra.mrb[0].mxu0 %v1700
        %v1797 = vpop.f32.mrb[0].mxu0
        %v1798 = vadd.f32 0.0, %v1797
        %v1799 = vpop.f32.mrb[0].mxu0
        %1800 = vmatprep.mubr.f32.mxu0 0.0
        %1801 = vmatmul.mubr.f32.gmra.mrb[0].mxu0 %v1703
        %v1802 = vpop.f32.mrb[0].mxu0
        %v1803 = vadd.f32 0.0, %v1802
        %v1804 = vpop.f32.mrb[0].mxu0
        %1805 = vmatprep.mubr.f32.mxu0 0.0
        %1806 = vmatmul.mubr.f32.gmra.mrb[0].mxu0 %v1706
        %v1807 = vpop.f32.mrb[0].mxu0
        %v1808 = vadd.f32 0.0, %v1807
        %v1809 = vpop.f32.mrb[0].mxu0
        %1810 = vmatprep.mubr.f32.mxu0 0.0
        %1811 = vmatmul.mubr.f32.gmra.mrb[0].mxu0 %v1709
        %v1812 = vpop.f32.mrb[0].mxu0
        %v1813 = vadd.f32 0.0, %v1812
        %v1814 = vpop.f32.mrb[0].mxu0
        %1815 = vdwg.mxu0
        %s1816 = scalar_lea.vmem %s4, 128
        %v1817 = vld [vmem:[%s1816] sm:$0xff]
        %v1818 = vld [vmem:[%s1816 + $0x8] sm:$0xff]
        %v1819 = vld [vmem:[%s1816 + $0x10] sm:$0xff]
        %v1820 = vld [vmem:[%s1816 + $0x18] sm:$0xff]
        %v1821 = vld [vmem:[%s1816 + $0x20] sm:$0xff]
        %v1822 = vld [vmem:[%s1816 + $0x28] sm:$0xff]
        %v1823 = vld [vmem:[%s1816 + $0x30] sm:$0xff]
        %v1824 = vld [vmem:[%s1816 + $0x38] sm:$0xff]
        %1825 = vrot.lane.b32.xlu0 %v1001, 64
        %v1826 = vpop.permute.xlu0 %1825
        %1827 = vrot.lane.b32.xlu0 %v1002, 64
        %v1828 = vpop.permute.xlu0 %1827
        %1829 = vrot.lane.b32.xlu0 %v1003, 64
        %v1830 = vpop.permute.xlu0 %1829
        %1831 = vrot.lane.b32.xlu0 %v1004, 64
        %v1832 = vpop.permute.xlu0 %1831
        %1833 = vrot.lane.b32.xlu0 %v1005, 64
        %v1834 = vpop.permute.xlu0 %1833
        %1835 = vrot.lane.b32.xlu0 %v1006, 64
        %v1836 = vpop.permute.xlu0 %1835
        %1837 = vrot.lane.b32.xlu0 %v1007, 64
        %v1838 = vpop.permute.xlu0 %1837
        %1839 = vrot.lane.b32.xlu0 %v1008, 64
        %v1840 = vpop.permute.xlu0 %1839
        %1841 = vrot.lane.b32.xlu0 %v842, 64
        %v1842 = vpop.permute.xlu0 %1841
        %1843 = vrot.lane.b32.xlu0 %v848, 64
        %v1844 = vpop.permute.xlu0 %1843
        %1845 = vrot.lane.b32.xlu0 %v854, 64
        %v1846 = vpop.permute.xlu0 %1845
        %1847 = vrot.lane.b32.xlu0 %v860, 64
        %v1848 = vpop.permute.xlu0 %1847
        %1849 = vrot.lane.b32.xlu0 %v866, 64
        %v1850 = vpop.permute.xlu0 %1849
        %1851 = vrot.lane.b32.xlu0 %v872, 64
        %v1852 = vpop.permute.xlu0 %1851
        %1853 = vrot.lane.b32.xlu0 %v878, 64
        %v1854 = vpop.permute.xlu0 %1853
        %1855 = vrot.lane.b32.xlu0 %v884, 64
        %v1856 = vpop.permute.xlu0 %1855
        %v1857 = vsel %vm1017, %v1826, 0
        %v1859 = vsel %vm1017, %v1828, 0
        %v1861 = vsel %vm1017, %v1830, 0
        %v1863 = vsel %vm1017, %v1832, 0
        %v1865 = vsel %vm1017, %v1834, 0
        %v1867 = vsel %vm1017, %v1836, 0
        %v1869 = vsel %vm1017, %v1838, 0
        %v1871 = vsel %vm1017, %v1840, 0
        %v1873 = vsel %vm1017, %v1842, 0
        %v1875 = vsel %vm1017, %v1844, 0
        %v1877 = vsel %vm1017, %v1846, 0
        %v1879 = vsel %vm1017, %v1848, 0
        %v1881 = vsel %vm1017, %v1850, 0
        %v1883 = vsel %vm1017, %v1852, 0
        %v1885 = vsel %vm1017, %v1854, 0
        %v1887 = vsel %vm1017, %v1856, 0
        %1889 = vmatprep.subr.mxu0 0.0
        %1890 = vmatpush1.xpose.msra.mxu0 %v1873
        %1891 = vmatprep.subr.mxu0 0.0
        %1892 = vmatpush1.xpose.msra.mxu0 %v1875
        %1893 = vmatprep.subr.mxu0 0.0
        %1894 = vmatpush1.xpose.msra.mxu0 %v1877
        %1895 = vmatprep.subr.mxu0 0.0
        %1896 = vmatpush1.xpose.msra.mxu0 %v1879
        %1897 = vmatprep.subr.mxu0 0.0
        %1898 = vmatpush1.xpose.msra.mxu0 %v1881
        %1899 = vmatprep.subr.mxu0 0.0
        %1900 = vmatpush1.xpose.msra.mxu0 %v1883
        %1901 = vmatprep.subr.mxu0 0.0
        %1902 = vmatpush1.xpose.msra.mxu0 %v1885
        %1903 = vmatprep.subr.mxu0 0.0
        %1904 = vmatpush1.xpose.msra.mxu0 %v1887
        %1905 = vmatprep.subr.mxu0 0.0
        %1906 = vmatpush1.xpose.msra.mxu0 0.0
        %1907 = vmatprep.subr.mxu0 0.0
        %1908 = vmatpush1.xpose.msra.mxu0 0.0
        %1909 = vmatprep.subr.mxu0 0.0
        %1910 = vmatpush1.xpose.msra.mxu0 0.0
        %1911 = vmatprep.subr.mxu0 0.0
        %1912 = vmatpush1.xpose.msra.mxu0 0.0
        %1913 = vmatprep.subr.mxu0 0.0
        %1914 = vmatpush1.xpose.msra.mxu0 0.0
        %1915 = vmatprep.subr.mxu0 0.0
        %1916 = vmatpush1.xpose.msra.mxu0 0.0
        %1917 = vmatprep.subr.mxu0 0.0
        %1918 = vmatpush1.xpose.msra.mxu0 0.0
        %1919 = vmatprep.subr.mxu0 0.0
        %1920 = vmatpush1.xpose.msra.mxu0 0.0
        %1921 = vmatprep.subr.mxu0 0.0
        %1922 = vmatpush1.xpose.msra.mxu0 0.0
        %1923 = vmatprep.subr.mxu0 0.0
        %1924 = vmatpush1.xpose.msra.mxu0 0.0
        %1925 = vmatprep.subr.mxu0 0.0
        %1926 = vmatpush1.xpose.msra.mxu0 0.0
        %1927 = vmatprep.subr.mxu0 0.0
        %1928 = vmatpush1.xpose.msra.mxu0 0.0
        %1929 = vmatprep.subr.mxu0 0.0
        %1930 = vmatpush1.xpose.msra.mxu0 0.0
        %1931 = vmatprep.subr.mxu0 0.0
        %1932 = vmatpush1.xpose.msra.mxu0 0.0
        %1933 = vmatprep.subr.mxu0 0.0
        %1934 = vmatpush1.xpose.msra.mxu0 0.0
        %1935 = vmatprep.subr.mxu0 0.0
        %1936 = vmatpush1.xpose.msra.mxu0 0.0
        %1937 = vmatprep.subr.mxu0 0.0
        %1938 = vmatpush1.xpose.msra.mxu0 0.0
        %1939 = vmatprep.subr.mxu0 0.0
        %1940 = vmatpush1.xpose.msra.mxu0 0.0
        %1941 = vmatprep.subr.mxu0 0.0
        %1942 = vmatpush1.xpose.msra.mxu0 0.0
        %1943 = vmatprep.subr.mxu0 0.0
        %1944 = vmatpush1.xpose.msra.mxu0 0.0
        %1945 = vmatprep.subr.mxu0 0.0
        %1946 = vmatpush1.xpose.msra.mxu0 0.0
        %1947 = vmatprep.subr.mxu0 0.0
        %1948 = vmatpush1.xpose.msra.mxu0 0.0
        %1949 = vmatprep.subr.mxu0 0.0
        %1950 = vmatpush1.xpose.msra.mxu0 0.0
        %1951 = vmatprep.subr.mxu0 0.0
        %1952 = vmatpush1.xpose.msra.mxu0 0.0
        %1953 = vmatprep.mubr.f32.mxu0 0.0
        %1954 = vmatmul.mubr.f32.gmra.mrb[0].mxu0 %v1857
        %v1955 = vpop.f32.mrb[0].mxu0
        %v1956 = vadd.f32 %v1817, %v1955
        %v1957 = vpop.f32.mrb[0].mxu0
        %1958 = vmatprep.mubr.f32.mxu0 0.0
        %1959 = vmatmul.mubr.f32.gmra.mrb[0].mxu0 %v1859
        %v1960 = vpop.f32.mrb[0].mxu0
        %v1961 = vadd.f32 %v1818, %v1960
        %v1962 = vpop.f32.mrb[0].mxu0
        %1963 = vmatprep.mubr.f32.mxu0 0.0
        %1964 = vmatmul.mubr.f32.gmra.mrb[0].mxu0 %v1861
        %v1965 = vpop.f32.mrb[0].mxu0
        %v1966 = vadd.f32 %v1819, %v1965
        %v1967 = vpop.f32.mrb[0].mxu0
        %1968 = vmatprep.mubr.f32.mxu0 0.0
        %1969 = vmatmul.mubr.f32.gmra.mrb[0].mxu0 %v1863
        %v1970 = vpop.f32.mrb[0].mxu0
        %v1971 = vadd.f32 %v1820, %v1970
        %v1972 = vpop.f32.mrb[0].mxu0
        %1973 = vmatprep.mubr.f32.mxu0 0.0
        %1974 = vmatmul.mubr.f32.gmra.mrb[0].mxu0 %v1865
        %v1975 = vpop.f32.mrb[0].mxu0
        %v1976 = vadd.f32 %v1821, %v1975
        %v1977 = vpop.f32.mrb[0].mxu0
        %1978 = vmatprep.mubr.f32.mxu0 0.0
        %1979 = vmatmul.mubr.f32.gmra.mrb[0].mxu0 %v1867
        %v1980 = vpop.f32.mrb[0].mxu0
        %v1981 = vadd.f32 %v1822, %v1980
        %v1982 = vpop.f32.mrb[0].mxu0
        %1983 = vmatprep.mubr.f32.mxu0 0.0
        %1984 = vmatmul.mubr.f32.gmra.mrb[0].mxu0 %v1869
        %v1985 = vpop.f32.mrb[0].mxu0
        %v1986 = vadd.f32 %v1823, %v1985
        %v1987 = vpop.f32.mrb[0].mxu0
        %1988 = vmatprep.mubr.f32.mxu0 0.0
        %1989 = vmatmul.mubr.f32.gmra.mrb[0].mxu0 %v1871
        %v1990 = vpop.f32.mrb[0].mxu0
        %v1991 = vadd.f32 %v1824, %v1990
        %v1992 = vpop.f32.mrb[0].mxu0
        %1993 = vdwg.mxu0
        %v1994 = vsel %vm1171, %v1956, -inf
        %1995 = vmax.xlane.f32.xlu0 %v1994
        %v1996 = vpop.xlane.xlu0 %1995
        %v1997 = vsel %vm1171, %v1961, -inf
        %1998 = vmax.xlane.f32.xlu0 %v1997
        %v1999 = vpop.xlane.xlu0 %1998
        %v2000 = vsel %vm1171, %v1966, -inf
        %2001 = vmax.xlane.f32.xlu0 %v2000
        %v2002 = vpop.xlane.xlu0 %2001
        %v2003 = vsel %vm1171, %v1971, -inf
        %2004 = vmax.xlane.f32.xlu0 %v2003
        %v2005 = vpop.xlane.xlu0 %2004
        %v2006 = vsel %vm1171, %v1976, -inf
        %2007 = vmax.xlane.f32.xlu0 %v2006
        %v2008 = vpop.xlane.xlu0 %2007
        %v2009 = vsel %vm1171, %v1981, -inf
        %2010 = vmax.xlane.f32.xlu0 %v2009
        %v2011 = vpop.xlane.xlu0 %2010
        %v2012 = vsel %vm1171, %v1986, -inf
        %2013 = vmax.xlane.f32.xlu0 %v2012
        %v2014 = vpop.xlane.xlu0 %2013
        %v2015 = vsel %vm1171, %v1991, -inf
        %2016 = vmax.xlane.f32.xlu0 %v2015
        %v2017 = vpop.xlane.xlu0 %2016
        %v2018 = vsub.f32 %v1956, %v1996
        %v2019 = vsub.f32 %v1961, %v1999
        %v2020 = vsub.f32 %v1966, %v2002
        %v2021 = vsub.f32 %v1971, %v2005
        %v2022 = vsub.f32 %v1976, %v2008
        %v2023 = vsub.f32 %v1981, %v2011
        %v2024 = vsub.f32 %v1986, %v2014
        %v2025 = vsub.f32 %v1991, %v2017
        %v2026 = vmul.f32 %v2018, 1.442695
        %v2027 = vpow.pop %v2026
        %v2028 = vmul.f32 %v2019, 1.442695
        %v2029 = vpow.pop %v2028
        %v2030 = vmul.f32 %v2020, 1.442695
        %v2031 = vpow.pop %v2030
        %v2032 = vmul.f32 %v2021, 1.442695
        %v2033 = vpow.pop %v2032
        %v2034 = vmul.f32 %v2022, 1.442695
        %v2035 = vpow.pop %v2034
        %v2036 = vmul.f32 %v2023, 1.442695
        %v2037 = vpow.pop %v2036
        %v2038 = vmul.f32 %v2024, 1.442695
        %v2039 = vpow.pop %v2038
        %v2040 = vmul.f32 %v2025, 1.442695
        %v2041 = vpow.pop %v2040
        %v2042 = vsel %vm1171, %v2027, 0.0
        %2043 = vadd.xlane.f32.xlu0 %v2042
        %v2044 = vpop.xlane.xlu0 %2043
        %v2045 = vsel %vm1171, %v2029, 0.0
        %2046 = vadd.xlane.f32.xlu0 %v2045
        %v2047 = vpop.xlane.xlu0 %2046
        %v2048 = vsel %vm1171, %v2031, 0.0
        %2049 = vadd.xlane.f32.xlu0 %v2048
        %v2050 = vpop.xlane.xlu0 %2049
        %v2051 = vsel %vm1171, %v2033, 0.0
        %2052 = vadd.xlane.f32.xlu0 %v2051
        %v2053 = vpop.xlane.xlu0 %2052
        %v2054 = vsel %vm1171, %v2035, 0.0
        %2055 = vadd.xlane.f32.xlu0 %v2054
        %v2056 = vpop.xlane.xlu0 %2055
        %v2057 = vsel %vm1171, %v2037, 0.0
        %2058 = vadd.xlane.f32.xlu0 %v2057
        %v2059 = vpop.xlane.xlu0 %2058
        %v2060 = vsel %vm1171, %v2039, 0.0
        %2061 = vadd.xlane.f32.xlu0 %v2060
        %v2062 = vpop.xlane.xlu0 %2061
        %v2063 = vsel %vm1171, %v2041, 0.0
        %2064 = vadd.xlane.f32.xlu0 %v2063
        %v2065 = vpop.xlane.xlu0 %2064
        %v2066 = vrcp.pop %v2044
        %v2067 = vrcp.pop %v2047
        %v2068 = vrcp.pop %v2050
        %v2069 = vrcp.pop %v2053
        %v2070 = vrcp.pop %v2056
        %v2071 = vrcp.pop %v2059
        %v2072 = vrcp.pop %v2062
        %v2073 = vrcp.pop %v2065
        %v2074 = vmul.f32 %v2027, %v2066
        %v2075 = vmul.f32 %v2029, %v2067
        %v2076 = vmul.f32 %v2031, %v2068
        %v2077 = vmul.f32 %v2033, %v2069
        %v2078 = vmul.f32 %v2035, %v2070
        %v2079 = vmul.f32 %v2037, %v2071
        %v2080 = vmul.f32 %v2039, %v2072
        %v2081 = vmul.f32 %v2041, %v2073
        %2082 = vrot.lane.b32.xlu0 %v955, 64
        %v2083 = vpop.permute.xlu0 %2082
        %2084 = vrot.lane.b32.xlu0 %v961, 64
        %v2085 = vpop.permute.xlu0 %2084
        %2086 = vrot.lane.b32.xlu0 %v967, 64
        %v2087 = vpop.permute.xlu0 %2086
        %2088 = vrot.lane.b32.xlu0 %v973, 64
        %v2089 = vpop.permute.xlu0 %2088
        %2090 = vrot.lane.b32.xlu0 %v979, 64
        %v2091 = vpop.permute.xlu0 %2090
        %2092 = vrot.lane.b32.xlu0 %v985, 64
        %v2093 = vpop.permute.xlu0 %2092
        %2094 = vrot.lane.b32.xlu0 %v991, 64
        %v2095 = vpop.permute.xlu0 %2094
        %2096 = vrot.lane.b32.xlu0 %v997, 64
        %v2097 = vpop.permute.xlu0 %2096
        %v2107 = vsel %vm1171, %v2074, 0
        %v2110 = vsel %vm1171, %v2075, 0
        %v2113 = vsel %vm1171, %v2076, 0
        %v2116 = vsel %vm1171, %v2077, 0
        %v2119 = vsel %vm1171, %v2078, 0
        %v2122 = vsel %vm1171, %v2079, 0
        %v2125 = vsel %vm1171, %v2080, 0
        %v2128 = vsel %vm1171, %v2081, 0
        %2130 = vmatprep.subr.mxu0 0.0
        %2131 = vmatpush1.msra.mxu0 %v2083
        %2132 = vmatprep.subr.mxu0 0.0
        %2133 = vmatpush1.msra.mxu0 %v2085
        %2134 = vmatprep.subr.mxu0 0.0
        %2135 = vmatpush1.msra.mxu0 %v2087
        %2136 = vmatprep.subr.mxu0 0.0
        %2137 = vmatpush1.msra.mxu0 %v2089
        %2138 = vmatprep.subr.mxu0 0.0
        %2139 = vmatpush1.msra.mxu0 %v2091
        %2140 = vmatprep.subr.mxu0 0.0
        %2141 = vmatpush1.msra.mxu0 %v2093
        %2142 = vmatprep.subr.mxu0 0.0
        %2143 = vmatpush1.msra.mxu0 %v2095
        %2144 = vmatprep.subr.mxu0 0.0
        %2145 = vmatpush1.msra.mxu0 %v2097
        %2146 = vmatprep.subr.mxu0 0.0
        %2147 = vmatpush1.msra.mxu0 0.0
        %2148 = vmatprep.subr.mxu0 0.0
        %2149 = vmatpush1.msra.mxu0 0.0
        %2150 = vmatprep.subr.mxu0 0.0
        %2151 = vmatpush1.msra.mxu0 0.0
        %2152 = vmatprep.subr.mxu0 0.0
        %2153 = vmatpush1.msra.mxu0 0.0
        %2154 = vmatprep.subr.mxu0 0.0
        %2155 = vmatpush1.msra.mxu0 0.0
        %2156 = vmatprep.subr.mxu0 0.0
        %2157 = vmatpush1.msra.mxu0 0.0
        %2158 = vmatprep.subr.mxu0 0.0
        %2159 = vmatpush1.msra.mxu0 0.0
        %2160 = vmatprep.subr.mxu0 0.0
        %2161 = vmatpush1.msra.mxu0 0.0
        %2162 = vmatprep.subr.mxu0 0.0
        %2163 = vmatpush1.msra.mxu0 0.0
        %2164 = vmatprep.subr.mxu0 0.0
        %2165 = vmatpush1.msra.mxu0 0.0
        %2166 = vmatprep.subr.mxu0 0.0
        %2167 = vmatpush1.msra.mxu0 0.0
        %2168 = vmatprep.subr.mxu0 0.0
        %2169 = vmatpush1.msra.mxu0 0.0
        %2170 = vmatprep.subr.mxu0 0.0
        %2171 = vmatpush1.msra.mxu0 0.0
        %2172 = vmatprep.subr.mxu0 0.0
        %2173 = vmatpush1.msra.mxu0 0.0
        %2174 = vmatprep.subr.mxu0 0.0
        %2175 = vmatpush1.msra.mxu0 0.0
        %2176 = vmatprep.subr.mxu0 0.0
        %2177 = vmatpush1.msra.mxu0 0.0
        %2178 = vmatprep.subr.mxu0 0.0
        %2179 = vmatpush1.msra.mxu0 0.0
        %2180 = vmatprep.subr.mxu0 0.0
        %2181 = vmatpush1.msra.mxu0 0.0
        %2182 = vmatprep.subr.mxu0 0.0
        %2183 = vmatpush1.msra.mxu0 0.0
        %2184 = vmatprep.subr.mxu0 0.0
        %2185 = vmatpush1.msra.mxu0 0.0
        %2186 = vmatprep.subr.mxu0 0.0
        %2187 = vmatpush1.msra.mxu0 0.0
        %2188 = vmatprep.subr.mxu0 0.0
        %2189 = vmatpush1.msra.mxu0 0.0
        %2190 = vmatprep.subr.mxu0 0.0
        %2191 = vmatpush1.msra.mxu0 0.0
        %2192 = vmatprep.subr.mxu0 0.0
        %2193 = vmatpush1.msra.mxu0 0.0
        %2194 = vmatprep.mubr.f32.mxu0 0.0
        %2195 = vmatmul.mubr.f32.gmra.mrb[0].mxu0 %v2107
        %v2196 = vpop.f32.mrb[0].mxu0
        %v2197 = vadd.f32 0.0, %v2196
        %v2198 = vpop.f32.mrb[0].mxu0
        %2199 = vmatprep.mubr.f32.mxu0 0.0
        %2200 = vmatmul.mubr.f32.gmra.mrb[0].mxu0 %v2110
        %v2201 = vpop.f32.mrb[0].mxu0
        %v2202 = vadd.f32 0.0, %v2201
        %v2203 = vpop.f32.mrb[0].mxu0
        %2204 = vmatprep.mubr.f32.mxu0 0.0
        %2205 = vmatmul.mubr.f32.gmra.mrb[0].mxu0 %v2113
        %v2206 = vpop.f32.mrb[0].mxu0
        %v2207 = vadd.f32 0.0, %v2206
        %v2208 = vpop.f32.mrb[0].mxu0
        %2209 = vmatprep.mubr.f32.mxu0 0.0
        %2210 = vmatmul.mubr.f32.gmra.mrb[0].mxu0 %v2116
        %v2211 = vpop.f32.mrb[0].mxu0
        %v2212 = vadd.f32 0.0, %v2211
        %v2213 = vpop.f32.mrb[0].mxu0
        %2214 = vmatprep.mubr.f32.mxu0 0.0
        %2215 = vmatmul.mubr.f32.gmra.mrb[0].mxu0 %v2119
        %v2216 = vpop.f32.mrb[0].mxu0
        %v2217 = vadd.f32 0.0, %v2216
        %v2218 = vpop.f32.mrb[0].mxu0
        %2219 = vmatprep.mubr.f32.mxu0 0.0
        %2220 = vmatmul.mubr.f32.gmra.mrb[0].mxu0 %v2122
        %v2221 = vpop.f32.mrb[0].mxu0
        %v2222 = vadd.f32 0.0, %v2221
        %v2223 = vpop.f32.mrb[0].mxu0
        %2224 = vmatprep.mubr.f32.mxu0 0.0
        %2225 = vmatmul.mubr.f32.gmra.mrb[0].mxu0 %v2125
        %v2226 = vpop.f32.mrb[0].mxu0
        %v2227 = vadd.f32 0.0, %v2226
        %v2228 = vpop.f32.mrb[0].mxu0
        %2229 = vmatprep.mubr.f32.mxu0 0.0
        %2230 = vmatmul.mubr.f32.gmra.mrb[0].mxu0 %v2128
        %v2231 = vpop.f32.mrb[0].mxu0
        %v2232 = vadd.f32 0.0, %v2231
        %v2233 = vpop.f32.mrb[0].mxu0
        %2234 = vdwg.mxu0
        %s2235 = scalar_lea.vmem %s4, 192
        %v2236 = vld [vmem:[%s2235] sm:$0xff]
        %v2237 = vld [vmem:[%s2235 + $0x8] sm:$0xff]
        %v2238 = vld [vmem:[%s2235 + $0x10] sm:$0xff]
        %v2239 = vld [vmem:[%s2235 + $0x18] sm:$0xff]
        %v2240 = vld [vmem:[%s2235 + $0x20] sm:$0xff]
        %v2241 = vld [vmem:[%s2235 + $0x28] sm:$0xff]
        %v2242 = vld [vmem:[%s2235 + $0x30] sm:$0xff]
        %v2243 = vld [vmem:[%s2235 + $0x38] sm:$0xff]
        %2244 = vrot.lane.b32.xlu0 %v1001, 32
        %v2245 = vpop.permute.xlu0 %2244
        %2246 = vrot.lane.b32.xlu0 %v1002, 32
        %v2247 = vpop.permute.xlu0 %2246
        %2248 = vrot.lane.b32.xlu0 %v1003, 32
        %v2249 = vpop.permute.xlu0 %2248
        %2250 = vrot.lane.b32.xlu0 %v1004, 32
        %v2251 = vpop.permute.xlu0 %2250
        %2252 = vrot.lane.b32.xlu0 %v1005, 32
        %v2253 = vpop.permute.xlu0 %2252
        %2254 = vrot.lane.b32.xlu0 %v1006, 32
        %v2255 = vpop.permute.xlu0 %2254
        %2256 = vrot.lane.b32.xlu0 %v1007, 32
        %v2257 = vpop.permute.xlu0 %2256
        %2258 = vrot.lane.b32.xlu0 %v1008, 32
        %v2259 = vpop.permute.xlu0 %2258
        %2260 = vrot.lane.b32.xlu0 %v842, 32
        %v2261 = vpop.permute.xlu0 %2260
        %2262 = vrot.lane.b32.xlu0 %v848, 32
        %v2263 = vpop.permute.xlu0 %2262
        %2264 = vrot.lane.b32.xlu0 %v854, 32
        %v2265 = vpop.permute.xlu0 %2264
        %2266 = vrot.lane.b32.xlu0 %v860, 32
        %v2267 = vpop.permute.xlu0 %2266
        %2268 = vrot.lane.b32.xlu0 %v866, 32
        %v2269 = vpop.permute.xlu0 %2268
        %2270 = vrot.lane.b32.xlu0 %v872, 32
        %v2271 = vpop.permute.xlu0 %2270
        %2272 = vrot.lane.b32.xlu0 %v878, 32
        %v2273 = vpop.permute.xlu0 %2272
        %2274 = vrot.lane.b32.xlu0 %v884, 32
        %v2275 = vpop.permute.xlu0 %2274
        %v2276 = vsel %vm1017, %v2245, 0
        %v2278 = vsel %vm1017, %v2247, 0
        %v2280 = vsel %vm1017, %v2249, 0
        %v2282 = vsel %vm1017, %v2251, 0
        %v2284 = vsel %vm1017, %v2253, 0
        %v2286 = vsel %vm1017, %v2255, 0
        %v2288 = vsel %vm1017, %v2257, 0
        %v2290 = vsel %vm1017, %v2259, 0
        %v2292 = vsel %vm1017, %v2261, 0
        %v2294 = vsel %vm1017, %v2263, 0
        %v2296 = vsel %vm1017, %v2265, 0
        %v2298 = vsel %vm1017, %v2267, 0
        %v2300 = vsel %vm1017, %v2269, 0
        %v2302 = vsel %vm1017, %v2271, 0
        %v2304 = vsel %vm1017, %v2273, 0
        %v2306 = vsel %vm1017, %v2275, 0
        %2308 = vmatprep.subr.mxu0 0.0
        %2309 = vmatpush1.xpose.msra.mxu0 %v2292
        %2310 = vmatprep.subr.mxu0 0.0
        %2311 = vmatpush1.xpose.msra.mxu0 %v2294
        %2312 = vmatprep.subr.mxu0 0.0
        %2313 = vmatpush1.xpose.msra.mxu0 %v2296
        %2314 = vmatprep.subr.mxu0 0.0
        %2315 = vmatpush1.xpose.msra.mxu0 %v2298
        %2316 = vmatprep.subr.mxu0 0.0
        %2317 = vmatpush1.xpose.msra.mxu0 %v2300
        %2318 = vmatprep.subr.mxu0 0.0
        %2319 = vmatpush1.xpose.msra.mxu0 %v2302
        %2320 = vmatprep.subr.mxu0 0.0
        %2321 = vmatpush1.xpose.msra.mxu0 %v2304
        %2322 = vmatprep.subr.mxu0 0.0
        %2323 = vmatpush1.xpose.msra.mxu0 %v2306
        %2324 = vmatprep.subr.mxu0 0.0
        %2325 = vmatpush1.xpose.msra.mxu0 0.0
        %2326 = vmatprep.subr.mxu0 0.0
        %2327 = vmatpush1.xpose.msra.mxu0 0.0
        %2328 = vmatprep.subr.mxu0 0.0
        %2329 = vmatpush1.xpose.msra.mxu0 0.0
        %2330 = vmatprep.subr.mxu0 0.0
        %2331 = vmatpush1.xpose.msra.mxu0 0.0
        %2332 = vmatprep.subr.mxu0 0.0
        %2333 = vmatpush1.xpose.msra.mxu0 0.0
        %2334 = vmatprep.subr.mxu0 0.0
        %2335 = vmatpush1.xpose.msra.mxu0 0.0
        %2336 = vmatprep.subr.mxu0 0.0
        %2337 = vmatpush1.xpose.msra.mxu0 0.0
        %2338 = vmatprep.subr.mxu0 0.0
        %2339 = vmatpush1.xpose.msra.mxu0 0.0
        %2340 = vmatprep.subr.mxu0 0.0
        %2341 = vmatpush1.xpose.msra.mxu0 0.0
        %2342 = vmatprep.subr.mxu0 0.0
        %2343 = vmatpush1.xpose.msra.mxu0 0.0
        %2344 = vmatprep.subr.mxu0 0.0
        %2345 = vmatpush1.xpose.msra.mxu0 0.0
        %2346 = vmatprep.subr.mxu0 0.0
        %2347 = vmatpush1.xpose.msra.mxu0 0.0
        %2348 = vmatprep.subr.mxu0 0.0
        %2349 = vmatpush1.xpose.msra.mxu0 0.0
        %2350 = vmatprep.subr.mxu0 0.0
        %2351 = vmatpush1.xpose.msra.mxu0 0.0
        %2352 = vmatprep.subr.mxu0 0.0
        %2353 = vmatpush1.xpose.msra.mxu0 0.0
        %2354 = vmatprep.subr.mxu0 0.0
        %2355 = vmatpush1.xpose.msra.mxu0 0.0
        %2356 = vmatprep.subr.mxu0 0.0
        %2357 = vmatpush1.xpose.msra.mxu0 0.0
        %2358 = vmatprep.subr.mxu0 0.0
        %2359 = vmatpush1.xpose.msra.mxu0 0.0
        %2360 = vmatprep.subr.mxu0 0.0
        %2361 = vmatpush1.xpose.msra.mxu0 0.0
        %2362 = vmatprep.subr.mxu0 0.0
        %2363 = vmatpush1.xpose.msra.mxu0 0.0
        %2364 = vmatprep.subr.mxu0 0.0
        %2365 = vmatpush1.xpose.msra.mxu0 0.0
        %2366 = vmatprep.subr.mxu0 0.0
        %2367 = vmatpush1.xpose.msra.mxu0 0.0
        %2368 = vmatprep.subr.mxu0 0.0
        %2369 = vmatpush1.xpose.msra.mxu0 0.0
        %2370 = vmatprep.subr.mxu0 0.0
        %2371 = vmatpush1.xpose.msra.mxu0 0.0
        %2372 = vmatprep.mubr.f32.mxu0 0.0
        %2373 = vmatmul.mubr.f32.gmra.mrb[0].mxu0 %v2276
        %v2374 = vpop.f32.mrb[0].mxu0
        %v2375 = vadd.f32 %v2236, %v2374
        %v2376 = vpop.f32.mrb[0].mxu0
        %2377 = vmatprep.mubr.f32.mxu0 0.0
        %2378 = vmatmul.mubr.f32.gmra.mrb[0].mxu0 %v2278
        %v2379 = vpop.f32.mrb[0].mxu0
        %v2380 = vadd.f32 %v2237, %v2379
        %v2381 = vpop.f32.mrb[0].mxu0
        %2382 = vmatprep.mubr.f32.mxu0 0.0
        %2383 = vmatmul.mubr.f32.gmra.mrb[0].mxu0 %v2280
        %v2384 = vpop.f32.mrb[0].mxu0
        %v2385 = vadd.f32 %v2238, %v2384
        %v2386 = vpop.f32.mrb[0].mxu0
        %2387 = vmatprep.mubr.f32.mxu0 0.0
        %2388 = vmatmul.mubr.f32.gmra.mrb[0].mxu0 %v2282
        %v2389 = vpop.f32.mrb[0].mxu0
        %v2390 = vadd.f32 %v2239, %v2389
        %v2391 = vpop.f32.mrb[0].mxu0
        %2392 = vmatprep.mubr.f32.mxu0 0.0
        %2393 = vmatmul.mubr.f32.gmra.mrb[0].mxu0 %v2284
        %v2394 = vpop.f32.mrb[0].mxu0
        %v2395 = vadd.f32 %v2240, %v2394
        %v2396 = vpop.f32.mrb[0].mxu0
        %2397 = vmatprep.mubr.f32.mxu0 0.0
        %2398 = vmatmul.mubr.f32.gmra.mrb[0].mxu0 %v2286
        %v2399 = vpop.f32.mrb[0].mxu0
        %v2400 = vadd.f32 %v2241, %v2399
        %v2401 = vpop.f32.mrb[0].mxu0
        %2402 = vmatprep.mubr.f32.mxu0 0.0
        %2403 = vmatmul.mubr.f32.gmra.mrb[0].mxu0 %v2288
        %v2404 = vpop.f32.mrb[0].mxu0
        %v2405 = vadd.f32 %v2242, %v2404
        %v2406 = vpop.f32.mrb[0].mxu0
        %2407 = vmatprep.mubr.f32.mxu0 0.0
        %2408 = vmatmul.mubr.f32.gmra.mrb[0].mxu0 %v2290
        %v2409 = vpop.f32.mrb[0].mxu0
        %v2410 = vadd.f32 %v2243, %v2409
        %v2411 = vpop.f32.mrb[0].mxu0
        %2412 = vdwg.mxu0
        %v2413 = vsel %vm1171, %v2375, -inf
        %2414 = vmax.xlane.f32.xlu0 %v2413
        %v2415 = vpop.xlane.xlu0 %2414
        %v2416 = vsel %vm1171, %v2380, -inf
        %2417 = vmax.xlane.f32.xlu0 %v2416
        %v2418 = vpop.xlane.xlu0 %2417
        %v2419 = vsel %vm1171, %v2385, -inf
        %2420 = vmax.xlane.f32.xlu0 %v2419
        %v2421 = vpop.xlane.xlu0 %2420
        %v2422 = vsel %vm1171, %v2390, -inf
        %2423 = vmax.xlane.f32.xlu0 %v2422
        %v2424 = vpop.xlane.xlu0 %2423
        %v2425 = vsel %vm1171, %v2395, -inf
        %2426 = vmax.xlane.f32.xlu0 %v2425
        %v2427 = vpop.xlane.xlu0 %2426
        %v2428 = vsel %vm1171, %v2400, -inf
        %2429 = vmax.xlane.f32.xlu0 %v2428
        %v2430 = vpop.xlane.xlu0 %2429
        %v2431 = vsel %vm1171, %v2405, -inf
        %2432 = vmax.xlane.f32.xlu0 %v2431
        %v2433 = vpop.xlane.xlu0 %2432
        %v2434 = vsel %vm1171, %v2410, -inf
        %2435 = vmax.xlane.f32.xlu0 %v2434
        %v2436 = vpop.xlane.xlu0 %2435
        %v2437 = vsub.f32 %v2375, %v2415
        %v2438 = vsub.f32 %v2380, %v2418
        %v2439 = vsub.f32 %v2385, %v2421
        %v2440 = vsub.f32 %v2390, %v2424
        %v2441 = vsub.f32 %v2395, %v2427
        %v2442 = vsub.f32 %v2400, %v2430
        %v2443 = vsub.f32 %v2405, %v2433
        %v2444 = vsub.f32 %v2410, %v2436
        %v2445 = vmul.f32 %v2437, 1.442695
        %v2446 = vpow.pop %v2445
        %v2447 = vmul.f32 %v2438, 1.442695
        %v2448 = vpow.pop %v2447
        %v2449 = vmul.f32 %v2439, 1.442695
        %v2450 = vpow.pop %v2449
        %v2451 = vmul.f32 %v2440, 1.442695
        %v2452 = vpow.pop %v2451
        %v2453 = vmul.f32 %v2441, 1.442695
        %v2454 = vpow.pop %v2453
        %v2455 = vmul.f32 %v2442, 1.442695
        %v2456 = vpow.pop %v2455
        %v2457 = vmul.f32 %v2443, 1.442695
        %v2458 = vpow.pop %v2457
        %v2459 = vmul.f32 %v2444, 1.442695
        %v2460 = vpow.pop %v2459
        %v2461 = vsel %vm1171, %v2446, 0.0
        %2462 = vadd.xlane.f32.xlu0 %v2461
        %v2463 = vpop.xlane.xlu0 %2462
        %v2464 = vsel %vm1171, %v2448, 0.0
        %2465 = vadd.xlane.f32.xlu0 %v2464
        %v2466 = vpop.xlane.xlu0 %2465
        %v2467 = vsel %vm1171, %v2450, 0.0
        %2468 = vadd.xlane.f32.xlu0 %v2467
        %v2469 = vpop.xlane.xlu0 %2468
        %v2470 = vsel %vm1171, %v2452, 0.0
        %2471 = vadd.xlane.f32.xlu0 %v2470
        %v2472 = vpop.xlane.xlu0 %2471
        %v2473 = vsel %vm1171, %v2454, 0.0
        %2474 = vadd.xlane.f32.xlu0 %v2473
        %v2475 = vpop.xlane.xlu0 %2474
        %v2476 = vsel %vm1171, %v2456, 0.0
        %2477 = vadd.xlane.f32.xlu0 %v2476
        %v2478 = vpop.xlane.xlu0 %2477
        %v2479 = vsel %vm1171, %v2458, 0.0
        %2480 = vadd.xlane.f32.xlu0 %v2479
        %v2481 = vpop.xlane.xlu0 %2480
        %v2482 = vsel %vm1171, %v2460, 0.0
        %2483 = vadd.xlane.f32.xlu0 %v2482
        %v2484 = vpop.xlane.xlu0 %2483
        %v2485 = vrcp.pop %v2463
        %v2486 = vrcp.pop %v2466
        %v2487 = vrcp.pop %v2469
        %v2488 = vrcp.pop %v2472
        %v2489 = vrcp.pop %v2475
        %v2490 = vrcp.pop %v2478
        %v2491 = vrcp.pop %v2481
        %v2492 = vrcp.pop %v2484
        %v2493 = vmul.f32 %v2446, %v2485
        %v2494 = vmul.f32 %v2448, %v2486
        %v2495 = vmul.f32 %v2450, %v2487
        %v2496 = vmul.f32 %v2452, %v2488
        %v2497 = vmul.f32 %v2454, %v2489
        %v2498 = vmul.f32 %v2456, %v2490
        %v2499 = vmul.f32 %v2458, %v2491
        %v2500 = vmul.f32 %v2460, %v2492
        %2501 = vrot.lane.b32.xlu0 %v955, 32
        %v2502 = vpop.permute.xlu0 %2501
        %2503 = vrot.lane.b32.xlu0 %v961, 32
        %v2504 = vpop.permute.xlu0 %2503
        %2505 = vrot.lane.b32.xlu0 %v967, 32
        %v2506 = vpop.permute.xlu0 %2505
        %2507 = vrot.lane.b32.xlu0 %v973, 32
        %v2508 = vpop.permute.xlu0 %2507
        %2509 = vrot.lane.b32.xlu0 %v979, 32
        %v2510 = vpop.permute.xlu0 %2509
        %2511 = vrot.lane.b32.xlu0 %v985, 32
        %v2512 = vpop.permute.xlu0 %2511
        %2513 = vrot.lane.b32.xlu0 %v991, 32
        %v2514 = vpop.permute.xlu0 %2513
        %2515 = vrot.lane.b32.xlu0 %v997, 32
        %v2516 = vpop.permute.xlu0 %2515
        %v2526 = vsel %vm1171, %v2493, 0
        %v2529 = vsel %vm1171, %v2494, 0
        %v2532 = vsel %vm1171, %v2495, 0
        %v2535 = vsel %vm1171, %v2496, 0
        %v2538 = vsel %vm1171, %v2497, 0
        %v2541 = vsel %vm1171, %v2498, 0
        %v2544 = vsel %vm1171, %v2499, 0
        %v2547 = vsel %vm1171, %v2500, 0
        %2549 = vmatprep.subr.mxu0 0.0
        %2550 = vmatpush1.msra.mxu0 %v2502
        %2551 = vmatprep.subr.mxu0 0.0
        %2552 = vmatpush1.msra.mxu0 %v2504
        %2553 = vmatprep.subr.mxu0 0.0
        %2554 = vmatpush1.msra.mxu0 %v2506
        %2555 = vmatprep.subr.mxu0 0.0
        %2556 = vmatpush1.msra.mxu0 %v2508
        %2557 = vmatprep.subr.mxu0 0.0
        %2558 = vmatpush1.msra.mxu0 %v2510
        %2559 = vmatprep.subr.mxu0 0.0
        %2560 = vmatpush1.msra.mxu0 %v2512
        %2561 = vmatprep.subr.mxu0 0.0
        %2562 = vmatpush1.msra.mxu0 %v2514
        %2563 = vmatprep.subr.mxu0 0.0
        %2564 = vmatpush1.msra.mxu0 %v2516
        %2565 = vmatprep.subr.mxu0 0.0
        %2566 = vmatpush1.msra.mxu0 0.0
        %2567 = vmatprep.subr.mxu0 0.0
        %2568 = vmatpush1.msra.mxu0 0.0
        %2569 = vmatprep.subr.mxu0 0.0
        %2570 = vmatpush1.msra.mxu0 0.0
        %2571 = vmatprep.subr.mxu0 0.0
        %2572 = vmatpush1.msra.mxu0 0.0
        %2573 = vmatprep.subr.mxu0 0.0
        %2574 = vmatpush1.msra.mxu0 0.0
        %2575 = vmatprep.subr.mxu0 0.0
        %2576 = vmatpush1.msra.mxu0 0.0
        %2577 = vmatprep.subr.mxu0 0.0
        %2578 = vmatpush1.msra.mxu0 0.0
        %2579 = vmatprep.subr.mxu0 0.0
        %2580 = vmatpush1.msra.mxu0 0.0
        %2581 = vmatprep.subr.mxu0 0.0
        %2582 = vmatpush1.msra.mxu0 0.0
        %2583 = vmatprep.subr.mxu0 0.0
        %2584 = vmatpush1.msra.mxu0 0.0
        %2585 = vmatprep.subr.mxu0 0.0
        %2586 = vmatpush1.msra.mxu0 0.0
        %2587 = vmatprep.subr.mxu0 0.0
        %2588 = vmatpush1.msra.mxu0 0.0
        %2589 = vmatprep.subr.mxu0 0.0
        %2590 = vmatpush1.msra.mxu0 0.0
        %2591 = vmatprep.subr.mxu0 0.0
        %2592 = vmatpush1.msra.mxu0 0.0
        %2593 = vmatprep.subr.mxu0 0.0
        %2594 = vmatpush1.msra.mxu0 0.0
        %2595 = vmatprep.subr.mxu0 0.0
        %2596 = vmatpush1.msra.mxu0 0.0
        %2597 = vmatprep.subr.mxu0 0.0
        %2598 = vmatpush1.msra.mxu0 0.0
        %2599 = vmatprep.subr.mxu0 0.0
        %2600 = vmatpush1.msra.mxu0 0.0
        %2601 = vmatprep.subr.mxu0 0.0
        %2602 = vmatpush1.msra.mxu0 0.0
        %2603 = vmatprep.subr.mxu0 0.0
        %2604 = vmatpush1.msra.mxu0 0.0
        %2605 = vmatprep.subr.mxu0 0.0
        %2606 = vmatpush1.msra.mxu0 0.0
        %2607 = vmatprep.subr.mxu0 0.0
        %2608 = vmatpush1.msra.mxu0 0.0
        %2609 = vmatprep.subr.mxu0 0.0
        %2610 = vmatpush1.msra.mxu0 0.0
        %2611 = vmatprep.subr.mxu0 0.0
        %2612 = vmatpush1.msra.mxu0 0.0
        %2613 = vmatprep.mubr.f32.mxu0 0.0
        %2614 = vmatmul.mubr.f32.gmra.mrb[0].mxu0 %v2526
        %v2615 = vpop.f32.mrb[0].mxu0
        %v2616 = vadd.f32 0.0, %v2615
        %v2617 = vpop.f32.mrb[0].mxu0
        %2618 = vmatprep.mubr.f32.mxu0 0.0
        %2619 = vmatmul.mubr.f32.gmra.mrb[0].mxu0 %v2529
        %v2620 = vpop.f32.mrb[0].mxu0
        %v2621 = vadd.f32 0.0, %v2620
        %v2622 = vpop.f32.mrb[0].mxu0
        %2623 = vmatprep.mubr.f32.mxu0 0.0
        %2624 = vmatmul.mubr.f32.gmra.mrb[0].mxu0 %v2532
        %v2625 = vpop.f32.mrb[0].mxu0
        %v2626 = vadd.f32 0.0, %v2625
        %v2627 = vpop.f32.mrb[0].mxu0
        %2628 = vmatprep.mubr.f32.mxu0 0.0
        %2629 = vmatmul.mubr.f32.gmra.mrb[0].mxu0 %v2535
        %v2630 = vpop.f32.mrb[0].mxu0
        %v2631 = vadd.f32 0.0, %v2630
        %v2632 = vpop.f32.mrb[0].mxu0
        %2633 = vmatprep.mubr.f32.mxu0 0.0
        %2634 = vmatmul.mubr.f32.gmra.mrb[0].mxu0 %v2538
        %v2635 = vpop.f32.mrb[0].mxu0
        %v2636 = vadd.f32 0.0, %v2635
        %v2637 = vpop.f32.mrb[0].mxu0
        %2638 = vmatprep.mubr.f32.mxu0 0.0
        %2639 = vmatmul.mubr.f32.gmra.mrb[0].mxu0 %v2541
        %v2640 = vpop.f32.mrb[0].mxu0
        %v2641 = vadd.f32 0.0, %v2640
        %v2642 = vpop.f32.mrb[0].mxu0
        %2643 = vmatprep.mubr.f32.mxu0 0.0
        %2644 = vmatmul.mubr.f32.gmra.mrb[0].mxu0 %v2544
        %v2645 = vpop.f32.mrb[0].mxu0
        %v2646 = vadd.f32 0.0, %v2645
        %v2647 = vpop.f32.mrb[0].mxu0
        %2648 = vmatprep.mubr.f32.mxu0 0.0
        %2649 = vmatmul.mubr.f32.gmra.mrb[0].mxu0 %v2547
        %v2650 = vpop.f32.mrb[0].mxu0
        %v2651 = vadd.f32 0.0, %v2650
        %v2652 = vpop.f32.mrb[0].mxu0
        %2653 = vdwg.mxu0
        %v2654 = vmul.f32 %v731, 0.17677669
        %v2655 = vmul.f32 %v737, 0.17677669
        %v2656 = vmul.f32 %v743, 0.17677669
        %v2657 = vmul.f32 %v749, 0.17677669
        %v2658 = vmul.f32 %v755, 0.17677669
        %v2659 = vmul.f32 %v761, 0.17677669
        %v2660 = vmul.f32 %v767, 0.17677669
        %v2661 = vmul.f32 %v773, 0.17677669
        %s2662 = scalar_lea.vmem %s4, 256
        %v2663 = vld [vmem:[%s2662] sm:$0xff]
        %v2664 = vld [vmem:[%s2662 + $0x8] sm:$0xff]
        %v2665 = vld [vmem:[%s2662 + $0x10] sm:$0xff]
        %v2666 = vld [vmem:[%s2662 + $0x18] sm:$0xff]
        %v2667 = vld [vmem:[%s2662 + $0x20] sm:$0xff]
        %v2668 = vld [vmem:[%s2662 + $0x28] sm:$0xff]
        %v2669 = vld [vmem:[%s2662 + $0x30] sm:$0xff]
        %v2670 = vld [vmem:[%s2662 + $0x38] sm:$0xff]
        %v2672 = vsel %vm1017, %v2654, 0
        %v2675 = vsel %vm1017, %v2655, 0
        %v2678 = vsel %vm1017, %v2656, 0
        %v2681 = vsel %vm1017, %v2657, 0
        %v2684 = vsel %vm1017, %v2658, 0
        %v2687 = vsel %vm1017, %v2659, 0
        %v2690 = vsel %vm1017, %v2660, 0
        %v2693 = vsel %vm1017, %v2661, 0
        %v2696 = vsel %vm1017, %v844, 0
        %v2699 = vsel %vm1017, %v850, 0
        %v2702 = vsel %vm1017, %v856, 0
        %v2705 = vsel %vm1017, %v862, 0
        %v2708 = vsel %vm1017, %v868, 0
        %v2711 = vsel %vm1017, %v874, 0
        %v2714 = vsel %vm1017, %v880, 0
        %v2717 = vsel %vm1017, %v886, 0
        %2719 = vmatprep.subr.mxu0 0.0
        %2720 = vmatpush1.xpose.msra.mxu0 %v2696
        %2721 = vmatprep.subr.mxu0 0.0
        %2722 = vmatpush1.xpose.msra.mxu0 %v2699
        %2723 = vmatprep.subr.mxu0 0.0
        %2724 = vmatpush1.xpose.msra.mxu0 %v2702
        %2725 = vmatprep.subr.mxu0 0.0
        %2726 = vmatpush1.xpose.msra.mxu0 %v2705
        %2727 = vmatprep.subr.mxu0 0.0
        %2728 = vmatpush1.xpose.msra.mxu0 %v2708
        %2729 = vmatprep.subr.mxu0 0.0
        %2730 = vmatpush1.xpose.msra.mxu0 %v2711
        %2731 = vmatprep.subr.mxu0 0.0
        %2732 = vmatpush1.xpose.msra.mxu0 %v2714
        %2733 = vmatprep.subr.mxu0 0.0
        %2734 = vmatpush1.xpose.msra.mxu0 %v2717
        %2735 = vmatprep.subr.mxu0 0.0
        %2736 = vmatpush1.xpose.msra.mxu0 0.0
        %2737 = vmatprep.subr.mxu0 0.0
        %2738 = vmatpush1.xpose.msra.mxu0 0.0
        %2739 = vmatprep.subr.mxu0 0.0
        %2740 = vmatpush1.xpose.msra.mxu0 0.0
        %2741 = vmatprep.subr.mxu0 0.0
        %2742 = vmatpush1.xpose.msra.mxu0 0.0
        %2743 = vmatprep.subr.mxu0 0.0
        %2744 = vmatpush1.xpose.msra.mxu0 0.0
        %2745 = vmatprep.subr.mxu0 0.0
        %2746 = vmatpush1.xpose.msra.mxu0 0.0
        %2747 = vmatprep.subr.mxu0 0.0
        %2748 = vmatpush1.xpose.msra.mxu0 0.0
        %2749 = vmatprep.subr.mxu0 0.0
        %2750 = vmatpush1.xpose.msra.mxu0 0.0
        %2751 = vmatprep.subr.mxu0 0.0
        %2752 = vmatpush1.xpose.msra.mxu0 0.0
        %2753 = vmatprep.subr.mxu0 0.0
        %2754 = vmatpush1.xpose.msra.mxu0 0.0
        %2755 = vmatprep.subr.mxu0 0.0
        %2756 = vmatpush1.xpose.msra.mxu0 0.0
        %2757 = vmatprep.subr.mxu0 0.0
        %2758 = vmatpush1.xpose.msra.mxu0 0.0
        %2759 = vmatprep.subr.mxu0 0.0
        %2760 = vmatpush1.xpose.msra.mxu0 0.0
        %2761 = vmatprep.subr.mxu0 0.0
        %2762 = vmatpush1.xpose.msra.mxu0 0.0
        %2763 = vmatprep.subr.mxu0 0.0
        %2764 = vmatpush1.xpose.msra.mxu0 0.0
        %2765 = vmatprep.subr.mxu0 0.0
        %2766 = vmatpush1.xpose.msra.mxu0 0.0
        %2767 = vmatprep.subr.mxu0 0.0
        %2768 = vmatpush1.xpose.msra.mxu0 0.0
        %2769 = vmatprep.subr.mxu0 0.0
        %2770 = vmatpush1.xpose.msra.mxu0 0.0
        %2771 = vmatprep.subr.mxu0 0.0
        %2772 = vmatpush1.xpose.msra.mxu0 0.0
        %2773 = vmatprep.subr.mxu0 0.0
        %2774 = vmatpush1.xpose.msra.mxu0 0.0
        %2775 = vmatprep.subr.mxu0 0.0
        %2776 = vmatpush1.xpose.msra.mxu0 0.0
        %2777 = vmatprep.subr.mxu0 0.0
        %2778 = vmatpush1.xpose.msra.mxu0 0.0
        %2779 = vmatprep.subr.mxu0 0.0
        %2780 = vmatpush1.xpose.msra.mxu0 0.0
        %2781 = vmatprep.subr.mxu0 0.0
        %2782 = vmatpush1.xpose.msra.mxu0 0.0
        %2783 = vmatprep.mubr.f32.mxu0 0.0
        %2784 = vmatmul.mubr.f32.gmra.mrb[0].mxu0 %v2672
        %v2785 = vpop.f32.mrb[0].mxu0
        %v2786 = vadd.f32 %v2663, %v2785
        %v2787 = vpop.f32.mrb[0].mxu0
        %2788 = vmatprep.mubr.f32.mxu0 0.0
        %2789 = vmatmul.mubr.f32.gmra.mrb[0].mxu0 %v2675
        %v2790 = vpop.f32.mrb[0].mxu0
        %v2791 = vadd.f32 %v2664, %v2790
        %v2792 = vpop.f32.mrb[0].mxu0
        %2793 = vmatprep.mubr.f32.mxu0 0.0
        %2794 = vmatmul.mubr.f32.gmra.mrb[0].mxu0 %v2678
        %v2795 = vpop.f32.mrb[0].mxu0
        %v2796 = vadd.f32 %v2665, %v2795
        %v2797 = vpop.f32.mrb[0].mxu0
        %2798 = vmatprep.mubr.f32.mxu0 0.0
        %2799 = vmatmul.mubr.f32.gmra.mrb[0].mxu0 %v2681
        %v2800 = vpop.f32.mrb[0].mxu0
        %v2801 = vadd.f32 %v2666, %v2800
        %v2802 = vpop.f32.mrb[0].mxu0
        %2803 = vmatprep.mubr.f32.mxu0 0.0
        %2804 = vmatmul.mubr.f32.gmra.mrb[0].mxu0 %v2684
        %v2805 = vpop.f32.mrb[0].mxu0
        %v2806 = vadd.f32 %v2667, %v2805
        %v2807 = vpop.f32.mrb[0].mxu0
        %2808 = vmatprep.mubr.f32.mxu0 0.0
        %2809 = vmatmul.mubr.f32.gmra.mrb[0].mxu0 %v2687
        %v2810 = vpop.f32.mrb[0].mxu0
        %v2811 = vadd.f32 %v2668, %v2810
        %v2812 = vpop.f32.mrb[0].mxu0
        %2813 = vmatprep.mubr.f32.mxu0 0.0
        %2814 = vmatmul.mubr.f32.gmra.mrb[0].mxu0 %v2690
        %v2815 = vpop.f32.mrb[0].mxu0
        %v2816 = vadd.f32 %v2669, %v2815
        %v2817 = vpop.f32.mrb[0].mxu0
        %2818 = vmatprep.mubr.f32.mxu0 0.0
        %2819 = vmatmul.mubr.f32.gmra.mrb[0].mxu0 %v2693
        %v2820 = vpop.f32.mrb[0].mxu0
        %v2821 = vadd.f32 %v2670, %v2820
        %v2822 = vpop.f32.mrb[0].mxu0
        %2823 = vdwg.mxu0
        %v2824 = vsel %vm1171, %v2786, -inf
        %2825 = vmax.xlane.f32.xlu0 %v2824
        %v2826 = vpop.xlane.xlu0 %2825
        %v2827 = vsel %vm1171, %v2791, -inf
        %2828 = vmax.xlane.f32.xlu0 %v2827
        %v2829 = vpop.xlane.xlu0 %2828
        %v2830 = vsel %vm1171, %v2796, -inf
        %2831 = vmax.xlane.f32.xlu0 %v2830
        %v2832 = vpop.xlane.xlu0 %2831
        %v2833 = vsel %vm1171, %v2801, -inf
        %2834 = vmax.xlane.f32.xlu0 %v2833
        %v2835 = vpop.xlane.xlu0 %2834
        %v2836 = vsel %vm1171, %v2806, -inf
        %2837 = vmax.xlane.f32.xlu0 %v2836
        %v2838 = vpop.xlane.xlu0 %2837
        %v2839 = vsel %vm1171, %v2811, -inf
        %2840 = vmax.xlane.f32.xlu0 %v2839
        %v2841 = vpop.xlane.xlu0 %2840
        %v2842 = vsel %vm1171, %v2816, -inf
        %2843 = vmax.xlane.f32.xlu0 %v2842
        %v2844 = vpop.xlane.xlu0 %2843
        %v2845 = vsel %vm1171, %v2821, -inf
        %2846 = vmax.xlane.f32.xlu0 %v2845
        %v2847 = vpop.xlane.xlu0 %2846
        %v2848 = vsub.f32 %v2786, %v2826
        %v2849 = vsub.f32 %v2791, %v2829
        %v2850 = vsub.f32 %v2796, %v2832
        %v2851 = vsub.f32 %v2801, %v2835
        %v2852 = vsub.f32 %v2806, %v2838
        %v2853 = vsub.f32 %v2811, %v2841
        %v2854 = vsub.f32 %v2816, %v2844
        %v2855 = vsub.f32 %v2821, %v2847
        %v2856 = vmul.f32 %v2848, 1.442695
        %v2857 = vpow.pop %v2856
        %v2858 = vmul.f32 %v2849, 1.442695
        %v2859 = vpow.pop %v2858
        %v2860 = vmul.f32 %v2850, 1.442695
        %v2861 = vpow.pop %v2860
        %v2862 = vmul.f32 %v2851, 1.442695
        %v2863 = vpow.pop %v2862
        %v2864 = vmul.f32 %v2852, 1.442695
        %v2865 = vpow.pop %v2864
        %v2866 = vmul.f32 %v2853, 1.442695
        %v2867 = vpow.pop %v2866
        %v2868 = vmul.f32 %v2854, 1.442695
        %v2869 = vpow.pop %v2868
        %v2870 = vmul.f32 %v2855, 1.442695
        %v2871 = vpow.pop %v2870
        %v2872 = vsel %vm1171, %v2857, 0.0
        %2873 = vadd.xlane.f32.xlu0 %v2872
        %v2874 = vpop.xlane.xlu0 %2873
        %v2875 = vsel %vm1171, %v2859, 0.0
        %2876 = vadd.xlane.f32.xlu0 %v2875
        %v2877 = vpop.xlane.xlu0 %2876
        %v2878 = vsel %vm1171, %v2861, 0.0
        %2879 = vadd.xlane.f32.xlu0 %v2878
        %v2880 = vpop.xlane.xlu0 %2879
        %v2881 = vsel %vm1171, %v2863, 0.0
        %2882 = vadd.xlane.f32.xlu0 %v2881
        %v2883 = vpop.xlane.xlu0 %2882
        %v2884 = vsel %vm1171, %v2865, 0.0
        %2885 = vadd.xlane.f32.xlu0 %v2884
        %v2886 = vpop.xlane.xlu0 %2885
        %v2887 = vsel %vm1171, %v2867, 0.0
        %2888 = vadd.xlane.f32.xlu0 %v2887
        %v2889 = vpop.xlane.xlu0 %2888
        %v2890 = vsel %vm1171, %v2869, 0.0
        %2891 = vadd.xlane.f32.xlu0 %v2890
        %v2892 = vpop.xlane.xlu0 %2891
        %v2893 = vsel %vm1171, %v2871, 0.0
        %2894 = vadd.xlane.f32.xlu0 %v2893
        %v2895 = vpop.xlane.xlu0 %2894
        %v2896 = vrcp.pop %v2874
        %v2897 = vrcp.pop %v2877
        %v2898 = vrcp.pop %v2880
        %v2899 = vrcp.pop %v2883
        %v2900 = vrcp.pop %v2886
        %v2901 = vrcp.pop %v2889
        %v2902 = vrcp.pop %v2892
        %v2903 = vrcp.pop %v2895
        %v2904 = vmul.f32 %v2857, %v2896
        %v2905 = vmul.f32 %v2859, %v2897
        %v2906 = vmul.f32 %v2861, %v2898
        %v2907 = vmul.f32 %v2863, %v2899
        %v2908 = vmul.f32 %v2865, %v2900
        %v2909 = vmul.f32 %v2867, %v2901
        %v2910 = vmul.f32 %v2869, %v2902
        %v2911 = vmul.f32 %v2871, %v2903
        %v2913 = vsel %vm1171, %v2904, 0
        %v2916 = vsel %vm1171, %v2905, 0
        %v2919 = vsel %vm1171, %v2906, 0
        %v2922 = vsel %vm1171, %v2907, 0
        %v2925 = vsel %vm1171, %v2908, 0
        %v2928 = vsel %vm1171, %v2909, 0
        %v2931 = vsel %vm1171, %v2910, 0
        %v2934 = vsel %vm1171, %v2911, 0
        %2936 = vmatprep.subr.mxu0 0.0
        %2937 = vmatpush1.msra.mxu0 %v957
        %2938 = vmatprep.subr.mxu0 0.0
        %2939 = vmatpush1.msra.mxu0 %v963
        %2940 = vmatprep.subr.mxu0 0.0
        %2941 = vmatpush1.msra.mxu0 %v969
        %2942 = vmatprep.subr.mxu0 0.0
        %2943 = vmatpush1.msra.mxu0 %v975
        %2944 = vmatprep.subr.mxu0 0.0
        %2945 = vmatpush1.msra.mxu0 %v981
        %2946 = vmatprep.subr.mxu0 0.0
        %2947 = vmatpush1.msra.mxu0 %v987
        %2948 = vmatprep.subr.mxu0 0.0
        %2949 = vmatpush1.msra.mxu0 %v993
        %2950 = vmatprep.subr.mxu0 0.0
        %2951 = vmatpush1.msra.mxu0 %v999
        %2952 = vmatprep.subr.mxu0 0.0
        %2953 = vmatpush1.msra.mxu0 0.0
        %2954 = vmatprep.subr.mxu0 0.0
        %2955 = vmatpush1.msra.mxu0 0.0
        %2956 = vmatprep.subr.mxu0 0.0
        %2957 = vmatpush1.msra.mxu0 0.0
        %2958 = vmatprep.subr.mxu0 0.0
        %2959 = vmatpush1.msra.mxu0 0.0
        %2960 = vmatprep.subr.mxu0 0.0
        %2961 = vmatpush1.msra.mxu0 0.0
        %2962 = vmatprep.subr.mxu0 0.0
        %2963 = vmatpush1.msra.mxu0 0.0
        %2964 = vmatprep.subr.mxu0 0.0
        %2965 = vmatpush1.msra.mxu0 0.0
        %2966 = vmatprep.subr.mxu0 0.0
        %2967 = vmatpush1.msra.mxu0 0.0
        %2968 = vmatprep.subr.mxu0 0.0
        %2969 = vmatpush1.msra.mxu0 0.0
        %2970 = vmatprep.subr.mxu0 0.0
        %2971 = vmatpush1.msra.mxu0 0.0
        %2972 = vmatprep.subr.mxu0 0.0
        %2973 = vmatpush1.msra.mxu0 0.0
        %2974 = vmatprep.subr.mxu0 0.0
        %2975 = vmatpush1.msra.mxu0 0.0
        %2976 = vmatprep.subr.mxu0 0.0
        %2977 = vmatpush1.msra.mxu0 0.0
        %2978 = vmatprep.subr.mxu0 0.0
        %2979 = vmatpush1.msra.mxu0 0.0
        %2980 = vmatprep.subr.mxu0 0.0
        %2981 = vmatpush1.msra.mxu0 0.0
        %2982 = vmatprep.subr.mxu0 0.0
        %2983 = vmatpush1.msra.mxu0 0.0
        %2984 = vmatprep.subr.mxu0 0.0
        %2985 = vmatpush1.msra.mxu0 0.0
        %2986 = vmatprep.subr.mxu0 0.0
        %2987 = vmatpush1.msra.mxu0 0.0
        %2988 = vmatprep.subr.mxu0 0.0
        %2989 = vmatpush1.msra.mxu0 0.0
        %2990 = vmatprep.subr.mxu0 0.0
        %2991 = vmatpush1.msra.mxu0 0.0
        %2992 = vmatprep.subr.mxu0 0.0
        %2993 = vmatpush1.msra.mxu0 0.0
        %2994 = vmatprep.subr.mxu0 0.0
        %2995 = vmatpush1.msra.mxu0 0.0
        %2996 = vmatprep.subr.mxu0 0.0
        %2997 = vmatpush1.msra.mxu0 0.0
        %2998 = vmatprep.subr.mxu0 0.0
        %2999 = vmatpush1.msra.mxu0 0.0
        %3000 = vmatprep.mubr.f32.mxu0 0.0
        %3001 = vmatmul.mubr.f32.gmra.mrb[0].mxu0 %v2913
        %v3002 = vpop.f32.mrb[0].mxu0
        %v3003 = vadd.f32 0.0, %v3002
        %v3004 = vpop.f32.mrb[0].mxu0
        %3005 = vmatprep.mubr.f32.mxu0 0.0
        %3006 = vmatmul.mubr.f32.gmra.mrb[0].mxu0 %v2916
        %v3007 = vpop.f32.mrb[0].mxu0
        %v3008 = vadd.f32 0.0, %v3007
        %v3009 = vpop.f32.mrb[0].mxu0
        %3010 = vmatprep.mubr.f32.mxu0 0.0
        %3011 = vmatmul.mubr.f32.gmra.mrb[0].mxu0 %v2919
        %v3012 = vpop.f32.mrb[0].mxu0
        %v3013 = vadd.f32 0.0, %v3012
        %v3014 = vpop.f32.mrb[0].mxu0
        %3015 = vmatprep.mubr.f32.mxu0 0.0
        %3016 = vmatmul.mubr.f32.gmra.mrb[0].mxu0 %v2922
        %v3017 = vpop.f32.mrb[0].mxu0
        %v3018 = vadd.f32 0.0, %v3017
        %v3019 = vpop.f32.mrb[0].mxu0
        %3020 = vmatprep.mubr.f32.mxu0 0.0
        %3021 = vmatmul.mubr.f32.gmra.mrb[0].mxu0 %v2925
        %v3022 = vpop.f32.mrb[0].mxu0
        %v3023 = vadd.f32 0.0, %v3022
        %v3024 = vpop.f32.mrb[0].mxu0
        %3025 = vmatprep.mubr.f32.mxu0 0.0
        %3026 = vmatmul.mubr.f32.gmra.mrb[0].mxu0 %v2928
        %v3027 = vpop.f32.mrb[0].mxu0
        %v3028 = vadd.f32 0.0, %v3027
        %v3029 = vpop.f32.mrb[0].mxu0
        %3030 = vmatprep.mubr.f32.mxu0 0.0
        %3031 = vmatmul.mubr.f32.gmra.mrb[0].mxu0 %v2931
        %v3032 = vpop.f32.mrb[0].mxu0
        %v3033 = vadd.f32 0.0, %v3032
        %v3034 = vpop.f32.mrb[0].mxu0
        %3035 = vmatprep.mubr.f32.mxu0 0.0
        %3036 = vmatmul.mubr.f32.gmra.mrb[0].mxu0 %v2934
        %v3037 = vpop.f32.mrb[0].mxu0
        %v3038 = vadd.f32 0.0, %v3037
        %v3039 = vpop.f32.mrb[0].mxu0
        %3040 = vdwg.mxu0
        %s3041 = scalar_lea.vmem %s4, 320
        %v3042 = vld [vmem:[%s3041] sm:$0xff]
        %v3043 = vld [vmem:[%s3041 + $0x8] sm:$0xff]
        %v3044 = vld [vmem:[%s3041 + $0x10] sm:$0xff]
        %v3045 = vld [vmem:[%s3041 + $0x18] sm:$0xff]
        %v3046 = vld [vmem:[%s3041 + $0x20] sm:$0xff]
        %v3047 = vld [vmem:[%s3041 + $0x28] sm:$0xff]
        %v3048 = vld [vmem:[%s3041 + $0x30] sm:$0xff]
        %v3049 = vld [vmem:[%s3041 + $0x38] sm:$0xff]
        %3050 = vrot.lane.b32.xlu0 %v2654, 96
        %v3051 = vpop.permute.xlu0 %3050
        %3052 = vrot.lane.b32.xlu0 %v2655, 96
        %v3053 = vpop.permute.xlu0 %3052
        %3054 = vrot.lane.b32.xlu0 %v2656, 96
        %v3055 = vpop.permute.xlu0 %3054
        %3056 = vrot.lane.b32.xlu0 %v2657, 96
        %v3057 = vpop.permute.xlu0 %3056
        %3058 = vrot.lane.b32.xlu0 %v2658, 96
        %v3059 = vpop.permute.xlu0 %3058
        %3060 = vrot.lane.b32.xlu0 %v2659, 96
        %v3061 = vpop.permute.xlu0 %3060
        %3062 = vrot.lane.b32.xlu0 %v2660, 96
        %v3063 = vpop.permute.xlu0 %3062
        %3064 = vrot.lane.b32.xlu0 %v2661, 96
        %v3065 = vpop.permute.xlu0 %3064
        %3066 = vrot.lane.b32.xlu0 %v844, 96
        %v3067 = vpop.permute.xlu0 %3066
        %3068 = vrot.lane.b32.xlu0 %v850, 96
        %v3069 = vpop.permute.xlu0 %3068
        %3070 = vrot.lane.b32.xlu0 %v856, 96
        %v3071 = vpop.permute.xlu0 %3070
        %3072 = vrot.lane.b32.xlu0 %v862, 96
        %v3073 = vpop.permute.xlu0 %3072
        %3074 = vrot.lane.b32.xlu0 %v868, 96
        %v3075 = vpop.permute.xlu0 %3074
        %3076 = vrot.lane.b32.xlu0 %v874, 96
        %v3077 = vpop.permute.xlu0 %3076
        %3078 = vrot.lane.b32.xlu0 %v880, 96
        %v3079 = vpop.permute.xlu0 %3078
        %3080 = vrot.lane.b32.xlu0 %v886, 96
        %v3081 = vpop.permute.xlu0 %3080
        %v3082 = vsel %vm1017, %v3051, 0
        %v3084 = vsel %vm1017, %v3053, 0
        %v3086 = vsel %vm1017, %v3055, 0
        %v3088 = vsel %vm1017, %v3057, 0
        %v3090 = vsel %vm1017, %v3059, 0
        %v3092 = vsel %vm1017, %v3061, 0
        %v3094 = vsel %vm1017, %v3063, 0
        %v3096 = vsel %vm1017, %v3065, 0
        %v3098 = vsel %vm1017, %v3067, 0
        %v3100 = vsel %vm1017, %v3069, 0
        %v3102 = vsel %vm1017, %v3071, 0
        %v3104 = vsel %vm1017, %v3073, 0
        %v3106 = vsel %vm1017, %v3075, 0
        %v3108 = vsel %vm1017, %v3077, 0
        %v3110 = vsel %vm1017, %v3079, 0
        %v3112 = vsel %vm1017, %v3081, 0
        %3114 = vmatprep.subr.mxu0 0.0
        %3115 = vmatpush1.xpose.msra.mxu0 %v3098
        %3116 = vmatprep.subr.mxu0 0.0
        %3117 = vmatpush1.xpose.msra.mxu0 %v3100
        %3118 = vmatprep.subr.mxu0 0.0
        %3119 = vmatpush1.xpose.msra.mxu0 %v3102
        %3120 = vmatprep.subr.mxu0 0.0
        %3121 = vmatpush1.xpose.msra.mxu0 %v3104
        %3122 = vmatprep.subr.mxu0 0.0
        %3123 = vmatpush1.xpose.msra.mxu0 %v3106
        %3124 = vmatprep.subr.mxu0 0.0
        %3125 = vmatpush1.xpose.msra.mxu0 %v3108
        %3126 = vmatprep.subr.mxu0 0.0
        %3127 = vmatpush1.xpose.msra.mxu0 %v3110
        %3128 = vmatprep.subr.mxu0 0.0
        %3129 = vmatpush1.xpose.msra.mxu0 %v3112
        %3130 = vmatprep.subr.mxu0 0.0
        %3131 = vmatpush1.xpose.msra.mxu0 0.0
        %3132 = vmatprep.subr.mxu0 0.0
        %3133 = vmatpush1.xpose.msra.mxu0 0.0
        %3134 = vmatprep.subr.mxu0 0.0
        %3135 = vmatpush1.xpose.msra.mxu0 0.0
        %3136 = vmatprep.subr.mxu0 0.0
        %3137 = vmatpush1.xpose.msra.mxu0 0.0
        %3138 = vmatprep.subr.mxu0 0.0
        %3139 = vmatpush1.xpose.msra.mxu0 0.0
        %3140 = vmatprep.subr.mxu0 0.0
        %3141 = vmatpush1.xpose.msra.mxu0 0.0
        %3142 = vmatprep.subr.mxu0 0.0
        %3143 = vmatpush1.xpose.msra.mxu0 0.0
        %3144 = vmatprep.subr.mxu0 0.0
        %3145 = vmatpush1.xpose.msra.mxu0 0.0
        %3146 = vmatprep.subr.mxu0 0.0
        %3147 = vmatpush1.xpose.msra.mxu0 0.0
        %3148 = vmatprep.subr.mxu0 0.0
        %3149 = vmatpush1.xpose.msra.mxu0 0.0
        %3150 = vmatprep.subr.mxu0 0.0
        %3151 = vmatpush1.xpose.msra.mxu0 0.0
        %3152 = vmatprep.subr.mxu0 0.0
        %3153 = vmatpush1.xpose.msra.mxu0 0.0
        %3154 = vmatprep.subr.mxu0 0.0
        %3155 = vmatpush1.xpose.msra.mxu0 0.0
        %3156 = vmatprep.subr.mxu0 0.0
        %3157 = vmatpush1.xpose.msra.mxu0 0.0
        %3158 = vmatprep.subr.mxu0 0.0
        %3159 = vmatpush1.xpose.msra.mxu0 0.0
        %3160 = vmatprep.subr.mxu0 0.0
        %3161 = vmatpush1.xpose.msra.mxu0 0.0
        %3162 = vmatprep.subr.mxu0 0.0
        %3163 = vmatpush1.xpose.msra.mxu0 0.0
        %3164 = vmatprep.subr.mxu0 0.0
        %3165 = vmatpush1.xpose.msra.mxu0 0.0
        %3166 = vmatprep.subr.mxu0 0.0
        %3167 = vmatpush1.xpose.msra.mxu0 0.0
        %3168 = vmatprep.subr.mxu0 0.0
        %3169 = vmatpush1.xpose.msra.mxu0 0.0
        %3170 = vmatprep.subr.mxu0 0.0
        %3171 = vmatpush1.xpose.msra.mxu0 0.0
        %3172 = vmatprep.subr.mxu0 0.0
        %3173 = vmatpush1.xpose.msra.mxu0 0.0
        %3174 = vmatprep.subr.mxu0 0.0
        %3175 = vmatpush1.xpose.msra.mxu0 0.0
        %3176 = vmatprep.subr.mxu0 0.0
        %3177 = vmatpush1.xpose.msra.mxu0 0.0
        %3178 = vmatprep.mubr.f32.mxu0 0.0
        %3179 = vmatmul.mubr.f32.gmra.mrb[0].mxu0 %v3082
        %v3180 = vpop.f32.mrb[0].mxu0
        %v3181 = vadd.f32 %v3042, %v3180
        %v3182 = vpop.f32.mrb[0].mxu0
        %3183 = vmatprep.mubr.f32.mxu0 0.0
        %3184 = vmatmul.mubr.f32.gmra.mrb[0].mxu0 %v3084
        %v3185 = vpop.f32.mrb[0].mxu0
        %v3186 = vadd.f32 %v3043, %v3185
        %v3187 = vpop.f32.mrb[0].mxu0
        %3188 = vmatprep.mubr.f32.mxu0 0.0
        %3189 = vmatmul.mubr.f32.gmra.mrb[0].mxu0 %v3086
        %v3190 = vpop.f32.mrb[0].mxu0
        %v3191 = vadd.f32 %v3044, %v3190
        %v3192 = vpop.f32.mrb[0].mxu0
        %3193 = vmatprep.mubr.f32.mxu0 0.0
        %3194 = vmatmul.mubr.f32.gmra.mrb[0].mxu0 %v3088
        %v3195 = vpop.f32.mrb[0].mxu0
        %v3196 = vadd.f32 %v3045, %v3195
        %v3197 = vpop.f32.mrb[0].mxu0
        %3198 = vmatprep.mubr.f32.mxu0 0.0
        %3199 = vmatmul.mubr.f32.gmra.mrb[0].mxu0 %v3090
        %v3200 = vpop.f32.mrb[0].mxu0
        %v3201 = vadd.f32 %v3046, %v3200
        %v3202 = vpop.f32.mrb[0].mxu0
        %3203 = vmatprep.mubr.f32.mxu0 0.0
        %3204 = vmatmul.mubr.f32.gmra.mrb[0].mxu0 %v3092
        %v3205 = vpop.f32.mrb[0].mxu0
        %v3206 = vadd.f32 %v3047, %v3205
        %v3207 = vpop.f32.mrb[0].mxu0
        %3208 = vmatprep.mubr.f32.mxu0 0.0
        %3209 = vmatmul.mubr.f32.gmra.mrb[0].mxu0 %v3094
        %v3210 = vpop.f32.mrb[0].mxu0
        %v3211 = vadd.f32 %v3048, %v3210
        %v3212 = vpop.f32.mrb[0].mxu0
        %3213 = vmatprep.mubr.f32.mxu0 0.0
        %3214 = vmatmul.mubr.f32.gmra.mrb[0].mxu0 %v3096
        %v3215 = vpop.f32.mrb[0].mxu0
        %v3216 = vadd.f32 %v3049, %v3215
        %v3217 = vpop.f32.mrb[0].mxu0
        %3218 = vdwg.mxu0
        %v3219 = vsel %vm1171, %v3181, -inf
        %3220 = vmax.xlane.f32.xlu0 %v3219
        %v3221 = vpop.xlane.xlu0 %3220
        %v3222 = vsel %vm1171, %v3186, -inf
        %3223 = vmax.xlane.f32.xlu0 %v3222
        %v3224 = vpop.xlane.xlu0 %3223
        %v3225 = vsel %vm1171, %v3191, -inf
        %3226 = vmax.xlane.f32.xlu0 %v3225
        %v3227 = vpop.xlane.xlu0 %3226
        %v3228 = vsel %vm1171, %v3196, -inf
        %3229 = vmax.xlane.f32.xlu0 %v3228
        %v3230 = vpop.xlane.xlu0 %3229
        %v3231 = vsel %vm1171, %v3201, -inf
        %3232 = vmax.xlane.f32.xlu0 %v3231
        %v3233 = vpop.xlane.xlu0 %3232
        %v3234 = vsel %vm1171, %v3206, -inf
        %3235 = vmax.xlane.f32.xlu0 %v3234
        %v3236 = vpop.xlane.xlu0 %3235
        %v3237 = vsel %vm1171, %v3211, -inf
        %3238 = vmax.xlane.f32.xlu0 %v3237
        %v3239 = vpop.xlane.xlu0 %3238
        %v3240 = vsel %vm1171, %v3216, -inf
        %3241 = vmax.xlane.f32.xlu0 %v3240
        %v3242 = vpop.xlane.xlu0 %3241
        %v3243 = vsub.f32 %v3181, %v3221
        %v3244 = vsub.f32 %v3186, %v3224
        %v3245 = vsub.f32 %v3191, %v3227
        %v3246 = vsub.f32 %v3196, %v3230
        %v3247 = vsub.f32 %v3201, %v3233
        %v3248 = vsub.f32 %v3206, %v3236
        %v3249 = vsub.f32 %v3211, %v3239
        %v3250 = vsub.f32 %v3216, %v3242
        %v3251 = vmul.f32 %v3243, 1.442695
        %v3252 = vpow.pop %v3251
        %v3253 = vmul.f32 %v3244, 1.442695
        %v3254 = vpow.pop %v3253
        %v3255 = vmul.f32 %v3245, 1.442695
        %v3256 = vpow.pop %v3255
        %v3257 = vmul.f32 %v3246, 1.442695
        %v3258 = vpow.pop %v3257
        %v3259 = vmul.f32 %v3247, 1.442695
        %v3260 = vpow.pop %v3259
        %v3261 = vmul.f32 %v3248, 1.442695
        %v3262 = vpow.pop %v3261
        %v3263 = vmul.f32 %v3249, 1.442695
        %v3264 = vpow.pop %v3263
        %v3265 = vmul.f32 %v3250, 1.442695
        %v3266 = vpow.pop %v3265
        %v3267 = vsel %vm1171, %v3252, 0.0
        %3268 = vadd.xlane.f32.xlu0 %v3267
        %v3269 = vpop.xlane.xlu0 %3268
        %v3270 = vsel %vm1171, %v3254, 0.0
        %3271 = vadd.xlane.f32.xlu0 %v3270
        %v3272 = vpop.xlane.xlu0 %3271
        %v3273 = vsel %vm1171, %v3256, 0.0
        %3274 = vadd.xlane.f32.xlu0 %v3273
        %v3275 = vpop.xlane.xlu0 %3274
        %v3276 = vsel %vm1171, %v3258, 0.0
        %3277 = vadd.xlane.f32.xlu0 %v3276
        %v3278 = vpop.xlane.xlu0 %3277
        %v3279 = vsel %vm1171, %v3260, 0.0
        %3280 = vadd.xlane.f32.xlu0 %v3279
        %v3281 = vpop.xlane.xlu0 %3280
        %v3282 = vsel %vm1171, %v3262, 0.0
        %3283 = vadd.xlane.f32.xlu0 %v3282
        %v3284 = vpop.xlane.xlu0 %3283
        %v3285 = vsel %vm1171, %v3264, 0.0
        %3286 = vadd.xlane.f32.xlu0 %v3285
        %v3287 = vpop.xlane.xlu0 %3286
        %v3288 = vsel %vm1171, %v3266, 0.0
        %3289 = vadd.xlane.f32.xlu0 %v3288
        %v3290 = vpop.xlane.xlu0 %3289
        %v3291 = vrcp.pop %v3269
        %v3292 = vrcp.pop %v3272
        %v3293 = vrcp.pop %v3275
        %v3294 = vrcp.pop %v3278
        %v3295 = vrcp.pop %v3281
        %v3296 = vrcp.pop %v3284
        %v3297 = vrcp.pop %v3287
        %v3298 = vrcp.pop %v3290
        %v3299 = vmul.f32 %v3252, %v3291
        %v3300 = vmul.f32 %v3254, %v3292
        %v3301 = vmul.f32 %v3256, %v3293
        %v3302 = vmul.f32 %v3258, %v3294
        %v3303 = vmul.f32 %v3260, %v3295
        %v3304 = vmul.f32 %v3262, %v3296
        %v3305 = vmul.f32 %v3264, %v3297
        %v3306 = vmul.f32 %v3266, %v3298
        %3315 = vrot.lane.b32.xlu0 %v957, 96
        %v3316 = vpop.permute.xlu0 %3315
        %3317 = vrot.lane.b32.xlu0 %v963, 96
        %v3318 = vpop.permute.xlu0 %3317
        %3319 = vrot.lane.b32.xlu0 %v969, 96
        %v3320 = vpop.permute.xlu0 %3319
        %3321 = vrot.lane.b32.xlu0 %v975, 96
        %v3322 = vpop.permute.xlu0 %3321
        %3323 = vrot.lane.b32.xlu0 %v981, 96
        %v3324 = vpop.permute.xlu0 %3323
        %3325 = vrot.lane.b32.xlu0 %v987, 96
        %v3326 = vpop.permute.xlu0 %3325
        %3327 = vrot.lane.b32.xlu0 %v993, 96
        %v3328 = vpop.permute.xlu0 %3327
        %3329 = vrot.lane.b32.xlu0 %v999, 96
        %v3330 = vpop.permute.xlu0 %3329
        %v3340 = vsel %vm1171, %v3299, 0
        %v3343 = vsel %vm1171, %v3300, 0
        %v3346 = vsel %vm1171, %v3301, 0
        %v3349 = vsel %vm1171, %v3302, 0
        %v3352 = vsel %vm1171, %v3303, 0
        %v3355 = vsel %vm1171, %v3304, 0
        %v3358 = vsel %vm1171, %v3305, 0
        %v3361 = vsel %vm1171, %v3306, 0
        %3363 = vmatprep.subr.mxu0 0.0
        %3364 = vmatpush1.msra.mxu0 %v3316
        %3365 = vmatprep.subr.mxu0 0.0
        %3366 = vmatpush1.msra.mxu0 %v3318
        %3367 = vmatprep.subr.mxu0 0.0
        %3368 = vmatpush1.msra.mxu0 %v3320
        %3369 = vmatprep.subr.mxu0 0.0
        %3370 = vmatpush1.msra.mxu0 %v3322
        %3371 = vmatprep.subr.mxu0 0.0
        %3372 = vmatpush1.msra.mxu0 %v3324
        %3373 = vmatprep.subr.mxu0 0.0
        %3374 = vmatpush1.msra.mxu0 %v3326
        %3375 = vmatprep.subr.mxu0 0.0
        %3376 = vmatpush1.msra.mxu0 %v3328
        %3377 = vmatprep.subr.mxu0 0.0
        %3378 = vmatpush1.msra.mxu0 %v3330
        %3379 = vmatprep.subr.mxu0 0.0
        %3380 = vmatpush1.msra.mxu0 0.0
        %3381 = vmatprep.subr.mxu0 0.0
        %3382 = vmatpush1.msra.mxu0 0.0
        %3383 = vmatprep.subr.mxu0 0.0
        %3384 = vmatpush1.msra.mxu0 0.0
        %3385 = vmatprep.subr.mxu0 0.0
        %3386 = vmatpush1.msra.mxu0 0.0
        %3387 = vmatprep.subr.mxu0 0.0
        %3388 = vmatpush1.msra.mxu0 0.0
        %3389 = vmatprep.subr.mxu0 0.0
        %3390 = vmatpush1.msra.mxu0 0.0
        %3391 = vmatprep.subr.mxu0 0.0
        %3392 = vmatpush1.msra.mxu0 0.0
        %3393 = vmatprep.subr.mxu0 0.0
        %3394 = vmatpush1.msra.mxu0 0.0
        %3395 = vmatprep.subr.mxu0 0.0
        %3396 = vmatpush1.msra.mxu0 0.0
        %3397 = vmatprep.subr.mxu0 0.0
        %3398 = vmatpush1.msra.mxu0 0.0
        %3399 = vmatprep.subr.mxu0 0.0
        %3400 = vmatpush1.msra.mxu0 0.0
        %3401 = vmatprep.subr.mxu0 0.0
        %3402 = vmatpush1.msra.mxu0 0.0
        %3403 = vmatprep.subr.mxu0 0.0
        %3404 = vmatpush1.msra.mxu0 0.0
        %3405 = vmatprep.subr.mxu0 0.0
        %3406 = vmatpush1.msra.mxu0 0.0
        %3407 = vmatprep.subr.mxu0 0.0
        %3408 = vmatpush1.msra.mxu0 0.0
        %3409 = vmatprep.subr.mxu0 0.0
        %3410 = vmatpush1.msra.mxu0 0.0
        %3411 = vmatprep.subr.mxu0 0.0
        %3412 = vmatpush1.msra.mxu0 0.0
        %3413 = vmatprep.subr.mxu0 0.0
        %3414 = vmatpush1.msra.mxu0 0.0
        %3415 = vmatprep.subr.mxu0 0.0
        %3416 = vmatpush1.msra.mxu0 0.0
        %3417 = vmatprep.subr.mxu0 0.0
        %3418 = vmatpush1.msra.mxu0 0.0
        %3419 = vmatprep.subr.mxu0 0.0
        %3420 = vmatpush1.msra.mxu0 0.0
        %3421 = vmatprep.subr.mxu0 0.0
        %3422 = vmatpush1.msra.mxu0 0.0
        %3423 = vmatprep.subr.mxu0 0.0
        %3424 = vmatpush1.msra.mxu0 0.0
        %3425 = vmatprep.subr.mxu0 0.0
        %3426 = vmatpush1.msra.mxu0 0.0
        %3427 = vmatprep.mubr.f32.mxu0 0.0
        %3428 = vmatmul.mubr.f32.gmra.mrb[0].mxu0 %v3340
        %v3429 = vpop.f32.mrb[0].mxu0
        %v3430 = vadd.f32 0.0, %v3429
        %v3431 = vpop.f32.mrb[0].mxu0
        %3432 = vmatprep.mubr.f32.mxu0 0.0
        %3433 = vmatmul.mubr.f32.gmra.mrb[0].mxu0 %v3343
        %v3434 = vpop.f32.mrb[0].mxu0
        %v3435 = vadd.f32 0.0, %v3434
        %v3436 = vpop.f32.mrb[0].mxu0
        %3437 = vmatprep.mubr.f32.mxu0 0.0
        %3438 = vmatmul.mubr.f32.gmra.mrb[0].mxu0 %v3346
        %v3439 = vpop.f32.mrb[0].mxu0
        %v3440 = vadd.f32 0.0, %v3439
        %v3441 = vpop.f32.mrb[0].mxu0
        %3442 = vmatprep.mubr.f32.mxu0 0.0
        %3443 = vmatmul.mubr.f32.gmra.mrb[0].mxu0 %v3349
        %v3444 = vpop.f32.mrb[0].mxu0
        %v3445 = vadd.f32 0.0, %v3444
        %v3446 = vpop.f32.mrb[0].mxu0
        %3447 = vmatprep.mubr.f32.mxu0 0.0
        %3448 = vmatmul.mubr.f32.gmra.mrb[0].mxu0 %v3352
        %v3449 = vpop.f32.mrb[0].mxu0
        %v3450 = vadd.f32 0.0, %v3449
        %v3451 = vpop.f32.mrb[0].mxu0
        %3452 = vmatprep.mubr.f32.mxu0 0.0
        %3453 = vmatmul.mubr.f32.gmra.mrb[0].mxu0 %v3355
        %v3454 = vpop.f32.mrb[0].mxu0
        %v3455 = vadd.f32 0.0, %v3454
        %v3456 = vpop.f32.mrb[0].mxu0
        %3457 = vmatprep.mubr.f32.mxu0 0.0
        %3458 = vmatmul.mubr.f32.gmra.mrb[0].mxu0 %v3358
        %v3459 = vpop.f32.mrb[0].mxu0
        %v3460 = vadd.f32 0.0, %v3459
        %v3461 = vpop.f32.mrb[0].mxu0
        %3462 = vmatprep.mubr.f32.mxu0 0.0
        %3463 = vmatmul.mubr.f32.gmra.mrb[0].mxu0 %v3361
        %v3464 = vpop.f32.mrb[0].mxu0
        %v3465 = vadd.f32 0.0, %v3464
        %v3466 = vpop.f32.mrb[0].mxu0
        %3467 = vdwg.mxu0
        %s3468 = scalar_lea.vmem %s4, 384
        %v3469 = vld [vmem:[%s3468] sm:$0xff]
        %v3470 = vld [vmem:[%s3468 + $0x8] sm:$0xff]
        %v3471 = vld [vmem:[%s3468 + $0x10] sm:$0xff]
        %v3472 = vld [vmem:[%s3468 + $0x18] sm:$0xff]
        %v3473 = vld [vmem:[%s3468 + $0x20] sm:$0xff]
        %v3474 = vld [vmem:[%s3468 + $0x28] sm:$0xff]
        %v3475 = vld [vmem:[%s3468 + $0x30] sm:$0xff]
        %v3476 = vld [vmem:[%s3468 + $0x38] sm:$0xff]
        %3477 = vrot.lane.b32.xlu0 %v2654, 64
        %v3478 = vpop.permute.xlu0 %3477
        %3479 = vrot.lane.b32.xlu0 %v2655, 64
        %v3480 = vpop.permute.xlu0 %3479
        %3481 = vrot.lane.b32.xlu0 %v2656, 64
        %v3482 = vpop.permute.xlu0 %3481
        %3483 = vrot.lane.b32.xlu0 %v2657, 64
        %v3484 = vpop.permute.xlu0 %3483
        %3485 = vrot.lane.b32.xlu0 %v2658, 64
        %v3486 = vpop.permute.xlu0 %3485
        %3487 = vrot.lane.b32.xlu0 %v2659, 64
        %v3488 = vpop.permute.xlu0 %3487
        %3489 = vrot.lane.b32.xlu0 %v2660, 64
        %v3490 = vpop.permute.xlu0 %3489
        %3491 = vrot.lane.b32.xlu0 %v2661, 64
        %v3492 = vpop.permute.xlu0 %3491
        %3493 = vrot.lane.b32.xlu0 %v844, 64
        %v3494 = vpop.permute.xlu0 %3493
        %3495 = vrot.lane.b32.xlu0 %v850, 64
        %v3496 = vpop.permute.xlu0 %3495
        %3497 = vrot.lane.b32.xlu0 %v856, 64
        %v3498 = vpop.permute.xlu0 %3497
        %3499 = vrot.lane.b32.xlu0 %v862, 64
        %v3500 = vpop.permute.xlu0 %3499
        %3501 = vrot.lane.b32.xlu0 %v868, 64
        %v3502 = vpop.permute.xlu0 %3501
        %3503 = vrot.lane.b32.xlu0 %v874, 64
        %v3504 = vpop.permute.xlu0 %3503
        %3505 = vrot.lane.b32.xlu0 %v880, 64
        %v3506 = vpop.permute.xlu0 %3505
        %3507 = vrot.lane.b32.xlu0 %v886, 64
        %v3508 = vpop.permute.xlu0 %3507
        %v3509 = vsel %vm1017, %v3478, 0
        %v3511 = vsel %vm1017, %v3480, 0
        %v3513 = vsel %vm1017, %v3482, 0
        %v3515 = vsel %vm1017, %v3484, 0
        %v3517 = vsel %vm1017, %v3486, 0
        %v3519 = vsel %vm1017, %v3488, 0
        %v3521 = vsel %vm1017, %v3490, 0
        %v3523 = vsel %vm1017, %v3492, 0
        %v3525 = vsel %vm1017, %v3494, 0
        %v3527 = vsel %vm1017, %v3496, 0
        %v3529 = vsel %vm1017, %v3498, 0
        %v3531 = vsel %vm1017, %v3500, 0
        %v3533 = vsel %vm1017, %v3502, 0
        %v3535 = vsel %vm1017, %v3504, 0
        %v3537 = vsel %vm1017, %v3506, 0
        %v3539 = vsel %vm1017, %v3508, 0
        %3541 = vmatprep.subr.mxu0 0.0
        %3542 = vmatpush1.xpose.msra.mxu0 %v3525
        %3543 = vmatprep.subr.mxu0 0.0
        %3544 = vmatpush1.xpose.msra.mxu0 %v3527
        %3545 = vmatprep.subr.mxu0 0.0
        %3546 = vmatpush1.xpose.msra.mxu0 %v3529
        %3547 = vmatprep.subr.mxu0 0.0
        %3548 = vmatpush1.xpose.msra.mxu0 %v3531
        %3549 = vmatprep.subr.mxu0 0.0
        %3550 = vmatpush1.xpose.msra.mxu0 %v3533
        %3551 = vmatprep.subr.mxu0 0.0
        %3552 = vmatpush1.xpose.msra.mxu0 %v3535
        %3553 = vmatprep.subr.mxu0 0.0
        %3554 = vmatpush1.xpose.msra.mxu0 %v3537
        %3555 = vmatprep.subr.mxu0 0.0
        %3556 = vmatpush1.xpose.msra.mxu0 %v3539
        %3557 = vmatprep.subr.mxu0 0.0
        %3558 = vmatpush1.xpose.msra.mxu0 0.0
        %3559 = vmatprep.subr.mxu0 0.0
        %3560 = vmatpush1.xpose.msra.mxu0 0.0
        %3561 = vmatprep.subr.mxu0 0.0
        %3562 = vmatpush1.xpose.msra.mxu0 0.0
        %3563 = vmatprep.subr.mxu0 0.0
        %3564 = vmatpush1.xpose.msra.mxu0 0.0
        %3565 = vmatprep.subr.mxu0 0.0
        %3566 = vmatpush1.xpose.msra.mxu0 0.0
        %3567 = vmatprep.subr.mxu0 0.0
        %3568 = vmatpush1.xpose.msra.mxu0 0.0
        %3569 = vmatprep.subr.mxu0 0.0
        %3570 = vmatpush1.xpose.msra.mxu0 0.0
        %3571 = vmatprep.subr.mxu0 0.0
        %3572 = vmatpush1.xpose.msra.mxu0 0.0
        %3573 = vmatprep.subr.mxu0 0.0
        %3574 = vmatpush1.xpose.msra.mxu0 0.0
        %3575 = vmatprep.subr.mxu0 0.0
        %3576 = vmatpush1.xpose.msra.mxu0 0.0
        %3577 = vmatprep.subr.mxu0 0.0
        %3578 = vmatpush1.xpose.msra.mxu0 0.0
        %3579 = vmatprep.subr.mxu0 0.0
        %3580 = vmatpush1.xpose.msra.mxu0 0.0
        %3581 = vmatprep.subr.mxu0 0.0
        %3582 = vmatpush1.xpose.msra.mxu0 0.0
        %3583 = vmatprep.subr.mxu0 0.0
        %3584 = vmatpush1.xpose.msra.mxu0 0.0
        %3585 = vmatprep.subr.mxu0 0.0
        %3586 = vmatpush1.xpose.msra.mxu0 0.0
        %3587 = vmatprep.subr.mxu0 0.0
        %3588 = vmatpush1.xpose.msra.mxu0 0.0
        %3589 = vmatprep.subr.mxu0 0.0
        %3590 = vmatpush1.xpose.msra.mxu0 0.0
        %3591 = vmatprep.subr.mxu0 0.0
        %3592 = vmatpush1.xpose.msra.mxu0 0.0
        %3593 = vmatprep.subr.mxu0 0.0
        %3594 = vmatpush1.xpose.msra.mxu0 0.0
        %3595 = vmatprep.subr.mxu0 0.0
        %3596 = vmatpush1.xpose.msra.mxu0 0.0
        %3597 = vmatprep.subr.mxu0 0.0
        %3598 = vmatpush1.xpose.msra.mxu0 0.0
        %3599 = vmatprep.subr.mxu0 0.0
        %3600 = vmatpush1.xpose.msra.mxu0 0.0
        %3601 = vmatprep.subr.mxu0 0.0
        %3602 = vmatpush1.xpose.msra.mxu0 0.0
        %3603 = vmatprep.subr.mxu0 0.0
        %3604 = vmatpush1.xpose.msra.mxu0 0.0
        %3605 = vmatprep.mubr.f32.mxu0 0.0
        %3606 = vmatmul.mubr.f32.gmra.mrb[0].mxu0 %v3509
        %v3607 = vpop.f32.mrb[0].mxu0
        %v3608 = vadd.f32 %v3469, %v3607
        %v3609 = vpop.f32.mrb[0].mxu0
        %3610 = vmatprep.mubr.f32.mxu0 0.0
        %3611 = vmatmul.mubr.f32.gmra.mrb[0].mxu0 %v3511
        %v3612 = vpop.f32.mrb[0].mxu0
        %v3613 = vadd.f32 %v3470, %v3612
        %v3614 = vpop.f32.mrb[0].mxu0
        %3615 = vmatprep.mubr.f32.mxu0 0.0
        %3616 = vmatmul.mubr.f32.gmra.mrb[0].mxu0 %v3513
        %v3617 = vpop.f32.mrb[0].mxu0
        %v3618 = vadd.f32 %v3471, %v3617
        %v3619 = vpop.f32.mrb[0].mxu0
        %3620 = vmatprep.mubr.f32.mxu0 0.0
        %3621 = vmatmul.mubr.f32.gmra.mrb[0].mxu0 %v3515
        %v3622 = vpop.f32.mrb[0].mxu0
        %v3623 = vadd.f32 %v3472, %v3622
        %v3624 = vpop.f32.mrb[0].mxu0
        %3625 = vmatprep.mubr.f32.mxu0 0.0
        %3626 = vmatmul.mubr.f32.gmra.mrb[0].mxu0 %v3517
        %v3627 = vpop.f32.mrb[0].mxu0
        %v3628 = vadd.f32 %v3473, %v3627
        %v3629 = vpop.f32.mrb[0].mxu0
        %3630 = vmatprep.mubr.f32.mxu0 0.0
        %3631 = vmatmul.mubr.f32.gmra.mrb[0].mxu0 %v3519
        %v3632 = vpop.f32.mrb[0].mxu0
        %v3633 = vadd.f32 %v3474, %v3632
        %v3634 = vpop.f32.mrb[0].mxu0
        %3635 = vmatprep.mubr.f32.mxu0 0.0
        %3636 = vmatmul.mubr.f32.gmra.mrb[0].mxu0 %v3521
        %v3637 = vpop.f32.mrb[0].mxu0
        %v3638 = vadd.f32 %v3475, %v3637
        %v3639 = vpop.f32.mrb[0].mxu0
        %3640 = vmatprep.mubr.f32.mxu0 0.0
        %3641 = vmatmul.mubr.f32.gmra.mrb[0].mxu0 %v3523
        %v3642 = vpop.f32.mrb[0].mxu0
        %v3643 = vadd.f32 %v3476, %v3642
        %v3644 = vpop.f32.mrb[0].mxu0
        %3645 = vdwg.mxu0
        %v3646 = vsel %vm1171, %v3608, -inf
        %3647 = vmax.xlane.f32.xlu0 %v3646
        %v3648 = vpop.xlane.xlu0 %3647
        %v3649 = vsel %vm1171, %v3613, -inf
        %3650 = vmax.xlane.f32.xlu0 %v3649
        %v3651 = vpop.xlane.xlu0 %3650
        %v3652 = vsel %vm1171, %v3618, -inf
        %3653 = vmax.xlane.f32.xlu0 %v3652
        %v3654 = vpop.xlane.xlu0 %3653
        %v3655 = vsel %vm1171, %v3623, -inf
        %3656 = vmax.xlane.f32.xlu0 %v3655
        %v3657 = vpop.xlane.xlu0 %3656
        %v3658 = vsel %vm1171, %v3628, -inf
        %3659 = vmax.xlane.f32.xlu0 %v3658
        %v3660 = vpop.xlane.xlu0 %3659
        %v3661 = vsel %vm1171, %v3633, -inf
        %3662 = vmax.xlane.f32.xlu0 %v3661
        %v3663 = vpop.xlane.xlu0 %3662
        %v3664 = vsel %vm1171, %v3638, -inf
        %3665 = vmax.xlane.f32.xlu0 %v3664
        %v3666 = vpop.xlane.xlu0 %3665
        %v3667 = vsel %vm1171, %v3643, -inf
        %3668 = vmax.xlane.f32.xlu0 %v3667
        %v3669 = vpop.xlane.xlu0 %3668
        %v3670 = vsub.f32 %v3608, %v3648
        %v3671 = vsub.f32 %v3613, %v3651
        %v3672 = vsub.f32 %v3618, %v3654
        %v3673 = vsub.f32 %v3623, %v3657
        %v3674 = vsub.f32 %v3628, %v3660
        %v3675 = vsub.f32 %v3633, %v3663
        %v3676 = vsub.f32 %v3638, %v3666
        %v3677 = vsub.f32 %v3643, %v3669
        %v3678 = vmul.f32 %v3670, 1.442695
        %v3679 = vpow.pop %v3678
        %v3680 = vmul.f32 %v3671, 1.442695
        %v3681 = vpow.pop %v3680
        %v3682 = vmul.f32 %v3672, 1.442695
        %v3683 = vpow.pop %v3682
        %v3684 = vmul.f32 %v3673, 1.442695
        %v3685 = vpow.pop %v3684
        %v3686 = vmul.f32 %v3674, 1.442695
        %v3687 = vpow.pop %v3686
        %v3688 = vmul.f32 %v3675, 1.442695
        %v3689 = vpow.pop %v3688
        %v3690 = vmul.f32 %v3676, 1.442695
        %v3691 = vpow.pop %v3690
        %v3692 = vmul.f32 %v3677, 1.442695
        %v3693 = vpow.pop %v3692
        %v3694 = vsel %vm1171, %v3679, 0.0
        %3695 = vadd.xlane.f32.xlu0 %v3694
        %v3696 = vpop.xlane.xlu0 %3695
        %v3697 = vsel %vm1171, %v3681, 0.0
        %3698 = vadd.xlane.f32.xlu0 %v3697
        %v3699 = vpop.xlane.xlu0 %3698
        %v3700 = vsel %vm1171, %v3683, 0.0
        %3701 = vadd.xlane.f32.xlu0 %v3700
        %v3702 = vpop.xlane.xlu0 %3701
        %v3703 = vsel %vm1171, %v3685, 0.0
        %3704 = vadd.xlane.f32.xlu0 %v3703
        %v3705 = vpop.xlane.xlu0 %3704
        %v3706 = vsel %vm1171, %v3687, 0.0
        %3707 = vadd.xlane.f32.xlu0 %v3706
        %v3708 = vpop.xlane.xlu0 %3707
        %v3709 = vsel %vm1171, %v3689, 0.0
        %3710 = vadd.xlane.f32.xlu0 %v3709
        %v3711 = vpop.xlane.xlu0 %3710
        %v3712 = vsel %vm1171, %v3691, 0.0
        %3713 = vadd.xlane.f32.xlu0 %v3712
        %v3714 = vpop.xlane.xlu0 %3713
        %v3715 = vsel %vm1171, %v3693, 0.0
        %3716 = vadd.xlane.f32.xlu0 %v3715
        %v3717 = vpop.xlane.xlu0 %3716
        %v3718 = vrcp.pop %v3696
        %v3719 = vrcp.pop %v3699
        %v3720 = vrcp.pop %v3702
        %v3721 = vrcp.pop %v3705
        %v3722 = vrcp.pop %v3708
        %v3723 = vrcp.pop %v3711
        %v3724 = vrcp.pop %v3714
        %v3725 = vrcp.pop %v3717
        %v3726 = vmul.f32 %v3679, %v3718
        %v3727 = vmul.f32 %v3681, %v3719
        %v3728 = vmul.f32 %v3683, %v3720
        %v3729 = vmul.f32 %v3685, %v3721
        %v3730 = vmul.f32 %v3687, %v3722
        %v3731 = vmul.f32 %v3689, %v3723
        %v3732 = vmul.f32 %v3691, %v3724
        %v3733 = vmul.f32 %v3693, %v3725
        %3734 = vrot.lane.b32.xlu0 %v957, 64
        %v3735 = vpop.permute.xlu0 %3734
        %3736 = vrot.lane.b32.xlu0 %v963, 64
        %v3737 = vpop.permute.xlu0 %3736
        %3738 = vrot.lane.b32.xlu0 %v969, 64
        %v3739 = vpop.permute.xlu0 %3738
        %3740 = vrot.lane.b32.xlu0 %v975, 64
        %v3741 = vpop.permute.xlu0 %3740
        %3742 = vrot.lane.b32.xlu0 %v981, 64
        %v3743 = vpop.permute.xlu0 %3742
        %3744 = vrot.lane.b32.xlu0 %v987, 64
        %v3745 = vpop.permute.xlu0 %3744
        %3746 = vrot.lane.b32.xlu0 %v993, 64
        %v3747 = vpop.permute.xlu0 %3746
        %3748 = vrot.lane.b32.xlu0 %v999, 64
        %v3749 = vpop.permute.xlu0 %3748
        %v3759 = vsel %vm1171, %v3726, 0
        %v3762 = vsel %vm1171, %v3727, 0
        %v3765 = vsel %vm1171, %v3728, 0
        %v3768 = vsel %vm1171, %v3729, 0
        %v3771 = vsel %vm1171, %v3730, 0
        %v3774 = vsel %vm1171, %v3731, 0
        %v3777 = vsel %vm1171, %v3732, 0
        %v3780 = vsel %vm1171, %v3733, 0
        %3782 = vmatprep.subr.mxu0 0.0
        %3783 = vmatpush1.msra.mxu0 %v3735
        %3784 = vmatprep.subr.mxu0 0.0
        %3785 = vmatpush1.msra.mxu0 %v3737
        %3786 = vmatprep.subr.mxu0 0.0
        %3787 = vmatpush1.msra.mxu0 %v3739
        %3788 = vmatprep.subr.mxu0 0.0
        %3789 = vmatpush1.msra.mxu0 %v3741
        %3790 = vmatprep.subr.mxu0 0.0
        %3791 = vmatpush1.msra.mxu0 %v3743
        %3792 = vmatprep.subr.mxu0 0.0
        %3793 = vmatpush1.msra.mxu0 %v3745
        %3794 = vmatprep.subr.mxu0 0.0
        %3795 = vmatpush1.msra.mxu0 %v3747
        %3796 = vmatprep.subr.mxu0 0.0
        %3797 = vmatpush1.msra.mxu0 %v3749
        %3798 = vmatprep.subr.mxu0 0.0
        %3799 = vmatpush1.msra.mxu0 0.0
        %3800 = vmatprep.subr.mxu0 0.0
        %3801 = vmatpush1.msra.mxu0 0.0
        %3802 = vmatprep.subr.mxu0 0.0
        %3803 = vmatpush1.msra.mxu0 0.0
        %3804 = vmatprep.subr.mxu0 0.0
        %3805 = vmatpush1.msra.mxu0 0.0
        %3806 = vmatprep.subr.mxu0 0.0
        %3807 = vmatpush1.msra.mxu0 0.0
        %3808 = vmatprep.subr.mxu0 0.0
        %3809 = vmatpush1.msra.mxu0 0.0
        %3810 = vmatprep.subr.mxu0 0.0
        %3811 = vmatpush1.msra.mxu0 0.0
        %3812 = vmatprep.subr.mxu0 0.0
        %3813 = vmatpush1.msra.mxu0 0.0
        %3814 = vmatprep.subr.mxu0 0.0
        %3815 = vmatpush1.msra.mxu0 0.0
        %3816 = vmatprep.subr.mxu0 0.0
        %3817 = vmatpush1.msra.mxu0 0.0
        %3818 = vmatprep.subr.mxu0 0.0
        %3819 = vmatpush1.msra.mxu0 0.0
        %3820 = vmatprep.subr.mxu0 0.0
        %3821 = vmatpush1.msra.mxu0 0.0
        %3822 = vmatprep.subr.mxu0 0.0
        %3823 = vmatpush1.msra.mxu0 0.0
        %3824 = vmatprep.subr.mxu0 0.0
        %3825 = vmatpush1.msra.mxu0 0.0
        %3826 = vmatprep.subr.mxu0 0.0
        %3827 = vmatpush1.msra.mxu0 0.0
        %3828 = vmatprep.subr.mxu0 0.0
        %3829 = vmatpush1.msra.mxu0 0.0
        %3830 = vmatprep.subr.mxu0 0.0
        %3831 = vmatpush1.msra.mxu0 0.0
        %3832 = vmatprep.subr.mxu0 0.0
        %3833 = vmatpush1.msra.mxu0 0.0
        %3834 = vmatprep.subr.mxu0 0.0
        %3835 = vmatpush1.msra.mxu0 0.0
        %3836 = vmatprep.subr.mxu0 0.0
        %3837 = vmatpush1.msra.mxu0 0.0
        %3838 = vmatprep.subr.mxu0 0.0
        %3839 = vmatpush1.msra.mxu0 0.0
        %3840 = vmatprep.subr.mxu0 0.0
        %3841 = vmatpush1.msra.mxu0 0.0
        %3842 = vmatprep.subr.mxu0 0.0
        %3843 = vmatpush1.msra.mxu0 0.0
        %3844 = vmatprep.subr.mxu0 0.0
        %3845 = vmatpush1.msra.mxu0 0.0
        %3846 = vmatprep.mubr.f32.mxu0 0.0
        %3847 = vmatmul.mubr.f32.gmra.mrb[0].mxu0 %v3759
        %v3848 = vpop.f32.mrb[0].mxu0
        %v3849 = vadd.f32 0.0, %v3848
        %v3850 = vpop.f32.mrb[0].mxu0
        %3851 = vmatprep.mubr.f32.mxu0 0.0
        %3852 = vmatmul.mubr.f32.gmra.mrb[0].mxu0 %v3762
        %v3853 = vpop.f32.mrb[0].mxu0
        %v3854 = vadd.f32 0.0, %v3853
        %v3855 = vpop.f32.mrb[0].mxu0
        %3856 = vmatprep.mubr.f32.mxu0 0.0
        %3857 = vmatmul.mubr.f32.gmra.mrb[0].mxu0 %v3765
        %v3858 = vpop.f32.mrb[0].mxu0
        %v3859 = vadd.f32 0.0, %v3858
        %v3860 = vpop.f32.mrb[0].mxu0
        %3861 = vmatprep.mubr.f32.mxu0 0.0
        %3862 = vmatmul.mubr.f32.gmra.mrb[0].mxu0 %v3768
        %v3863 = vpop.f32.mrb[0].mxu0
        %v3864 = vadd.f32 0.0, %v3863
        %v3865 = vpop.f32.mrb[0].mxu0
        %3866 = vmatprep.mubr.f32.mxu0 0.0
        %3867 = vmatmul.mubr.f32.gmra.mrb[0].mxu0 %v3771
        %v3868 = vpop.f32.mrb[0].mxu0
        %v3869 = vadd.f32 0.0, %v3868
        %v3870 = vpop.f32.mrb[0].mxu0
        %3871 = vmatprep.mubr.f32.mxu0 0.0
        %3872 = vmatmul.mubr.f32.gmra.mrb[0].mxu0 %v3774
        %v3873 = vpop.f32.mrb[0].mxu0
        %v3874 = vadd.f32 0.0, %v3873
        %v3875 = vpop.f32.mrb[0].mxu0
        %3876 = vmatprep.mubr.f32.mxu0 0.0
        %3877 = vmatmul.mubr.f32.gmra.mrb[0].mxu0 %v3777
        %v3878 = vpop.f32.mrb[0].mxu0
        %v3879 = vadd.f32 0.0, %v3878
        %v3880 = vpop.f32.mrb[0].mxu0
        %3881 = vmatprep.mubr.f32.mxu0 0.0
        %3882 = vmatmul.mubr.f32.gmra.mrb[0].mxu0 %v3780
        %v3883 = vpop.f32.mrb[0].mxu0
        %v3884 = vadd.f32 0.0, %v3883
        %v3885 = vpop.f32.mrb[0].mxu0
        %3886 = vdwg.mxu0
        %s3887 = scalar_lea.vmem %s4, 448
        %v3888 = vld [vmem:[%s3887] sm:$0xff]
        %v3889 = vld [vmem:[%s3887 + $0x8] sm:$0xff]
        %v3890 = vld [vmem:[%s3887 + $0x10] sm:$0xff]
        %v3891 = vld [vmem:[%s3887 + $0x18] sm:$0xff]
        %v3892 = vld [vmem:[%s3887 + $0x20] sm:$0xff]
        %v3893 = vld [vmem:[%s3887 + $0x28] sm:$0xff]
        %v3894 = vld [vmem:[%s3887 + $0x30] sm:$0xff]
        %v3895 = vld [vmem:[%s3887 + $0x38] sm:$0xff]
        %3896 = vrot.lane.b32.xlu0 %v2654, 32
        %v3897 = vpop.permute.xlu0 %3896
        %3898 = vrot.lane.b32.xlu0 %v2655, 32
        %v3899 = vpop.permute.xlu0 %3898
        %3900 = vrot.lane.b32.xlu0 %v2656, 32
        %v3901 = vpop.permute.xlu0 %3900
        %3902 = vrot.lane.b32.xlu0 %v2657, 32
        %v3903 = vpop.permute.xlu0 %3902
        %3904 = vrot.lane.b32.xlu0 %v2658, 32
        %v3905 = vpop.permute.xlu0 %3904
        %3906 = vrot.lane.b32.xlu0 %v2659, 32
        %v3907 = vpop.permute.xlu0 %3906
        %3908 = vrot.lane.b32.xlu0 %v2660, 32
        %v3909 = vpop.permute.xlu0 %3908
        %3910 = vrot.lane.b32.xlu0 %v2661, 32
        %v3911 = vpop.permute.xlu0 %3910
        %3912 = vrot.lane.b32.xlu0 %v844, 32
        %v3913 = vpop.permute.xlu0 %3912
        %3914 = vrot.lane.b32.xlu0 %v850, 32
        %v3915 = vpop.permute.xlu0 %3914
        %3916 = vrot.lane.b32.xlu0 %v856, 32
        %v3917 = vpop.permute.xlu0 %3916
        %3918 = vrot.lane.b32.xlu0 %v862, 32
        %v3919 = vpop.permute.xlu0 %3918
        %3920 = vrot.lane.b32.xlu0 %v868, 32
        %v3921 = vpop.permute.xlu0 %3920
        %3922 = vrot.lane.b32.xlu0 %v874, 32
        %v3923 = vpop.permute.xlu0 %3922
        %3924 = vrot.lane.b32.xlu0 %v880, 32
        %v3925 = vpop.permute.xlu0 %3924
        %3926 = vrot.lane.b32.xlu0 %v886, 32
        %v3927 = vpop.permute.xlu0 %3926
        %v3928 = vsel %vm1017, %v3897, 0
        %v3930 = vsel %vm1017, %v3899, 0
        %v3932 = vsel %vm1017, %v3901, 0
        %v3934 = vsel %vm1017, %v3903, 0
        %v3936 = vsel %vm1017, %v3905, 0
        %v3938 = vsel %vm1017, %v3907, 0
        %v3940 = vsel %vm1017, %v3909, 0
        %v3942 = vsel %vm1017, %v3911, 0
        %v3944 = vsel %vm1017, %v3913, 0
        %v3946 = vsel %vm1017, %v3915, 0
        %v3948 = vsel %vm1017, %v3917, 0
        %v3950 = vsel %vm1017, %v3919, 0
        %v3952 = vsel %vm1017, %v3921, 0
        %v3954 = vsel %vm1017, %v3923, 0
        %v3956 = vsel %vm1017, %v3925, 0
        %v3958 = vsel %vm1017, %v3927, 0
        %3960 = vmatprep.subr.mxu0 0.0
        %3961 = vmatpush1.xpose.msra.mxu0 %v3944
        %3962 = vmatprep.subr.mxu0 0.0
        %3963 = vmatpush1.xpose.msra.mxu0 %v3946
        %3964 = vmatprep.subr.mxu0 0.0
        %3965 = vmatpush1.xpose.msra.mxu0 %v3948
        %3966 = vmatprep.subr.mxu0 0.0
        %3967 = vmatpush1.xpose.msra.mxu0 %v3950
        %3968 = vmatprep.subr.mxu0 0.0
        %3969 = vmatpush1.xpose.msra.mxu0 %v3952
        %3970 = vmatprep.subr.mxu0 0.0
        %3971 = vmatpush1.xpose.msra.mxu0 %v3954
        %3972 = vmatprep.subr.mxu0 0.0
        %3973 = vmatpush1.xpose.msra.mxu0 %v3956
        %3974 = vmatprep.subr.mxu0 0.0
        %3975 = vmatpush1.xpose.msra.mxu0 %v3958
        %3976 = vmatprep.subr.mxu0 0.0
        %3977 = vmatpush1.xpose.msra.mxu0 0.0
        %3978 = vmatprep.subr.mxu0 0.0
        %3979 = vmatpush1.xpose.msra.mxu0 0.0
        %3980 = vmatprep.subr.mxu0 0.0
        %3981 = vmatpush1.xpose.msra.mxu0 0.0
        %3982 = vmatprep.subr.mxu0 0.0
        %3983 = vmatpush1.xpose.msra.mxu0 0.0
        %3984 = vmatprep.subr.mxu0 0.0
        %3985 = vmatpush1.xpose.msra.mxu0 0.0
        %3986 = vmatprep.subr.mxu0 0.0
        %3987 = vmatpush1.xpose.msra.mxu0 0.0
        %3988 = vmatprep.subr.mxu0 0.0
        %3989 = vmatpush1.xpose.msra.mxu0 0.0
        %3990 = vmatprep.subr.mxu0 0.0
        %3991 = vmatpush1.xpose.msra.mxu0 0.0
        %3992 = vmatprep.subr.mxu0 0.0
        %3993 = vmatpush1.xpose.msra.mxu0 0.0
        %3994 = vmatprep.subr.mxu0 0.0
        %3995 = vmatpush1.xpose.msra.mxu0 0.0
        %3996 = vmatprep.subr.mxu0 0.0
        %3997 = vmatpush1.xpose.msra.mxu0 0.0
        %3998 = vmatprep.subr.mxu0 0.0
        %3999 = vmatpush1.xpose.msra.mxu0 0.0
        %4000 = vmatprep.subr.mxu0 0.0
        %4001 = vmatpush1.xpose.msra.mxu0 0.0
        %4002 = vmatprep.subr.mxu0 0.0
        %4003 = vmatpush1.xpose.msra.mxu0 0.0
        %4004 = vmatprep.subr.mxu0 0.0
        %4005 = vmatpush1.xpose.msra.mxu0 0.0
        %4006 = vmatprep.subr.mxu0 0.0
        %4007 = vmatpush1.xpose.msra.mxu0 0.0
        %4008 = vmatprep.subr.mxu0 0.0
        %4009 = vmatpush1.xpose.msra.mxu0 0.0
        %4010 = vmatprep.subr.mxu0 0.0
        %4011 = vmatpush1.xpose.msra.mxu0 0.0
        %4012 = vmatprep.subr.mxu0 0.0
        %4013 = vmatpush1.xpose.msra.mxu0 0.0
        %4014 = vmatprep.subr.mxu0 0.0
        %4015 = vmatpush1.xpose.msra.mxu0 0.0
        %4016 = vmatprep.subr.mxu0 0.0
        %4017 = vmatpush1.xpose.msra.mxu0 0.0
        %4018 = vmatprep.subr.mxu0 0.0
        %4019 = vmatpush1.xpose.msra.mxu0 0.0
        %4020 = vmatprep.subr.mxu0 0.0
        %4021 = vmatpush1.xpose.msra.mxu0 0.0
        %4022 = vmatprep.subr.mxu0 0.0
        %4023 = vmatpush1.xpose.msra.mxu0 0.0
        %4024 = vmatprep.mubr.f32.mxu0 0.0
        %4025 = vmatmul.mubr.f32.gmra.mrb[0].mxu0 %v3928
        %v4026 = vpop.f32.mrb[0].mxu0
        %v4027 = vadd.f32 %v3888, %v4026
        %v4028 = vpop.f32.mrb[0].mxu0
        %4029 = vmatprep.mubr.f32.mxu0 0.0
        %4030 = vmatmul.mubr.f32.gmra.mrb[0].mxu0 %v3930
        %v4031 = vpop.f32.mrb[0].mxu0
        %v4032 = vadd.f32 %v3889, %v4031
        %v4033 = vpop.f32.mrb[0].mxu0
        %4034 = vmatprep.mubr.f32.mxu0 0.0
        %4035 = vmatmul.mubr.f32.gmra.mrb[0].mxu0 %v3932
        %v4036 = vpop.f32.mrb[0].mxu0
        %v4037 = vadd.f32 %v3890, %v4036
        %v4038 = vpop.f32.mrb[0].mxu0
        %4039 = vmatprep.mubr.f32.mxu0 0.0
        %4040 = vmatmul.mubr.f32.gmra.mrb[0].mxu0 %v3934
        %v4041 = vpop.f32.mrb[0].mxu0
        %v4042 = vadd.f32 %v3891, %v4041
        %v4043 = vpop.f32.mrb[0].mxu0
        %4044 = vmatprep.mubr.f32.mxu0 0.0
        %4045 = vmatmul.mubr.f32.gmra.mrb[0].mxu0 %v3936
        %v4046 = vpop.f32.mrb[0].mxu0
        %v4047 = vadd.f32 %v3892, %v4046
        %v4048 = vpop.f32.mrb[0].mxu0
        %4049 = vmatprep.mubr.f32.mxu0 0.0
        %4050 = vmatmul.mubr.f32.gmra.mrb[0].mxu0 %v3938
        %v4051 = vpop.f32.mrb[0].mxu0
        %v4052 = vadd.f32 %v3893, %v4051
        %v4053 = vpop.f32.mrb[0].mxu0
        %4054 = vmatprep.mubr.f32.mxu0 0.0
        %4055 = vmatmul.mubr.f32.gmra.mrb[0].mxu0 %v3940
        %v4056 = vpop.f32.mrb[0].mxu0
        %v4057 = vadd.f32 %v3894, %v4056
        %v4058 = vpop.f32.mrb[0].mxu0
        %4059 = vmatprep.mubr.f32.mxu0 0.0
        %4060 = vmatmul.mubr.f32.gmra.mrb[0].mxu0 %v3942
        %v4061 = vpop.f32.mrb[0].mxu0
        %v4062 = vadd.f32 %v3895, %v4061
        %v4063 = vpop.f32.mrb[0].mxu0
        %4064 = vdwg.mxu0
        %v4065 = vsel %vm1171, %v4027, -inf
        %4066 = vmax.xlane.f32.xlu0 %v4065
        %v4067 = vpop.xlane.xlu0 %4066
        %v4068 = vsel %vm1171, %v4032, -inf
        %4069 = vmax.xlane.f32.xlu0 %v4068
        %v4070 = vpop.xlane.xlu0 %4069
        %v4071 = vsel %vm1171, %v4037, -inf
        %4072 = vmax.xlane.f32.xlu0 %v4071
        %v4073 = vpop.xlane.xlu0 %4072
        %v4074 = vsel %vm1171, %v4042, -inf
        %4075 = vmax.xlane.f32.xlu0 %v4074
        %v4076 = vpop.xlane.xlu0 %4075
        %v4077 = vsel %vm1171, %v4047, -inf
        %4078 = vmax.xlane.f32.xlu0 %v4077
        %v4079 = vpop.xlane.xlu0 %4078
        %v4080 = vsel %vm1171, %v4052, -inf
        %4081 = vmax.xlane.f32.xlu0 %v4080
        %v4082 = vpop.xlane.xlu0 %4081
        %v4083 = vsel %vm1171, %v4057, -inf
        %4084 = vmax.xlane.f32.xlu0 %v4083
        %v4085 = vpop.xlane.xlu0 %4084
        %v4086 = vsel %vm1171, %v4062, -inf
        %4087 = vmax.xlane.f32.xlu0 %v4086
        %v4088 = vpop.xlane.xlu0 %4087
        %v4089 = vsub.f32 %v4027, %v4067
        %v4090 = vsub.f32 %v4032, %v4070
        %v4091 = vsub.f32 %v4037, %v4073
        %v4092 = vsub.f32 %v4042, %v4076
        %v4093 = vsub.f32 %v4047, %v4079
        %v4094 = vsub.f32 %v4052, %v4082
        %v4095 = vsub.f32 %v4057, %v4085
        %v4096 = vsub.f32 %v4062, %v4088
        %v4097 = vmul.f32 %v4089, 1.442695
        %v4098 = vpow.pop %v4097
        %v4099 = vmul.f32 %v4090, 1.442695
        %v4100 = vpow.pop %v4099
        %v4101 = vmul.f32 %v4091, 1.442695
        %v4102 = vpow.pop %v4101
        %v4103 = vmul.f32 %v4092, 1.442695
        %v4104 = vpow.pop %v4103
        %v4105 = vmul.f32 %v4093, 1.442695
        %v4106 = vpow.pop %v4105
        %v4107 = vmul.f32 %v4094, 1.442695
        %v4108 = vpow.pop %v4107
        %v4109 = vmul.f32 %v4095, 1.442695
        %v4110 = vpow.pop %v4109
        %v4111 = vmul.f32 %v4096, 1.442695
        %v4112 = vpow.pop %v4111
        %v4113 = vsel %vm1171, %v4098, 0.0
        %4114 = vadd.xlane.f32.xlu0 %v4113
        %v4115 = vpop.xlane.xlu0 %4114
        %v4116 = vsel %vm1171, %v4100, 0.0
        %4117 = vadd.xlane.f32.xlu0 %v4116
        %v4118 = vpop.xlane.xlu0 %4117
        %v4119 = vsel %vm1171, %v4102, 0.0
        %4120 = vadd.xlane.f32.xlu0 %v4119
        %v4121 = vpop.xlane.xlu0 %4120
        %v4122 = vsel %vm1171, %v4104, 0.0
        %4123 = vadd.xlane.f32.xlu0 %v4122
        %v4124 = vpop.xlane.xlu0 %4123
        %v4125 = vsel %vm1171, %v4106, 0.0
        %4126 = vadd.xlane.f32.xlu0 %v4125
        %v4127 = vpop.xlane.xlu0 %4126
        %v4128 = vsel %vm1171, %v4108, 0.0
        %4129 = vadd.xlane.f32.xlu0 %v4128
        %v4130 = vpop.xlane.xlu0 %4129
        %v4131 = vsel %vm1171, %v4110, 0.0
        %4132 = vadd.xlane.f32.xlu0 %v4131
        %v4133 = vpop.xlane.xlu0 %4132
        %v4134 = vsel %vm1171, %v4112, 0.0
        %4135 = vadd.xlane.f32.xlu0 %v4134
        %v4136 = vpop.xlane.xlu0 %4135
        %v4137 = vrcp.pop %v4115
        %v4138 = vrcp.pop %v4118
        %v4139 = vrcp.pop %v4121
        %v4140 = vrcp.pop %v4124
        %v4141 = vrcp.pop %v4127
        %v4142 = vrcp.pop %v4130
        %v4143 = vrcp.pop %v4133
        %v4144 = vrcp.pop %v4136
        %v4145 = vmul.f32 %v4098, %v4137
        %v4146 = vmul.f32 %v4100, %v4138
        %v4147 = vmul.f32 %v4102, %v4139
        %v4148 = vmul.f32 %v4104, %v4140
        %v4149 = vmul.f32 %v4106, %v4141
        %v4150 = vmul.f32 %v4108, %v4142
        %v4151 = vmul.f32 %v4110, %v4143
        %v4152 = vmul.f32 %v4112, %v4144
        %4153 = vrot.lane.b32.xlu0 %v957, 32
        %v4154 = vpop.permute.xlu0 %4153
        %4155 = vrot.lane.b32.xlu0 %v963, 32
        %v4156 = vpop.permute.xlu0 %4155
        %4157 = vrot.lane.b32.xlu0 %v969, 32
        %v4158 = vpop.permute.xlu0 %4157
        %4159 = vrot.lane.b32.xlu0 %v975, 32
        %v4160 = vpop.permute.xlu0 %4159
        %4161 = vrot.lane.b32.xlu0 %v981, 32
        %v4162 = vpop.permute.xlu0 %4161
        %4163 = vrot.lane.b32.xlu0 %v987, 32
        %v4164 = vpop.permute.xlu0 %4163
        %4165 = vrot.lane.b32.xlu0 %v993, 32
        %v4166 = vpop.permute.xlu0 %4165
        %4167 = vrot.lane.b32.xlu0 %v999, 32
        %v4168 = vpop.permute.xlu0 %4167
        %v4178 = vsel %vm1171, %v4145, 0
        %v4181 = vsel %vm1171, %v4146, 0
        %v4184 = vsel %vm1171, %v4147, 0
        %v4187 = vsel %vm1171, %v4148, 0
        %v4190 = vsel %vm1171, %v4149, 0
        %v4193 = vsel %vm1171, %v4150, 0
        %v4196 = vsel %vm1171, %v4151, 0
        %v4199 = vsel %vm1171, %v4152, 0
        %4201 = vmatprep.subr.mxu0 0.0
        %4202 = vmatpush1.msra.mxu0 %v4154
        %4203 = vmatprep.subr.mxu0 0.0
        %4204 = vmatpush1.msra.mxu0 %v4156
        %4205 = vmatprep.subr.mxu0 0.0
        %4206 = vmatpush1.msra.mxu0 %v4158
        %4207 = vmatprep.subr.mxu0 0.0
        %4208 = vmatpush1.msra.mxu0 %v4160
        %4209 = vmatprep.subr.mxu0 0.0
        %4210 = vmatpush1.msra.mxu0 %v4162
        %4211 = vmatprep.subr.mxu0 0.0
        %4212 = vmatpush1.msra.mxu0 %v4164
        %4213 = vmatprep.subr.mxu0 0.0
        %4214 = vmatpush1.msra.mxu0 %v4166
        %4215 = vmatprep.subr.mxu0 0.0
        %4216 = vmatpush1.msra.mxu0 %v4168
        %4217 = vmatprep.subr.mxu0 0.0
        %4218 = vmatpush1.msra.mxu0 0.0
        %4219 = vmatprep.subr.mxu0 0.0
        %4220 = vmatpush1.msra.mxu0 0.0
        %4221 = vmatprep.subr.mxu0 0.0
        %4222 = vmatpush1.msra.mxu0 0.0
        %4223 = vmatprep.subr.mxu0 0.0
        %4224 = vmatpush1.msra.mxu0 0.0
        %4225 = vmatprep.subr.mxu0 0.0
        %4226 = vmatpush1.msra.mxu0 0.0
        %4227 = vmatprep.subr.mxu0 0.0
        %4228 = vmatpush1.msra.mxu0 0.0
        %4229 = vmatprep.subr.mxu0 0.0
        %4230 = vmatpush1.msra.mxu0 0.0
        %4231 = vmatprep.subr.mxu0 0.0
        %4232 = vmatpush1.msra.mxu0 0.0
        %4233 = vmatprep.subr.mxu0 0.0
        %4234 = vmatpush1.msra.mxu0 0.0
        %4235 = vmatprep.subr.mxu0 0.0
        %4236 = vmatpush1.msra.mxu0 0.0
        %4237 = vmatprep.subr.mxu0 0.0
        %4238 = vmatpush1.msra.mxu0 0.0
        %4239 = vmatprep.subr.mxu0 0.0
        %4240 = vmatpush1.msra.mxu0 0.0
        %4241 = vmatprep.subr.mxu0 0.0
        %4242 = vmatpush1.msra.mxu0 0.0
        %4243 = vmatprep.subr.mxu0 0.0
        %4244 = vmatpush1.msra.mxu0 0.0
        %4245 = vmatprep.subr.mxu0 0.0
        %4246 = vmatpush1.msra.mxu0 0.0
        %4247 = vmatprep.subr.mxu0 0.0
        %4248 = vmatpush1.msra.mxu0 0.0
        %4249 = vmatprep.subr.mxu0 0.0
        %4250 = vmatpush1.msra.mxu0 0.0
        %4251 = vmatprep.subr.mxu0 0.0
        %4252 = vmatpush1.msra.mxu0 0.0
        %4253 = vmatprep.subr.mxu0 0.0
        %4254 = vmatpush1.msra.mxu0 0.0
        %4255 = vmatprep.subr.mxu0 0.0
        %4256 = vmatpush1.msra.mxu0 0.0
        %4257 = vmatprep.subr.mxu0 0.0
        %4258 = vmatpush1.msra.mxu0 0.0
        %4259 = vmatprep.subr.mxu0 0.0
        %4260 = vmatpush1.msra.mxu0 0.0
        %4261 = vmatprep.subr.mxu0 0.0
        %4262 = vmatpush1.msra.mxu0 0.0
        %4263 = vmatprep.subr.mxu0 0.0
        %4264 = vmatpush1.msra.mxu0 0.0
        %4265 = vmatprep.mubr.f32.mxu0 0.0
        %4266 = vmatmul.mubr.f32.gmra.mrb[0].mxu0 %v4178
        %v4267 = vpop.f32.mrb[0].mxu0
        %v4268 = vadd.f32 0.0, %v4267
        %v4269 = vpop.f32.mrb[0].mxu0
        %4270 = vmatprep.mubr.f32.mxu0 0.0
        %4271 = vmatmul.mubr.f32.gmra.mrb[0].mxu0 %v4181
        %v4272 = vpop.f32.mrb[0].mxu0
        %v4273 = vadd.f32 0.0, %v4272
        %v4274 = vpop.f32.mrb[0].mxu0
        %4275 = vmatprep.mubr.f32.mxu0 0.0
        %4276 = vmatmul.mubr.f32.gmra.mrb[0].mxu0 %v4184
        %v4277 = vpop.f32.mrb[0].mxu0
        %v4278 = vadd.f32 0.0, %v4277
        %v4279 = vpop.f32.mrb[0].mxu0
        %4280 = vmatprep.mubr.f32.mxu0 0.0
        %4281 = vmatmul.mubr.f32.gmra.mrb[0].mxu0 %v4187
        %v4282 = vpop.f32.mrb[0].mxu0
        %v4283 = vadd.f32 0.0, %v4282
        %v4284 = vpop.f32.mrb[0].mxu0
        %4285 = vmatprep.mubr.f32.mxu0 0.0
        %4286 = vmatmul.mubr.f32.gmra.mrb[0].mxu0 %v4190
        %v4287 = vpop.f32.mrb[0].mxu0
        %v4288 = vadd.f32 0.0, %v4287
        %v4289 = vpop.f32.mrb[0].mxu0
        %4290 = vmatprep.mubr.f32.mxu0 0.0
        %4291 = vmatmul.mubr.f32.gmra.mrb[0].mxu0 %v4193
        %v4292 = vpop.f32.mrb[0].mxu0
        %v4293 = vadd.f32 0.0, %v4292
        %v4294 = vpop.f32.mrb[0].mxu0
        %4295 = vmatprep.mubr.f32.mxu0 0.0
        %4296 = vmatmul.mubr.f32.gmra.mrb[0].mxu0 %v4196
        %v4297 = vpop.f32.mrb[0].mxu0
        %v4298 = vadd.f32 0.0, %v4297
        %v4299 = vpop.f32.mrb[0].mxu0
        %4300 = vmatprep.mubr.f32.mxu0 0.0
        %4301 = vmatmul.mubr.f32.gmra.mrb[0].mxu0 %v4199
        %v4302 = vpop.f32.mrb[0].mxu0
        %v4303 = vadd.f32 0.0, %v4302
        %v4304 = vpop.f32.mrb[0].mxu0
        %4305 = vdwg.mxu0
        %4314 = vrot.lane.b32.xlu0 %v1778, 32
        %v4315 = vpop.permute.xlu0 %4314
        %4316 = vrot.lane.b32.xlu0 %v1783, 32
        %v4317 = vpop.permute.xlu0 %4316
        %4318 = vrot.lane.b32.xlu0 %v1788, 32
        %v4319 = vpop.permute.xlu0 %4318
        %4320 = vrot.lane.b32.xlu0 %v1793, 32
        %v4321 = vpop.permute.xlu0 %4320
        %4322 = vrot.lane.b32.xlu0 %v1798, 32
        %v4323 = vpop.permute.xlu0 %4322
        %4324 = vrot.lane.b32.xlu0 %v1803, 32
        %v4325 = vpop.permute.xlu0 %4324
        %4326 = vrot.lane.b32.xlu0 %v1808, 32
        %v4327 = vpop.permute.xlu0 %4326
        %4328 = vrot.lane.b32.xlu0 %v1813, 32
        %v4329 = vpop.permute.xlu0 %4328
        %4346 = vrot.lane.b32.xlu0 %v2197, 64
        %v4347 = vpop.permute.xlu0 %4346
        %4348 = vrot.lane.b32.xlu0 %v2202, 64
        %v4349 = vpop.permute.xlu0 %4348
        %4350 = vrot.lane.b32.xlu0 %v2207, 64
        %v4351 = vpop.permute.xlu0 %4350
        %4352 = vrot.lane.b32.xlu0 %v2212, 64
        %v4353 = vpop.permute.xlu0 %4352
        %4354 = vrot.lane.b32.xlu0 %v2217, 64
        %v4355 = vpop.permute.xlu0 %4354
        %4356 = vrot.lane.b32.xlu0 %v2222, 64
        %v4357 = vpop.permute.xlu0 %4356
        %4358 = vrot.lane.b32.xlu0 %v2227, 64
        %v4359 = vpop.permute.xlu0 %4358
        %4360 = vrot.lane.b32.xlu0 %v2232, 64
        %v4361 = vpop.permute.xlu0 %4360
        %4378 = vrot.lane.b32.xlu0 %v2616, 96
        %v4379 = vpop.permute.xlu0 %4378
        %4380 = vrot.lane.b32.xlu0 %v2621, 96
        %v4381 = vpop.permute.xlu0 %4380
        %4382 = vrot.lane.b32.xlu0 %v2626, 96
        %v4383 = vpop.permute.xlu0 %4382
        %4384 = vrot.lane.b32.xlu0 %v2631, 96
        %v4385 = vpop.permute.xlu0 %4384
        %4386 = vrot.lane.b32.xlu0 %v2636, 96
        %v4387 = vpop.permute.xlu0 %4386
        %4388 = vrot.lane.b32.xlu0 %v2641, 96
        %v4389 = vpop.permute.xlu0 %4388
        %4390 = vrot.lane.b32.xlu0 %v2646, 96
        %v4391 = vpop.permute.xlu0 %4390
        %4392 = vrot.lane.b32.xlu0 %v2651, 96
        %v4393 = vpop.permute.xlu0 %4392
        %4410 = vrot.lane.b32.xlu0 %v3430, 32
        %v4411 = vpop.permute.xlu0 %4410
        %4412 = vrot.lane.b32.xlu0 %v3435, 32
        %v4413 = vpop.permute.xlu0 %4412
        %4414 = vrot.lane.b32.xlu0 %v3440, 32
        %v4415 = vpop.permute.xlu0 %4414
        %4416 = vrot.lane.b32.xlu0 %v3445, 32
        %v4417 = vpop.permute.xlu0 %4416
        %4418 = vrot.lane.b32.xlu0 %v3450, 32
        %v4419 = vpop.permute.xlu0 %4418
        %4420 = vrot.lane.b32.xlu0 %v3455, 32
        %v4421 = vpop.permute.xlu0 %4420
        %4422 = vrot.lane.b32.xlu0 %v3460, 32
        %v4423 = vpop.permute.xlu0 %4422
        %4424 = vrot.lane.b32.xlu0 %v3465, 32
        %v4425 = vpop.permute.xlu0 %4424
        %4442 = vrot.lane.b32.xlu0 %v3849, 64
        %v4443 = vpop.permute.xlu0 %4442
        %4444 = vrot.lane.b32.xlu0 %v3854, 64
        %v4445 = vpop.permute.xlu0 %4444
        %4446 = vrot.lane.b32.xlu0 %v3859, 64
        %v4447 = vpop.permute.xlu0 %4446
        %4448 = vrot.lane.b32.xlu0 %v3864, 64
        %v4449 = vpop.permute.xlu0 %4448
        %4450 = vrot.lane.b32.xlu0 %v3869, 64
        %v4451 = vpop.permute.xlu0 %4450
        %4452 = vrot.lane.b32.xlu0 %v3874, 64
        %v4453 = vpop.permute.xlu0 %4452
        %4454 = vrot.lane.b32.xlu0 %v3879, 64
        %v4455 = vpop.permute.xlu0 %4454
        %4456 = vrot.lane.b32.xlu0 %v3884, 64
        %v4457 = vpop.permute.xlu0 %4456
        %4474 = vrot.lane.b32.xlu0 %v4268, 96
        %v4475 = vpop.permute.xlu0 %4474
        %4476 = vrot.lane.b32.xlu0 %v4273, 96
        %v4477 = vpop.permute.xlu0 %4476
        %4478 = vrot.lane.b32.xlu0 %v4278, 96
        %v4479 = vpop.permute.xlu0 %4478
        %4480 = vrot.lane.b32.xlu0 %v4283, 96
        %v4481 = vpop.permute.xlu0 %4480
        %4482 = vrot.lane.b32.xlu0 %v4288, 96
        %v4483 = vpop.permute.xlu0 %4482
        %4484 = vrot.lane.b32.xlu0 %v4293, 96
        %v4485 = vpop.permute.xlu0 %4484
        %4486 = vrot.lane.b32.xlu0 %v4298, 96
        %v4487 = vpop.permute.xlu0 %4486
        %4488 = vrot.lane.b32.xlu0 %v4303, 96
        %v4489 = vpop.permute.xlu0 %4488
        %v4498 = vsel %vm1017, %v1351, %v4315
        %v4499 = vsel %vm1017, %v1356, %v4317
        %v4500 = vsel %vm1017, %v1361, %v4319
        %v4501 = vsel %vm1017, %v1366, %v4321
        %v4502 = vsel %vm1017, %v1371, %v4323
        %v4503 = vsel %vm1017, %v1376, %v4325
        %v4504 = vsel %vm1017, %v1381, %v4327
        %v4505 = vsel %vm1017, %v1386, %v4329
        %v4506 = vsel %vm1171, %v4498, %v4347
        %v4507 = vsel %vm1171, %v4499, %v4349
        %v4508 = vsel %vm1171, %v4500, %v4351
        %v4509 = vsel %vm1171, %v4501, %v4353
        %v4510 = vsel %vm1171, %v4502, %v4355
        %v4511 = vsel %vm1171, %v4503, %v4357
        %v4512 = vsel %vm1171, %v4504, %v4359
        %v4513 = vsel %vm1171, %v4505, %v4361
        %vm4514 = vcmask 785408
        %v4515 = vsel %vm4514, %v4506, %v4379
        %v4516 = vsel %vm4514, %v4507, %v4381
        %v4517 = vsel %vm4514, %v4508, %v4383
        %v4518 = vsel %vm4514, %v4509, %v4385
        %v4519 = vsel %vm4514, %v4510, %v4387
        %v4520 = vsel %vm4514, %v4511, %v4389
        %v4521 = vsel %vm4514, %v4512, %v4391
        %v4522 = vsel %vm4514, %v4513, %v4393
        %v4523 = vsel %vm1017, %v3003, %v4411
        %v4524 = vsel %vm1017, %v3008, %v4413
        %v4525 = vsel %vm1017, %v3013, %v4415
        %v4526 = vsel %vm1017, %v3018, %v4417
        %v4527 = vsel %vm1017, %v3023, %v4419
        %v4528 = vsel %vm1017, %v3028, %v4421
        %v4529 = vsel %vm1017, %v3033, %v4423
        %v4530 = vsel %vm1017, %v3038, %v4425
        %v4531 = vsel %vm1171, %v4523, %v4443
        %v4532 = vsel %vm1171, %v4524, %v4445
        %v4533 = vsel %vm1171, %v4525, %v4447
        %v4534 = vsel %vm1171, %v4526, %v4449
        %v4535 = vsel %vm1171, %v4527, %v4451
        %v4536 = vsel %vm1171, %v4528, %v4453
        %v4537 = vsel %vm1171, %v4529, %v4455
        %v4538 = vsel %vm1171, %v4530, %v4457
        %v4539 = vsel %vm4514, %v4531, %v4475
        %v4540 = vsel %vm4514, %v4532, %v4477
        %v4541 = vsel %vm4514, %v4533, %v4479
        %v4542 = vsel %vm4514, %v4534, %v4481
        %v4543 = vsel %vm4514, %v4535, %v4483
        %v4544 = vsel %vm4514, %v4536, %v4485
        %v4545 = vsel %vm4514, %v4537, %v4487
        %v4546 = vsel %vm4514, %v4538, %v4489
        %v4547 = vld [vmem:[%s5] sm:$0xff]
        %v4548 = vld [vmem:[%s5 + $0x8] sm:$0xff]
        %v4549 = vld [vmem:[%s5 + $0x10] sm:$0xff]
        %v4550 = vld [vmem:[%s5 + $0x18] sm:$0xff]
        %v4551 = vld [vmem:[%s5 + $0x20] sm:$0xff]
        %v4552 = vld [vmem:[%s5 + $0x28] sm:$0xff]
        %v4553 = vld [vmem:[%s5 + $0x30] sm:$0xff]
        %v4554 = vld [vmem:[%s5 + $0x38] sm:$0xff]
        %v4555 = vld [vmem:[%s5 + $0x40] sm:$0xff]
        %v4556 = vld [vmem:[%s5 + $0x48] sm:$0xff]
        %v4557 = vld [vmem:[%s5 + $0x50] sm:$0xff]
        %v4558 = vld [vmem:[%s5 + $0x58] sm:$0xff]
        %v4559 = vld [vmem:[%s5 + $0x60] sm:$0xff]
        %v4560 = vld [vmem:[%s5 + $0x68] sm:$0xff]
        %v4561 = vld [vmem:[%s5 + $0x70] sm:$0xff]
        %v4562 = vld [vmem:[%s5 + $0x78] sm:$0xff]
        %v4563 = vld [vmem:[%s5 + $0x80] sm:$0xff]
        %v4564 = vld [vmem:[%s5 + $0x88] sm:$0xff]
        %v4565 = vld [vmem:[%s5 + $0x90] sm:$0xff]
        %v4566 = vld [vmem:[%s5 + $0x98] sm:$0xff]
        %v4567 = vld [vmem:[%s5 + $0xa0] sm:$0xff]
        %v4568 = vld [vmem:[%s5 + $0xa8] sm:$0xff]
        %v4569 = vld [vmem:[%s5 + $0xb0] sm:$0xff]
        %v4570 = vld [vmem:[%s5 + $0xb8] sm:$0xff]
        %v4571 = vld [vmem:[%s5 + $0xc0] sm:$0xff]
        %v4572 = vld [vmem:[%s5 + $0xc8] sm:$0xff]
        %v4573 = vld [vmem:[%s5 + $0xd0] sm:$0xff]
        %v4574 = vld [vmem:[%s5 + $0xd8] sm:$0xff]
        %v4575 = vld [vmem:[%s5 + $0xe0] sm:$0xff]
        %v4576 = vld [vmem:[%s5 + $0xe8] sm:$0xff]
        %v4577 = vld [vmem:[%s5 + $0xf0] sm:$0xff]
        %v4578 = vld [vmem:[%s5 + $0xf8] sm:$0xff]
        %v4579 = vld [vmem:[%s6] sm:$0x1]
        %v4581 = vlaneseq
        %v4582 = vshrl.u32 %v4581, 7
        %v4583 = vsub.s32 0, %v4582
        %v4584 = vrot.slane %v4579, %v4583
        %4586 = vmatprep.subr.mxu0 0.0
        %4587 = vmatpush1.msra.mxu0 %v4547
        %4588 = vmatprep.subr.mxu0 0.0
        %4589 = vmatpush1.msra.mxu0 %v4548
        %4590 = vmatprep.subr.mxu0 0.0
        %4591 = vmatpush1.msra.mxu0 %v4549
        %4592 = vmatprep.subr.mxu0 0.0
        %4593 = vmatpush1.msra.mxu0 %v4550
        %4594 = vmatprep.subr.mxu0 0.0
        %4595 = vmatpush1.msra.mxu0 %v4551
        %4596 = vmatprep.subr.mxu0 0.0
        %4597 = vmatpush1.msra.mxu0 %v4552
        %4598 = vmatprep.subr.mxu0 0.0
        %4599 = vmatpush1.msra.mxu0 %v4553
        %4600 = vmatprep.subr.mxu0 0.0
        %4601 = vmatpush1.msra.mxu0 %v4554
        %4602 = vmatprep.subr.mxu0 0.0
        %4603 = vmatpush1.msra.mxu0 %v4555
        %4604 = vmatprep.subr.mxu0 0.0
        %4605 = vmatpush1.msra.mxu0 %v4556
        %4606 = vmatprep.subr.mxu0 0.0
        %4607 = vmatpush1.msra.mxu0 %v4557
        %4608 = vmatprep.subr.mxu0 0.0
        %4609 = vmatpush1.msra.mxu0 %v4558
        %4610 = vmatprep.subr.mxu0 0.0
        %4611 = vmatpush1.msra.mxu0 %v4559
        %4612 = vmatprep.subr.mxu0 0.0
        %4613 = vmatpush1.msra.mxu0 %v4560
        %4614 = vmatprep.subr.mxu0 0.0
        %4615 = vmatpush1.msra.mxu0 %v4561
        %4616 = vmatprep.subr.mxu0 0.0
        %4617 = vmatpush1.msra.mxu0 %v4562
        %4618 = vmatprep.subr.mxu0 0.0
        %4619 = vmatpush1.msra.mxu0 %v4563
        %4620 = vmatprep.subr.mxu0 0.0
        %4621 = vmatpush1.msra.mxu0 %v4564
        %4622 = vmatprep.subr.mxu0 0.0
        %4623 = vmatpush1.msra.mxu0 %v4565
        %4624 = vmatprep.subr.mxu0 0.0
        %4625 = vmatpush1.msra.mxu0 %v4566
        %4626 = vmatprep.subr.mxu0 0.0
        %4627 = vmatpush1.msra.mxu0 %v4567
        %4628 = vmatprep.subr.mxu0 0.0
        %4629 = vmatpush1.msra.mxu0 %v4568
        %4630 = vmatprep.subr.mxu0 0.0
        %4631 = vmatpush1.msra.mxu0 %v4569
        %4632 = vmatprep.subr.mxu0 0.0
        %4633 = vmatpush1.msra.mxu0 %v4570
        %4634 = vmatprep.subr.mxu0 0.0
        %4635 = vmatpush1.msra.mxu0 %v4571
        %4636 = vmatprep.subr.mxu0 0.0
        %4637 = vmatpush1.msra.mxu0 %v4572
        %4638 = vmatprep.subr.mxu0 0.0
        %4639 = vmatpush1.msra.mxu0 %v4573
        %4640 = vmatprep.subr.mxu0 0.0
        %4641 = vmatpush1.msra.mxu0 %v4574
        %4642 = vmatprep.subr.mxu0 0.0
        %4643 = vmatpush1.msra.mxu0 %v4575
        %4644 = vmatprep.subr.mxu0 0.0
        %4645 = vmatpush1.msra.mxu0 %v4576
        %4646 = vmatprep.subr.mxu0 0.0
        %4647 = vmatpush1.msra.mxu0 %v4577
        %4648 = vmatprep.subr.mxu0 0.0
        %4649 = vmatpush1.msra.mxu0 %v4578
        %4650 = vmatprep.mubr.f32.mxu0 %v4539
        %4651 = vmatmul.mubr.f32.gmra.mrb[0].mxu0 %v4515
        %v4652 = vpop.f32.mrb[0].mxu0
        %v4653 = vadd.f32 %v4584, %v4652
        %v4654 = vpop.f32.mrb[0].mxu0
        %4655 = vmatprep.mubr.f32.mxu0 %v4540
        %4656 = vmatmul.mubr.f32.gmra.mrb[0].mxu0 %v4516
        %v4657 = vpop.f32.mrb[0].mxu0
        %v4658 = vadd.f32 %v4584, %v4657
        %v4659 = vpop.f32.mrb[0].mxu0
        %4660 = vmatprep.mubr.f32.mxu0 %v4541
        %4661 = vmatmul.mubr.f32.gmra.mrb[0].mxu0 %v4517
        %v4662 = vpop.f32.mrb[0].mxu0
        %v4663 = vadd.f32 %v4584, %v4662
        %v4664 = vpop.f32.mrb[0].mxu0
        %4665 = vmatprep.mubr.f32.mxu0 %v4542
        %4666 = vmatmul.mubr.f32.gmra.mrb[0].mxu0 %v4518
        %v4667 = vpop.f32.mrb[0].mxu0
        %v4668 = vadd.f32 %v4584, %v4667
        %v4669 = vpop.f32.mrb[0].mxu0
        %4670 = vmatprep.mubr.f32.mxu0 %v4543
        %4671 = vmatmul.mubr.f32.gmra.mrb[0].mxu0 %v4519
        %v4672 = vpop.f32.mrb[0].mxu0
        %v4673 = vadd.f32 %v4584, %v4672
        %v4674 = vpop.f32.mrb[0].mxu0
        %4675 = vmatprep.mubr.f32.mxu0 %v4544
        %4676 = vmatmul.mubr.f32.gmra.mrb[0].mxu0 %v4520
        %v4677 = vpop.f32.mrb[0].mxu0
        %v4678 = vadd.f32 %v4584, %v4677
        %v4679 = vpop.f32.mrb[0].mxu0
        %4680 = vmatprep.mubr.f32.mxu0 %v4545
        %4681 = vmatmul.mubr.f32.gmra.mrb[0].mxu0 %v4521
        %v4682 = vpop.f32.mrb[0].mxu0
        %v4683 = vadd.f32 %v4584, %v4682
        %v4684 = vpop.f32.mrb[0].mxu0
        %4685 = vmatprep.mubr.f32.mxu0 %v4546
        %4686 = vmatmul.mubr.f32.gmra.mrb[0].mxu0 %v4522
        %v4687 = vpop.f32.mrb[0].mxu0
        %v4688 = vadd.f32 %v4584, %v4687
        %v4689 = vpop.f32.mrb[0].mxu0
        %4690 = vdwg.mxu0
        %v4691 = vadd.f32 %v439, %v4653
        %v4692 = vadd.f32 %v440, %v4658
        %v4693 = vadd.f32 %v441, %v4663
        %v4694 = vadd.f32 %v442, %v4668
        %v4695 = vadd.f32 %v443, %v4673
        %v4696 = vadd.f32 %v444, %v4678
        %v4697 = vadd.f32 %v445, %v4683
        %v4698 = vadd.f32 %v446, %v4688
        %v4699 = vld [vmem:[%s7] sm:$0x1]
        %v4700 = vld [vmem:[%s8] sm:$0x1]
        %4701 = vadd.xlane.f32.xlu0 %v4691
        %v4702 = vpop.xlane.xlu0 %4701
        %4703 = vadd.xlane.f32.xlu0 %v4692
        %v4704 = vpop.xlane.xlu0 %4703
        %4705 = vadd.xlane.f32.xlu0 %v4693
        %v4706 = vpop.xlane.xlu0 %4705
        %4707 = vadd.xlane.f32.xlu0 %v4694
        %v4708 = vpop.xlane.xlu0 %4707
        %4709 = vadd.xlane.f32.xlu0 %v4695
        %v4710 = vpop.xlane.xlu0 %4709
        %4711 = vadd.xlane.f32.xlu0 %v4696
        %v4712 = vpop.xlane.xlu0 %4711
        %4713 = vadd.xlane.f32.xlu0 %v4697
        %v4714 = vpop.xlane.xlu0 %4713
        %4715 = vadd.xlane.f32.xlu0 %v4698
        %v4716 = vpop.xlane.xlu0 %4715
        %v4717 = vmul.f32 %v4702, %v465
        %v4718 = vmul.f32 %v4704, %v465
        %v4719 = vmul.f32 %v4706, %v465
        %v4720 = vmul.f32 %v4708, %v465
        %v4721 = vmul.f32 %v4710, %v465
        %v4722 = vmul.f32 %v4712, %v465
        %v4723 = vmul.f32 %v4714, %v465
        %v4724 = vmul.f32 %v4716, %v465
        %v4725 = vsub.f32 %v4691, %v4717
        %v4726 = vsub.f32 %v4692, %v4718
        %v4727 = vsub.f32 %v4693, %v4719
        %v4728 = vsub.f32 %v4694, %v4720
        %v4729 = vsub.f32 %v4695, %v4721
        %v4730 = vsub.f32 %v4696, %v4722
        %v4731 = vsub.f32 %v4697, %v4723
        %v4732 = vsub.f32 %v4698, %v4724
        %v4733 = vmul.f32 %v4725, %v4725
        %v4734 = vmul.f32 %v4726, %v4726
        %v4735 = vmul.f32 %v4727, %v4727
        %v4736 = vmul.f32 %v4728, %v4728
        %v4737 = vmul.f32 %v4729, %v4729
        %v4738 = vmul.f32 %v4730, %v4730
        %v4739 = vmul.f32 %v4731, %v4731
        %v4740 = vmul.f32 %v4732, %v4732
        %4741 = vadd.xlane.f32.xlu0 %v4733
        %v4742 = vpop.xlane.xlu0 %4741
        %4743 = vadd.xlane.f32.xlu0 %v4734
        %v4744 = vpop.xlane.xlu0 %4743
        %4745 = vadd.xlane.f32.xlu0 %v4735
        %v4746 = vpop.xlane.xlu0 %4745
        %4747 = vadd.xlane.f32.xlu0 %v4736
        %v4748 = vpop.xlane.xlu0 %4747
        %4749 = vadd.xlane.f32.xlu0 %v4737
        %v4750 = vpop.xlane.xlu0 %4749
        %4751 = vadd.xlane.f32.xlu0 %v4738
        %v4752 = vpop.xlane.xlu0 %4751
        %4753 = vadd.xlane.f32.xlu0 %v4739
        %v4754 = vpop.xlane.xlu0 %4753
        %4755 = vadd.xlane.f32.xlu0 %v4740
        %v4756 = vpop.xlane.xlu0 %4755
        %v4757 = vmul.f32 %v4742, %v465
        %v4758 = vmul.f32 %v4744, %v465
        %v4759 = vmul.f32 %v4746, %v465
        %v4760 = vmul.f32 %v4748, %v465
        %v4761 = vmul.f32 %v4750, %v465
        %v4762 = vmul.f32 %v4752, %v465
        %v4763 = vmul.f32 %v4754, %v465
        %v4764 = vmul.f32 %v4756, %v465
        %v4765 = vadd.f32 %v4757, 1e-05
        %v4766 = vadd.f32 %v4758, 1e-05
        %v4767 = vadd.f32 %v4759, 1e-05
        %v4768 = vadd.f32 %v4760, 1e-05
        %v4769 = vadd.f32 %v4761, 1e-05
        %v4770 = vadd.f32 %v4762, 1e-05
        %v4771 = vadd.f32 %v4763, 1e-05
        %v4772 = vadd.f32 %v4764, 1e-05
        %v4773 = vrsqrt.pop %v4765
        %v4774 = vrsqrt.pop %v4766
        %v4775 = vrsqrt.pop %v4767
        %v4776 = vrsqrt.pop %v4768
        %v4777 = vrsqrt.pop %v4769
        %v4778 = vrsqrt.pop %v4770
        %v4779 = vrsqrt.pop %v4771
        %v4780 = vrsqrt.pop %v4772
        %v4781 = vmul.f32 %v4725, %v4773
        %v4782 = vmul.f32 %v4726, %v4774
        %v4783 = vmul.f32 %v4727, %v4775
        %v4784 = vmul.f32 %v4728, %v4776
        %v4785 = vmul.f32 %v4729, %v4777
        %v4786 = vmul.f32 %v4730, %v4778
        %v4787 = vmul.f32 %v4731, %v4779
        %v4788 = vmul.f32 %v4732, %v4780
        %v4790 = vlaneseq
        %v4791 = vshrl.u32 %v4790, 7
        %v4792 = vsub.s32 0, %v4791
        %v4793 = vrot.slane %v4699, %v4792
        %v4795 = vmul.f32 %v4781, %v4793
        %v4796 = vmul.f32 %v4782, %v4793
        %v4797 = vmul.f32 %v4783, %v4793
        %v4798 = vmul.f32 %v4784, %v4793
        %v4799 = vmul.f32 %v4785, %v4793
        %v4800 = vmul.f32 %v4786, %v4793
        %v4801 = vmul.f32 %v4787, %v4793
        %v4802 = vmul.f32 %v4788, %v4793
        %v4804 = vlaneseq
        %v4805 = vshrl.u32 %v4804, 7
        %v4806 = vsub.s32 0, %v4805
        %v4807 = vrot.slane %v4700, %v4806
        %v4809 = vadd.f32 %v4795, %v4807
        %v4810 = vadd.f32 %v4796, %v4807
        %v4811 = vadd.f32 %v4797, %v4807
        %v4812 = vadd.f32 %v4798, %v4807
        %v4813 = vadd.f32 %v4799, %v4807
        %v4814 = vadd.f32 %v4800, %v4807
        %v4815 = vadd.f32 %v4801, %v4807
        %v4816 = vadd.f32 %v4802, %v4807
        %v4817 = vld [vmem:[%s9] sm:$0xff]
        %v4818 = vld [vmem:[%s9 + $0x8] sm:$0xff]
        %v4819 = vld [vmem:[%s9 + $0x10] sm:$0xff]
        %v4820 = vld [vmem:[%s9 + $0x18] sm:$0xff]
        %v4821 = vld [vmem:[%s9 + $0x20] sm:$0xff]
        %v4822 = vld [vmem:[%s9 + $0x28] sm:$0xff]
        %v4823 = vld [vmem:[%s9 + $0x30] sm:$0xff]
        %v4824 = vld [vmem:[%s9 + $0x38] sm:$0xff]
        %v4825 = vld [vmem:[%s9 + $0x40] sm:$0xff]
        %v4826 = vld [vmem:[%s9 + $0x48] sm:$0xff]
        %v4827 = vld [vmem:[%s9 + $0x50] sm:$0xff]
        %v4828 = vld [vmem:[%s9 + $0x58] sm:$0xff]
        %v4829 = vld [vmem:[%s9 + $0x60] sm:$0xff]
        %v4830 = vld [vmem:[%s9 + $0x68] sm:$0xff]
        %v4831 = vld [vmem:[%s9 + $0x70] sm:$0xff]
        %v4832 = vld [vmem:[%s9 + $0x78] sm:$0xff]
        %v4833 = vld [vmem:[%s9 + $0x80] sm:$0xff]
        %v4834 = vld [vmem:[%s9 + $0x88] sm:$0xff]
        %v4835 = vld [vmem:[%s9 + $0x90] sm:$0xff]
        %v4836 = vld [vmem:[%s9 + $0x98] sm:$0xff]
        %v4837 = vld [vmem:[%s9 + $0xa0] sm:$0xff]
        %v4838 = vld [vmem:[%s9 + $0xa8] sm:$0xff]
        %v4839 = vld [vmem:[%s9 + $0xb0] sm:$0xff]
        %v4840 = vld [vmem:[%s9 + $0xb8] sm:$0xff]
        %v4841 = vld [vmem:[%s9 + $0xc0] sm:$0xff]
        %v4842 = vld [vmem:[%s9 + $0xc8] sm:$0xff]
        %v4843 = vld [vmem:[%s9 + $0xd0] sm:$0xff]
        %v4844 = vld [vmem:[%s9 + $0xd8] sm:$0xff]
        %v4845 = vld [vmem:[%s9 + $0xe0] sm:$0xff]
        %v4846 = vld [vmem:[%s9 + $0xe8] sm:$0xff]
        %v4847 = vld [vmem:[%s9 + $0xf0] sm:$0xff]
        %v4848 = vld [vmem:[%s9 + $0xf8] sm:$0xff]
        %v4849 = vld [vmem:[%s9 + $0x100] sm:$0xff]
        %v4850 = vld [vmem:[%s9 + $0x108] sm:$0xff]
        %v4851 = vld [vmem:[%s9 + $0x110] sm:$0xff]
        %v4852 = vld [vmem:[%s9 + $0x118] sm:$0xff]
        %v4853 = vld [vmem:[%s9 + $0x120] sm:$0xff]
        %v4854 = vld [vmem:[%s9 + $0x128] sm:$0xff]
        %v4855 = vld [vmem:[%s9 + $0x130] sm:$0xff]
        %v4856 = vld [vmem:[%s9 + $0x138] sm:$0xff]
        %v4857 = vld [vmem:[%s9 + $0x140] sm:$0xff]
        %v4858 = vld [vmem:[%s9 + $0x148] sm:$0xff]
        %v4859 = vld [vmem:[%s9 + $0x150] sm:$0xff]
        %v4860 = vld [vmem:[%s9 + $0x158] sm:$0xff]
        %v4861 = vld [vmem:[%s9 + $0x160] sm:$0xff]
        %v4862 = vld [vmem:[%s9 + $0x168] sm:$0xff]
        %v4863 = vld [vmem:[%s9 + $0x170] sm:$0xff]
        %v4864 = vld [vmem:[%s9 + $0x178] sm:$0xff]
        %v4865 = vld [vmem:[%s9 + $0x180] sm:$0xff]
        %v4866 = vld [vmem:[%s9 + $0x188] sm:$0xff]
        %v4867 = vld [vmem:[%s9 + $0x190] sm:$0xff]
        %v4868 = vld [vmem:[%s9 + $0x198] sm:$0xff]
        %v4869 = vld [vmem:[%s9 + $0x1a0] sm:$0xff]
        %v4870 = vld [vmem:[%s9 + $0x1a8] sm:$0xff]
        %v4871 = vld [vmem:[%s9 + $0x1b0] sm:$0xff]
        %v4872 = vld [vmem:[%s9 + $0x1b8] sm:$0xff]
        %v4873 = vld [vmem:[%s9 + $0x1c0] sm:$0xff]
        %v4874 = vld [vmem:[%s9 + $0x1c8] sm:$0xff]
        %v4875 = vld [vmem:[%s9 + $0x1d0] sm:$0xff]
        %v4876 = vld [vmem:[%s9 + $0x1d8] sm:$0xff]
        %v4877 = vld [vmem:[%s9 + $0x1e0] sm:$0xff]
        %v4878 = vld [vmem:[%s9 + $0x1e8] sm:$0xff]
        %v4879 = vld [vmem:[%s9 + $0x1f0] sm:$0xff]
        %v4880 = vld [vmem:[%s9 + $0x1f8] sm:$0xff]
        %v4881 = vld [vmem:[%s10] sm:$0xf]
        %v4883 = vlaneseq
        %v4884 = vshrl.u32 %v4883, 7
        %v4885 = vsub.s32 0, %v4884
        %v4886 = vrot.slane %v4881, %v4885
        %v4887 = vlaneseq
        %v4888 = vshrl.u32 %v4887, 7
        %v4889 = vsub.s32 1, %v4888
        %v4890 = vrot.slane %v4881, %v4889
        %v4891 = vlaneseq
        %v4892 = vshrl.u32 %v4891, 7
        %v4893 = vsub.s32 2, %v4892
        %v4894 = vrot.slane %v4881, %v4893
        %v4895 = vlaneseq
        %v4896 = vshrl.u32 %v4895, 7
        %v4897 = vsub.s32 3, %v4896
        %v4898 = vrot.slane %v4881, %v4897
        %4903 = vmatprep.subr.mxu0 %v4818
        %4904 = vmatpush1.msra.mxu0 %v4817
        %4905 = vmatprep.subr.mxu0 %v4822
        %4906 = vmatpush1.msra.mxu0 %v4821
        %4907 = vmatprep.subr.mxu0 %v4826
        %4908 = vmatpush1.msra.mxu0 %v4825
        %4909 = vmatprep.subr.mxu0 %v4830
        %4910 = vmatpush1.msra.mxu0 %v4829
        %4911 = vmatprep.subr.mxu0 %v4834
        %4912 = vmatpush1.msra.mxu0 %v4833
        %4913 = vmatprep.subr.mxu0 %v4838
        %4914 = vmatpush1.msra.mxu0 %v4837
        %4915 = vmatprep.subr.mxu0 %v4842
        %4916 = vmatpush1.msra.mxu0 %v4841
        %4917 = vmatprep.subr.mxu0 %v4846
        %4918 = vmatpush1.msra.mxu0 %v4845
        %4919 = vmatprep.subr.mxu0 %v4850
        %4920 = vmatpush1.msra.mxu0 %v4849
        %4921 = vmatprep.subr.mxu0 %v4854
        %4922 = vmatpush1.msra.mxu0 %v4853
        %4923 = vmatprep.subr.mxu0 %v4858
        %4924 = vmatpush1.msra.mxu0 %v4857
        %4925 = vmatprep.subr.mxu0 %v4862
        %4926 = vmatpush1.msra.mxu0 %v4861
        %4927 = vmatprep.subr.mxu0 %v4866
        %4928 = vmatpush1.msra.mxu0 %v4865
        %4929 = vmatprep.subr.mxu0 %v4870
        %4930 = vmatpush1.msra.mxu0 %v4869
        %4931 = vmatprep.subr.mxu0 %v4874
        %4932 = vmatpush1.msra.mxu0 %v4873
        %4933 = vmatprep.subr.mxu0 %v4878
        %4934 = vmatpush1.msra.mxu0 %v4877
        %4935 = vmatprep.subr.mxu0 0.0
        %4936 = vmatpush1.msra.mxu0 0.0
        %4937 = vmatprep.subr.mxu0 0.0
        %4938 = vmatpush1.msra.mxu0 0.0
        %4939 = vmatprep.subr.mxu0 0.0
        %4940 = vmatpush1.msra.mxu0 0.0
        %4941 = vmatprep.subr.mxu0 0.0
        %4942 = vmatpush1.msra.mxu0 0.0
        %4943 = vmatprep.subr.mxu0 0.0
        %4944 = vmatpush1.msra.mxu0 0.0
        %4945 = vmatprep.subr.mxu0 0.0
        %4946 = vmatpush1.msra.mxu0 0.0
        %4947 = vmatprep.subr.mxu0 0.0
        %4948 = vmatpush1.msra.mxu0 0.0
        %4949 = vmatprep.subr.mxu0 0.0
        %4950 = vmatpush1.msra.mxu0 0.0
        %4951 = vmatprep.subr.mxu0 0.0
        %4952 = vmatpush1.msra.mxu0 0.0
        %4953 = vmatprep.subr.mxu0 0.0
        %4954 = vmatpush1.msra.mxu0 0.0
        %4955 = vmatprep.subr.mxu0 0.0
        %4956 = vmatpush1.msra.mxu0 0.0
        %4957 = vmatprep.subr.mxu0 0.0
        %4958 = vmatpush1.msra.mxu0 0.0
        %4959 = vmatprep.subr.mxu0 0.0
        %4960 = vmatpush1.msra.mxu0 0.0
        %4961 = vmatprep.subr.mxu0 0.0
        %4962 = vmatpush1.msra.mxu0 0.0
        %4963 = vmatprep.subr.mxu0 0.0
        %4964 = vmatpush1.msra.mxu0 0.0
        %4965 = vmatprep.subr.mxu0 0.0
        %4966 = vmatpush1.msra.mxu0 0.0
        %4967 = vmatprep.mubr.f32.mxu0 0.0
        %4968 = vmatmul.mubr.f32.gmra.mrb[0].mxu0 %v4809
        %v4969 = vpop.f32.mrb[0].mxu0
        %v4970 = vadd.f32 %v4886, %v4969
        %v4971 = vpop.f32.mrb[0].mxu0
        %v4972 = vadd.f32 %v4890, %v4971
        %4973 = vmatprep.mubr.f32.mxu0 0.0
        %4974 = vmatmul.mubr.f32.gmra.mrb[0].mxu0 %v4810
        %v4975 = vpop.f32.mrb[0].mxu0
        %v4976 = vadd.f32 %v4886, %v4975
        %v4977 = vpop.f32.mrb[0].mxu0
        %v4978 = vadd.f32 %v4890, %v4977
        %4979 = vmatprep.mubr.f32.mxu0 0.0
        %4980 = vmatmul.mubr.f32.gmra.mrb[0].mxu0 %v4811
        %v4981 = vpop.f32.mrb[0].mxu0
        %v4982 = vadd.f32 %v4886, %v4981
        %v4983 = vpop.f32.mrb[0].mxu0
        %v4984 = vadd.f32 %v4890, %v4983
        %4985 = vmatprep.mubr.f32.mxu0 0.0
        %4986 = vmatmul.mubr.f32.gmra.mrb[0].mxu0 %v4812
        %v4987 = vpop.f32.mrb[0].mxu0
        %v4988 = vadd.f32 %v4886, %v4987
        %v4989 = vpop.f32.mrb[0].mxu0
        %v4990 = vadd.f32 %v4890, %v4989
        %4991 = vmatprep.mubr.f32.mxu0 0.0
        %4992 = vmatmul.mubr.f32.gmra.mrb[0].mxu0 %v4813
        %v4993 = vpop.f32.mrb[0].mxu0
        %v4994 = vadd.f32 %v4886, %v4993
        %v4995 = vpop.f32.mrb[0].mxu0
        %v4996 = vadd.f32 %v4890, %v4995
        %4997 = vmatprep.mubr.f32.mxu0 0.0
        %4998 = vmatmul.mubr.f32.gmra.mrb[0].mxu0 %v4814
        %v4999 = vpop.f32.mrb[0].mxu0
        %v5000 = vadd.f32 %v4886, %v4999
        %v5001 = vpop.f32.mrb[0].mxu0
        %v5002 = vadd.f32 %v4890, %v5001
        %5003 = vmatprep.mubr.f32.mxu0 0.0
        %5004 = vmatmul.mubr.f32.gmra.mrb[0].mxu0 %v4815
        %v5005 = vpop.f32.mrb[0].mxu0
        %v5006 = vadd.f32 %v4886, %v5005
        %v5007 = vpop.f32.mrb[0].mxu0
        %v5008 = vadd.f32 %v4890, %v5007
        %5009 = vmatprep.mubr.f32.mxu0 0.0
        %5010 = vmatmul.mubr.f32.gmra.mrb[0].mxu0 %v4816
        %v5011 = vpop.f32.mrb[0].mxu0
        %v5012 = vadd.f32 %v4886, %v5011
        %v5013 = vpop.f32.mrb[0].mxu0
        %v5014 = vadd.f32 %v4890, %v5013
        %5015 = vdwg.mxu0
        %5016 = vmatprep.subr.mxu0 %v4820
        %5017 = vmatpush1.msra.mxu0 %v4819
        %5018 = vmatprep.subr.mxu0 %v4824
        %5019 = vmatpush1.msra.mxu0 %v4823
        %5020 = vmatprep.subr.mxu0 %v4828
        %5021 = vmatpush1.msra.mxu0 %v4827
        %5022 = vmatprep.subr.mxu0 %v4832
        %5023 = vmatpush1.msra.mxu0 %v4831
        %5024 = vmatprep.subr.mxu0 %v4836
        %5025 = vmatpush1.msra.mxu0 %v4835
        %5026 = vmatprep.subr.mxu0 %v4840
        %5027 = vmatpush1.msra.mxu0 %v4839
        %5028 = vmatprep.subr.mxu0 %v4844
        %5029 = vmatpush1.msra.mxu0 %v4843
        %5030 = vmatprep.subr.mxu0 %v4848
        %5031 = vmatpush1.msra.mxu0 %v4847
        %5032 = vmatprep.subr.mxu0 %v4852
        %5033 = vmatpush1.msra.mxu0 %v4851
        %5034 = vmatprep.subr.mxu0 %v4856
        %5035 = vmatpush1.msra.mxu0 %v4855
        %5036 = vmatprep.subr.mxu0 %v4860
        %5037 = vmatpush1.msra.mxu0 %v4859
        %5038 = vmatprep.subr.mxu0 %v4864
        %5039 = vmatpush1.msra.mxu0 %v4863
        %5040 = vmatprep.subr.mxu0 %v4868
        %5041 = vmatpush1.msra.mxu0 %v4867
        %5042 = vmatprep.subr.mxu0 %v4872
        %5043 = vmatpush1.msra.mxu0 %v4871
        %5044 = vmatprep.subr.mxu0 %v4876
        %5045 = vmatpush1.msra.mxu0 %v4875
        %5046 = vmatprep.subr.mxu0 %v4880
        %5047 = vmatpush1.msra.mxu0 %v4879
        %5048 = vmatprep.subr.mxu0 0.0
        %5049 = vmatpush1.msra.mxu0 0.0
        %5050 = vmatprep.subr.mxu0 0.0
        %5051 = vmatpush1.msra.mxu0 0.0
        %5052 = vmatprep.subr.mxu0 0.0
        %5053 = vmatpush1.msra.mxu0 0.0
        %5054 = vmatprep.subr.mxu0 0.0
        %5055 = vmatpush1.msra.mxu0 0.0
        %5056 = vmatprep.subr.mxu0 0.0
        %5057 = vmatpush1.msra.mxu0 0.0
        %5058 = vmatprep.subr.mxu0 0.0
        %5059 = vmatpush1.msra.mxu0 0.0
        %5060 = vmatprep.subr.mxu0 0.0
        %5061 = vmatpush1.msra.mxu0 0.0
        %5062 = vmatprep.subr.mxu0 0.0
        %5063 = vmatpush1.msra.mxu0 0.0
        %5064 = vmatprep.subr.mxu0 0.0
        %5065 = vmatpush1.msra.mxu0 0.0
        %5066 = vmatprep.subr.mxu0 0.0
        %5067 = vmatpush1.msra.mxu0 0.0
        %5068 = vmatprep.subr.mxu0 0.0
        %5069 = vmatpush1.msra.mxu0 0.0
        %5070 = vmatprep.subr.mxu0 0.0
        %5071 = vmatpush1.msra.mxu0 0.0
        %5072 = vmatprep.subr.mxu0 0.0
        %5073 = vmatpush1.msra.mxu0 0.0
        %5074 = vmatprep.subr.mxu0 0.0
        %5075 = vmatpush1.msra.mxu0 0.0
        %5076 = vmatprep.subr.mxu0 0.0
        %5077 = vmatpush1.msra.mxu0 0.0
        %5078 = vmatprep.subr.mxu0 0.0
        %5079 = vmatpush1.msra.mxu0 0.0
        %5080 = vmatprep.mubr.f32.mxu0 0.0
        %5081 = vmatmul.mubr.f32.gmra.mrb[0].mxu0 %v4809
        %v5082 = vpop.f32.mrb[0].mxu0
        %v5083 = vadd.f32 %v4894, %v5082
        %v5084 = vpop.f32.mrb[0].mxu0
        %v5085 = vadd.f32 %v4898, %v5084
        %5086 = vmatprep.mubr.f32.mxu0 0.0
        %5087 = vmatmul.mubr.f32.gmra.mrb[0].mxu0 %v4810
        %v5088 = vpop.f32.mrb[0].mxu0
        %v5089 = vadd.f32 %v4894, %v5088
        %v5090 = vpop.f32.mrb[0].mxu0
        %v5091 = vadd.f32 %v4898, %v5090
        %5092 = vmatprep.mubr.f32.mxu0 0.0
        %5093 = vmatmul.mubr.f32.gmra.mrb[0].mxu0 %v4811
        %v5094 = vpop.f32.mrb[0].mxu0
        %v5095 = vadd.f32 %v4894, %v5094
        %v5096 = vpop.f32.mrb[0].mxu0
        %v5097 = vadd.f32 %v4898, %v5096
        %5098 = vmatprep.mubr.f32.mxu0 0.0
        %5099 = vmatmul.mubr.f32.gmra.mrb[0].mxu0 %v4812
        %v5100 = vpop.f32.mrb[0].mxu0
        %v5101 = vadd.f32 %v4894, %v5100
        %v5102 = vpop.f32.mrb[0].mxu0
        %v5103 = vadd.f32 %v4898, %v5102
        %5104 = vmatprep.mubr.f32.mxu0 0.0
        %5105 = vmatmul.mubr.f32.gmra.mrb[0].mxu0 %v4813
        %v5106 = vpop.f32.mrb[0].mxu0
        %v5107 = vadd.f32 %v4894, %v5106
        %v5108 = vpop.f32.mrb[0].mxu0
        %v5109 = vadd.f32 %v4898, %v5108
        %5110 = vmatprep.mubr.f32.mxu0 0.0
        %5111 = vmatmul.mubr.f32.gmra.mrb[0].mxu0 %v4814
        %v5112 = vpop.f32.mrb[0].mxu0
        %v5113 = vadd.f32 %v4894, %v5112
        %v5114 = vpop.f32.mrb[0].mxu0
        %v5115 = vadd.f32 %v4898, %v5114
        %5116 = vmatprep.mubr.f32.mxu0 0.0
        %5117 = vmatmul.mubr.f32.gmra.mrb[0].mxu0 %v4815
        %v5118 = vpop.f32.mrb[0].mxu0
        %v5119 = vadd.f32 %v4894, %v5118
        %v5120 = vpop.f32.mrb[0].mxu0
        %v5121 = vadd.f32 %v4898, %v5120
        %5122 = vmatprep.mubr.f32.mxu0 0.0
        %5123 = vmatmul.mubr.f32.gmra.mrb[0].mxu0 %v4816
        %v5124 = vpop.f32.mrb[0].mxu0
        %v5125 = vadd.f32 %v4894, %v5124
        %v5126 = vpop.f32.mrb[0].mxu0
        %v5127 = vadd.f32 %v4898, %v5126
        %5128 = vdwg.mxu0
        %v5129 = vmul.f32 %v4970, 0.5
        %v5130 = vmul.f32 %v4972, 0.5
        %v5131 = vmul.f32 %v5083, 0.5
        %v5132 = vmul.f32 %v5085, 0.5
        %v5133 = vmul.f32 %v4976, 0.5
        %v5134 = vmul.f32 %v4978, 0.5
        %v5135 = vmul.f32 %v5089, 0.5
        %v5136 = vmul.f32 %v5091, 0.5
        %v5137 = vmul.f32 %v4982, 0.5
        %v5138 = vmul.f32 %v4984, 0.5
        %v5139 = vmul.f32 %v5095, 0.5
        %v5140 = vmul.f32 %v5097, 0.5
        %v5141 = vmul.f32 %v4988, 0.5
        %v5142 = vmul.f32 %v4990, 0.5
        %v5143 = vmul.f32 %v5101, 0.5
        %v5144 = vmul.f32 %v5103, 0.5
        %v5145 = vmul.f32 %v4994, 0.5
        %v5146 = vmul.f32 %v4996, 0.5
        %v5147 = vmul.f32 %v5107, 0.5
        %v5148 = vmul.f32 %v5109, 0.5
        %v5149 = vmul.f32 %v5000, 0.5
        %v5150 = vmul.f32 %v5002, 0.5
        %v5151 = vmul.f32 %v5113, 0.5
        %v5152 = vmul.f32 %v5115, 0.5
        %v5153 = vmul.f32 %v5006, 0.5
        %v5154 = vmul.f32 %v5008, 0.5
        %v5155 = vmul.f32 %v5119, 0.5
        %v5156 = vmul.f32 %v5121, 0.5
        %v5157 = vmul.f32 %v5012, 0.5
        %v5158 = vmul.f32 %v5014, 0.5
        %v5159 = vmul.f32 %v5125, 0.5
        %v5160 = vmul.f32 %v5127, 0.5
        %v5161 = vmul.f32 %v4970, 0.044715
        %v5162 = vmul.f32 %v4972, 0.044715
        %v5163 = vmul.f32 %v5083, 0.044715
        %v5164 = vmul.f32 %v5085, 0.044715
        %v5165 = vmul.f32 %v4976, 0.044715
        %v5166 = vmul.f32 %v4978, 0.044715
        %v5167 = vmul.f32 %v5089, 0.044715
        %v5168 = vmul.f32 %v5091, 0.044715
        %v5169 = vmul.f32 %v4982, 0.044715
        %v5170 = vmul.f32 %v4984, 0.044715
        %v5171 = vmul.f32 %v5095, 0.044715
        %v5172 = vmul.f32 %v5097, 0.044715
        %v5173 = vmul.f32 %v4988, 0.044715
        %v5174 = vmul.f32 %v4990, 0.044715
        %v5175 = vmul.f32 %v5101, 0.044715
        %v5176 = vmul.f32 %v5103, 0.044715
        %v5177 = vmul.f32 %v4994, 0.044715
        %v5178 = vmul.f32 %v4996, 0.044715
        %v5179 = vmul.f32 %v5107, 0.044715
        %v5180 = vmul.f32 %v5109, 0.044715
        %v5181 = vmul.f32 %v5000, 0.044715
        %v5182 = vmul.f32 %v5002, 0.044715
        %v5183 = vmul.f32 %v5113, 0.044715
        %v5184 = vmul.f32 %v5115, 0.044715
        %v5185 = vmul.f32 %v5006, 0.044715
        %v5186 = vmul.f32 %v5008, 0.044715
        %v5187 = vmul.f32 %v5119, 0.044715
        %v5188 = vmul.f32 %v5121, 0.044715
        %v5189 = vmul.f32 %v5012, 0.044715
        %v5190 = vmul.f32 %v5014, 0.044715
        %v5191 = vmul.f32 %v5125, 0.044715
        %v5192 = vmul.f32 %v5127, 0.044715
        %v5193 = vmul.f32 %v5161, %v4970
        %v5194 = vmul.f32 %v5162, %v4972
        %v5195 = vmul.f32 %v5163, %v5083
        %v5196 = vmul.f32 %v5164, %v5085
        %v5197 = vmul.f32 %v5165, %v4976
        %v5198 = vmul.f32 %v5166, %v4978
        %v5199 = vmul.f32 %v5167, %v5089
        %v5200 = vmul.f32 %v5168, %v5091
        %v5201 = vmul.f32 %v5169, %v4982
        %v5202 = vmul.f32 %v5170, %v4984
        %v5203 = vmul.f32 %v5171, %v5095
        %v5204 = vmul.f32 %v5172, %v5097
        %v5205 = vmul.f32 %v5173, %v4988
        %v5206 = vmul.f32 %v5174, %v4990
        %v5207 = vmul.f32 %v5175, %v5101
        %v5208 = vmul.f32 %v5176, %v5103
        %v5209 = vmul.f32 %v5177, %v4994
        %v5210 = vmul.f32 %v5178, %v4996
        %v5211 = vmul.f32 %v5179, %v5107
        %v5212 = vmul.f32 %v5180, %v5109
        %v5213 = vmul.f32 %v5181, %v5000
        %v5214 = vmul.f32 %v5182, %v5002
        %v5215 = vmul.f32 %v5183, %v5113
        %v5216 = vmul.f32 %v5184, %v5115
        %v5217 = vmul.f32 %v5185, %v5006
        %v5218 = vmul.f32 %v5186, %v5008
        %v5219 = vmul.f32 %v5187, %v5119
        %v5220 = vmul.f32 %v5188, %v5121
        %v5221 = vmul.f32 %v5189, %v5012
        %v5222 = vmul.f32 %v5190, %v5014
        %v5223 = vmul.f32 %v5191, %v5125
        %v5224 = vmul.f32 %v5192, %v5127
        %v5225 = vmul.f32 %v5193, %v4970
        %v5226 = vmul.f32 %v5194, %v4972
        %v5227 = vmul.f32 %v5195, %v5083
        %v5228 = vmul.f32 %v5196, %v5085
        %v5229 = vmul.f32 %v5197, %v4976
        %v5230 = vmul.f32 %v5198, %v4978
        %v5231 = vmul.f32 %v5199, %v5089
        %v5232 = vmul.f32 %v5200, %v5091
        %v5233 = vmul.f32 %v5201, %v4982
        %v5234 = vmul.f32 %v5202, %v4984
        %v5235 = vmul.f32 %v5203, %v5095
        %v5236 = vmul.f32 %v5204, %v5097
        %v5237 = vmul.f32 %v5205, %v4988
        %v5238 = vmul.f32 %v5206, %v4990
        %v5239 = vmul.f32 %v5207, %v5101
        %v5240 = vmul.f32 %v5208, %v5103
        %v5241 = vmul.f32 %v5209, %v4994
        %v5242 = vmul.f32 %v5210, %v4996
        %v5243 = vmul.f32 %v5211, %v5107
        %v5244 = vmul.f32 %v5212, %v5109
        %v5245 = vmul.f32 %v5213, %v5000
        %v5246 = vmul.f32 %v5214, %v5002
        %v5247 = vmul.f32 %v5215, %v5113
        %v5248 = vmul.f32 %v5216, %v5115
        %v5249 = vmul.f32 %v5217, %v5006
        %v5250 = vmul.f32 %v5218, %v5008
        %v5251 = vmul.f32 %v5219, %v5119
        %v5252 = vmul.f32 %v5220, %v5121
        %v5253 = vmul.f32 %v5221, %v5012
        %v5254 = vmul.f32 %v5222, %v5014
        %v5255 = vmul.f32 %v5223, %v5125
        %v5256 = vmul.f32 %v5224, %v5127
        %v5257 = vadd.f32 %v4970, %v5225
        %v5258 = vadd.f32 %v4972, %v5226
        %v5259 = vadd.f32 %v5083, %v5227
        %v5260 = vadd.f32 %v5085, %v5228
        %v5261 = vadd.f32 %v4976, %v5229
        %v5262 = vadd.f32 %v4978, %v5230
        %v5263 = vadd.f32 %v5089, %v5231
        %v5264 = vadd.f32 %v5091, %v5232
        %v5265 = vadd.f32 %v4982, %v5233
        %v5266 = vadd.f32 %v4984, %v5234
        %v5267 = vadd.f32 %v5095, %v5235
        %v5268 = vadd.f32 %v5097, %v5236
        %v5269 = vadd.f32 %v4988, %v5237
        %v5270 = vadd.f32 %v4990, %v5238
        %v5271 = vadd.f32 %v5101, %v5239
        %v5272 = vadd.f32 %v5103, %v5240
        %v5273 = vadd.f32 %v4994, %v5241
        %v5274 = vadd.f32 %v4996, %v5242
        %v5275 = vadd.f32 %v5107, %v5243
        %v5276 = vadd.f32 %v5109, %v5244
        %v5277 = vadd.f32 %v5000, %v5245
        %v5278 = vadd.f32 %v5002, %v5246
        %v5279 = vadd.f32 %v5113, %v5247
        %v5280 = vadd.f32 %v5115, %v5248
        %v5281 = vadd.f32 %v5006, %v5249
        %v5282 = vadd.f32 %v5008, %v5250
        %v5283 = vadd.f32 %v5119, %v5251
        %v5284 = vadd.f32 %v5121, %v5252
        %v5285 = vadd.f32 %v5012, %v5253
        %v5286 = vadd.f32 %v5014, %v5254
        %v5287 = vadd.f32 %v5125, %v5255
        %v5288 = vadd.f32 %v5127, %v5256
        %v5289 = vmul.f32 %v5257, 0.7978846
        %v5290 = vmul.f32 %v5258, 0.7978846
        %v5291 = vmul.f32 %v5259, 0.7978846
        %v5292 = vmul.f32 %v5260, 0.7978846
        %v5293 = vmul.f32 %v5261, 0.7978846
        %v5294 = vmul.f32 %v5262, 0.7978846
        %v5295 = vmul.f32 %v5263, 0.7978846
        %v5296 = vmul.f32 %v5264, 0.7978846
        %v5297 = vmul.f32 %v5265, 0.7978846
        %v5298 = vmul.f32 %v5266, 0.7978846
        %v5299 = vmul.f32 %v5267, 0.7978846
        %v5300 = vmul.f32 %v5268, 0.7978846
        %v5301 = vmul.f32 %v5269, 0.7978846
        %v5302 = vmul.f32 %v5270, 0.7978846
        %v5303 = vmul.f32 %v5271, 0.7978846
        %v5304 = vmul.f32 %v5272, 0.7978846
        %v5305 = vmul.f32 %v5273, 0.7978846
        %v5306 = vmul.f32 %v5274, 0.7978846
        %v5307 = vmul.f32 %v5275, 0.7978846
        %v5308 = vmul.f32 %v5276, 0.7978846
        %v5309 = vmul.f32 %v5277, 0.7978846
        %v5310 = vmul.f32 %v5278, 0.7978846
        %v5311 = vmul.f32 %v5279, 0.7978846
        %v5312 = vmul.f32 %v5280, 0.7978846
        %v5313 = vmul.f32 %v5281, 0.7978846
        %v5314 = vmul.f32 %v5282, 0.7978846
        %v5315 = vmul.f32 %v5283, 0.7978846
        %v5316 = vmul.f32 %v5284, 0.7978846
        %v5317 = vmul.f32 %v5285, 0.7978846
        %v5318 = vmul.f32 %v5286, 0.7978846
        %v5319 = vmul.f32 %v5287, 0.7978846
        %v5320 = vmul.f32 %v5288, 0.7978846
        %v5321 = vtanh.pop %v5289
        %v5322 = vtanh.pop %v5290
        %v5323 = vtanh.pop %v5291
        %v5324 = vtanh.pop %v5292
        %v5325 = vtanh.pop %v5293
        %v5326 = vtanh.pop %v5294
        %v5327 = vtanh.pop %v5295
        %v5328 = vtanh.pop %v5296
        %v5329 = vtanh.pop %v5297
        %v5330 = vtanh.pop %v5298
        %v5331 = vtanh.pop %v5299
        %v5332 = vtanh.pop %v5300
        %v5333 = vtanh.pop %v5301
        %v5334 = vtanh.pop %v5302
        %v5335 = vtanh.pop %v5303
        %v5336 = vtanh.pop %v5304
        %v5337 = vtanh.pop %v5305
        %v5338 = vtanh.pop %v5306
        %v5339 = vtanh.pop %v5307
        %v5340 = vtanh.pop %v5308
        %v5341 = vtanh.pop %v5309
        %v5342 = vtanh.pop %v5310
        %v5343 = vtanh.pop %v5311
        %v5344 = vtanh.pop %v5312
        %v5345 = vtanh.pop %v5313
        %v5346 = vtanh.pop %v5314
        %v5347 = vtanh.pop %v5315
        %v5348 = vtanh.pop %v5316
        %v5349 = vtanh.pop %v5317
        %v5350 = vtanh.pop %v5318
        %v5351 = vtanh.pop %v5319
        %v5352 = vtanh.pop %v5320
        %v5353 = vadd.f32 %v5321, 1.0
        %v5354 = vadd.f32 %v5322, 1.0
        %v5355 = vadd.f32 %v5323, 1.0
        %v5356 = vadd.f32 %v5324, 1.0
        %v5357 = vadd.f32 %v5325, 1.0
        %v5358 = vadd.f32 %v5326, 1.0
        %v5359 = vadd.f32 %v5327, 1.0
        %v5360 = vadd.f32 %v5328, 1.0
        %v5361 = vadd.f32 %v5329, 1.0
        %v5362 = vadd.f32 %v5330, 1.0
        %v5363 = vadd.f32 %v5331, 1.0
        %v5364 = vadd.f32 %v5332, 1.0
        %v5365 = vadd.f32 %v5333, 1.0
        %v5366 = vadd.f32 %v5334, 1.0
        %v5367 = vadd.f32 %v5335, 1.0
        %v5368 = vadd.f32 %v5336, 1.0
        %v5369 = vadd.f32 %v5337, 1.0
        %v5370 = vadd.f32 %v5338, 1.0
        %v5371 = vadd.f32 %v5339, 1.0
        %v5372 = vadd.f32 %v5340, 1.0
        %v5373 = vadd.f32 %v5341, 1.0
        %v5374 = vadd.f32 %v5342, 1.0
        %v5375 = vadd.f32 %v5343, 1.0
        %v5376 = vadd.f32 %v5344, 1.0
        %v5377 = vadd.f32 %v5345, 1.0
        %v5378 = vadd.f32 %v5346, 1.0
        %v5379 = vadd.f32 %v5347, 1.0
        %v5380 = vadd.f32 %v5348, 1.0
        %v5381 = vadd.f32 %v5349, 1.0
        %v5382 = vadd.f32 %v5350, 1.0
        %v5383 = vadd.f32 %v5351, 1.0
        %v5384 = vadd.f32 %v5352, 1.0
        %v5385 = vmul.f32 %v5129, %v5353
        %v5386 = vmul.f32 %v5130, %v5354
        %v5387 = vmul.f32 %v5131, %v5355
        %v5388 = vmul.f32 %v5132, %v5356
        %v5389 = vmul.f32 %v5133, %v5357
        %v5390 = vmul.f32 %v5134, %v5358
        %v5391 = vmul.f32 %v5135, %v5359
        %v5392 = vmul.f32 %v5136, %v5360
        %v5393 = vmul.f32 %v5137, %v5361
        %v5394 = vmul.f32 %v5138, %v5362
        %v5395 = vmul.f32 %v5139, %v5363
        %v5396 = vmul.f32 %v5140, %v5364
        %v5397 = vmul.f32 %v5141, %v5365
        %v5398 = vmul.f32 %v5142, %v5366
        %v5399 = vmul.f32 %v5143, %v5367
        %v5400 = vmul.f32 %v5144, %v5368
        %v5401 = vmul.f32 %v5145, %v5369
        %v5402 = vmul.f32 %v5146, %v5370
        %v5403 = vmul.f32 %v5147, %v5371
        %v5404 = vmul.f32 %v5148, %v5372
        %v5405 = vmul.f32 %v5149, %v5373
        %v5406 = vmul.f32 %v5150, %v5374
        %v5407 = vmul.f32 %v5151, %v5375
        %v5408 = vmul.f32 %v5152, %v5376
        %v5409 = vmul.f32 %v5153, %v5377
        %v5410 = vmul.f32 %v5154, %v5378
        %v5411 = vmul.f32 %v5155, %v5379
        %v5412 = vmul.f32 %v5156, %v5380
        %v5413 = vmul.f32 %v5157, %v5381
        %v5414 = vmul.f32 %v5158, %v5382
        %v5415 = vmul.f32 %v5159, %v5383
        %v5416 = vmul.f32 %v5160, %v5384
        %v5417 = vld [vmem:[%s11] sm:$0xff]
        %v5418 = vld [vmem:[%s11 + $0x8] sm:$0xff]
        %v5419 = vld [vmem:[%s11 + $0x10] sm:$0xff]
        %v5420 = vld [vmem:[%s11 + $0x18] sm:$0xff]
        %v5421 = vld [vmem:[%s11 + $0x20] sm:$0xff]
        %v5422 = vld [vmem:[%s11 + $0x28] sm:$0xff]
        %v5423 = vld [vmem:[%s11 + $0x30] sm:$0xff]
        %v5424 = vld [vmem:[%s11 + $0x38] sm:$0xff]
        %v5425 = vld [vmem:[%s11 + $0x40] sm:$0xff]
        %v5426 = vld [vmem:[%s11 + $0x48] sm:$0xff]
        %v5427 = vld [vmem:[%s11 + $0x50] sm:$0xff]
        %v5428 = vld [vmem:[%s11 + $0x58] sm:$0xff]
        %v5429 = vld [vmem:[%s11 + $0x60] sm:$0xff]
        %v5430 = vld [vmem:[%s11 + $0x68] sm:$0xff]
        %v5431 = vld [vmem:[%s11 + $0x70] sm:$0xff]
        %v5432 = vld [vmem:[%s11 + $0x78] sm:$0xff]
        %v5433 = vld [vmem:[%s11 + $0x80] sm:$0xff]
        %v5434 = vld [vmem:[%s11 + $0x88] sm:$0xff]
        %v5435 = vld [vmem:[%s11 + $0x90] sm:$0xff]
        %v5436 = vld [vmem:[%s11 + $0x98] sm:$0xff]
        %v5437 = vld [vmem:[%s11 + $0xa0] sm:$0xff]
        %v5438 = vld [vmem:[%s11 + $0xa8] sm:$0xff]
        %v5439 = vld [vmem:[%s11 + $0xb0] sm:$0xff]
        %v5440 = vld [vmem:[%s11 + $0xb8] sm:$0xff]
        %v5441 = vld [vmem:[%s11 + $0xc0] sm:$0xff]
        %v5442 = vld [vmem:[%s11 + $0xc8] sm:$0xff]
        %v5443 = vld [vmem:[%s11 + $0xd0] sm:$0xff]
        %v5444 = vld [vmem:[%s11 + $0xd8] sm:$0xff]
        %v5445 = vld [vmem:[%s11 + $0xe0] sm:$0xff]
        %v5446 = vld [vmem:[%s11 + $0xe8] sm:$0xff]
        %v5447 = vld [vmem:[%s11 + $0xf0] sm:$0xff]
        %v5448 = vld [vmem:[%s11 + $0xf8] sm:$0xff]
        %v5449 = vld [vmem:[%s11 + $0x100] sm:$0xff]
        %v5450 = vld [vmem:[%s11 + $0x108] sm:$0xff]
        %v5451 = vld [vmem:[%s11 + $0x110] sm:$0xff]
        %v5452 = vld [vmem:[%s11 + $0x118] sm:$0xff]
        %v5453 = vld [vmem:[%s11 + $0x120] sm:$0xff]
        %v5454 = vld [vmem:[%s11 + $0x128] sm:$0xff]
        %v5455 = vld [vmem:[%s11 + $0x130] sm:$0xff]
        %v5456 = vld [vmem:[%s11 + $0x138] sm:$0xff]
        %v5457 = vld [vmem:[%s11 + $0x140] sm:$0xff]
        %v5458 = vld [vmem:[%s11 + $0x148] sm:$0xff]
        %v5459 = vld [vmem:[%s11 + $0x150] sm:$0xff]
        %v5460 = vld [vmem:[%s11 + $0x158] sm:$0xff]
        %v5461 = vld [vmem:[%s11 + $0x160] sm:$0xff]
        %v5462 = vld [vmem:[%s11 + $0x168] sm:$0xff]
        %v5463 = vld [vmem:[%s11 + $0x170] sm:$0xff]
        %v5464 = vld [vmem:[%s11 + $0x178] sm:$0xff]
        %v5465 = vld [vmem:[%s11 + $0x180] sm:$0xff]
        %v5466 = vld [vmem:[%s11 + $0x188] sm:$0xff]
        %v5467 = vld [vmem:[%s11 + $0x190] sm:$0xff]
        %v5468 = vld [vmem:[%s11 + $0x198] sm:$0xff]
        %v5469 = vld [vmem:[%s11 + $0x1a0] sm:$0xff]
        %v5470 = vld [vmem:[%s11 + $0x1a8] sm:$0xff]
        %v5471 = vld [vmem:[%s11 + $0x1b0] sm:$0xff]
        %v5472 = vld [vmem:[%s11 + $0x1b8] sm:$0xff]
        %v5473 = vld [vmem:[%s11 + $0x1c0] sm:$0xff]
        %v5474 = vld [vmem:[%s11 + $0x1c8] sm:$0xff]
        %v5475 = vld [vmem:[%s11 + $0x1d0] sm:$0xff]
        %v5476 = vld [vmem:[%s11 + $0x1d8] sm:$0xff]
        %v5477 = vld [vmem:[%s11 + $0x1e0] sm:$0xff]
        %v5478 = vld [vmem:[%s11 + $0x1e8] sm:$0xff]
        %v5479 = vld [vmem:[%s11 + $0x1f0] sm:$0xff]
        %v5480 = vld [vmem:[%s11 + $0x1f8] sm:$0xff]
        %v5481 = vld [vmem:[%s12] sm:$0x1]
        %v5483 = vlaneseq
        %v5484 = vshrl.u32 %v5483, 7
        %v5485 = vsub.s32 0, %v5484
        %v5486 = vrot.slane %v5481, %v5485
        %5488 = vmatprep.subr.mxu0 0.0
        %5489 = vmatpush1.msra.mxu0 %v5417
        %5490 = vmatprep.subr.mxu0 0.0
        %5491 = vmatpush1.msra.mxu0 %v5418
        %5492 = vmatprep.subr.mxu0 0.0
        %5493 = vmatpush1.msra.mxu0 %v5419
        %5494 = vmatprep.subr.mxu0 0.0
        %5495 = vmatpush1.msra.mxu0 %v5420
        %5496 = vmatprep.subr.mxu0 0.0
        %5497 = vmatpush1.msra.mxu0 %v5421
        %5498 = vmatprep.subr.mxu0 0.0
        %5499 = vmatpush1.msra.mxu0 %v5422
        %5500 = vmatprep.subr.mxu0 0.0
        %5501 = vmatpush1.msra.mxu0 %v5423
        %5502 = vmatprep.subr.mxu0 0.0
        %5503 = vmatpush1.msra.mxu0 %v5424
        %5504 = vmatprep.subr.mxu0 0.0
        %5505 = vmatpush1.msra.mxu0 %v5425
        %5506 = vmatprep.subr.mxu0 0.0
        %5507 = vmatpush1.msra.mxu0 %v5426
        %5508 = vmatprep.subr.mxu0 0.0
        %5509 = vmatpush1.msra.mxu0 %v5427
        %5510 = vmatprep.subr.mxu0 0.0
        %5511 = vmatpush1.msra.mxu0 %v5428
        %5512 = vmatprep.subr.mxu0 0.0
        %5513 = vmatpush1.msra.mxu0 %v5429
        %5514 = vmatprep.subr.mxu0 0.0
        %5515 = vmatpush1.msra.mxu0 %v5430
        %5516 = vmatprep.subr.mxu0 0.0
        %5517 = vmatpush1.msra.mxu0 %v5431
        %5518 = vmatprep.subr.mxu0 0.0
        %5519 = vmatpush1.msra.mxu0 %v5432
        %5520 = vmatprep.subr.mxu0 0.0
        %5521 = vmatpush1.msra.mxu0 %v5433
        %5522 = vmatprep.subr.mxu0 0.0
        %5523 = vmatpush1.msra.mxu0 %v5434
        %5524 = vmatprep.subr.mxu0 0.0
        %5525 = vmatpush1.msra.mxu0 %v5435
        %5526 = vmatprep.subr.mxu0 0.0
        %5527 = vmatpush1.msra.mxu0 %v5436
        %5528 = vmatprep.subr.mxu0 0.0
        %5529 = vmatpush1.msra.mxu0 %v5437
        %5530 = vmatprep.subr.mxu0 0.0
        %5531 = vmatpush1.msra.mxu0 %v5438
        %5532 = vmatprep.subr.mxu0 0.0
        %5533 = vmatpush1.msra.mxu0 %v5439
        %5534 = vmatprep.subr.mxu0 0.0
        %5535 = vmatpush1.msra.mxu0 %v5440
        %5536 = vmatprep.subr.mxu0 0.0
        %5537 = vmatpush1.msra.mxu0 %v5441
        %5538 = vmatprep.subr.mxu0 0.0
        %5539 = vmatpush1.msra.mxu0 %v5442
        %5540 = vmatprep.subr.mxu0 0.0
        %5541 = vmatpush1.msra.mxu0 %v5443
        %5542 = vmatprep.subr.mxu0 0.0
        %5543 = vmatpush1.msra.mxu0 %v5444
        %5544 = vmatprep.subr.mxu0 0.0
        %5545 = vmatpush1.msra.mxu0 %v5445
        %5546 = vmatprep.subr.mxu0 0.0
        %5547 = vmatpush1.msra.mxu0 %v5446
        %5548 = vmatprep.subr.mxu0 0.0
        %5549 = vmatpush1.msra.mxu0 %v5447
        %5550 = vmatprep.subr.mxu0 0.0
        %5551 = vmatpush1.msra.mxu0 %v5448
        %5552 = vmatprep.mubr.f32.mxu0 %v5386
        %5553 = vmatmul.mubr.f32.gmra.mrb[0].mxu0 %v5385
        %v5554 = vpop.f32.mrb[0].mxu0
        %v5555 = vadd.f32 %v5486, %v5554
        %v5556 = vpop.f32.mrb[0].mxu0
        %5557 = vmatprep.mubr.f32.mxu0 %v5390
        %5558 = vmatmul.mubr.f32.gmra.mrb[0].mxu0 %v5389
        %v5559 = vpop.f32.mrb[0].mxu0
        %v5560 = vadd.f32 %v5486, %v5559
        %v5561 = vpop.f32.mrb[0].mxu0
        %5562 = vmatprep.mubr.f32.mxu0 %v5394
        %5563 = vmatmul.mubr.f32.gmra.mrb[0].mxu0 %v5393
        %v5564 = vpop.f32.mrb[0].mxu0
        %v5565 = vadd.f32 %v5486, %v5564
        %v5566 = vpop.f32.mrb[0].mxu0
        %5567 = vmatprep.mubr.f32.mxu0 %v5398
        %5568 = vmatmul.mubr.f32.gmra.mrb[0].mxu0 %v5397
        %v5569 = vpop.f32.mrb[0].mxu0
        %v5570 = vadd.f32 %v5486, %v5569
        %v5571 = vpop.f32.mrb[0].mxu0
        %5572 = vmatprep.mubr.f32.mxu0 %v5402
        %5573 = vmatmul.mubr.f32.gmra.mrb[0].mxu0 %v5401
        %v5574 = vpop.f32.mrb[0].mxu0
        %v5575 = vadd.f32 %v5486, %v5574
        %v5576 = vpop.f32.mrb[0].mxu0
        %5577 = vmatprep.mubr.f32.mxu0 %v5406
        %5578 = vmatmul.mubr.f32.gmra.mrb[0].mxu0 %v5405
        %v5579 = vpop.f32.mrb[0].mxu0
        %v5580 = vadd.f32 %v5486, %v5579
        %v5581 = vpop.f32.mrb[0].mxu0
        %5582 = vmatprep.mubr.f32.mxu0 %v5410
        %5583 = vmatmul.mubr.f32.gmra.mrb[0].mxu0 %v5409
        %v5584 = vpop.f32.mrb[0].mxu0
        %v5585 = vadd.f32 %v5486, %v5584
        %v5586 = vpop.f32.mrb[0].mxu0
        %5587 = vmatprep.mubr.f32.mxu0 %v5414
        %5588 = vmatmul.mubr.f32.gmra.mrb[0].mxu0 %v5413
        %v5589 = vpop.f32.mrb[0].mxu0
        %v5590 = vadd.f32 %v5486, %v5589
        %v5591 = vpop.f32.mrb[0].mxu0
        %5592 = vdwg.mxu0
        %5593 = vmatprep.subr.mxu0 0.0
        %5594 = vmatpush1.msra.mxu0 %v5449
        %5595 = vmatprep.subr.mxu0 0.0
        %5596 = vmatpush1.msra.mxu0 %v5450
        %5597 = vmatprep.subr.mxu0 0.0
        %5598 = vmatpush1.msra.mxu0 %v5451
        %5599 = vmatprep.subr.mxu0 0.0
        %5600 = vmatpush1.msra.mxu0 %v5452
        %5601 = vmatprep.subr.mxu0 0.0
        %5602 = vmatpush1.msra.mxu0 %v5453
        %5603 = vmatprep.subr.mxu0 0.0
        %5604 = vmatpush1.msra.mxu0 %v5454
        %5605 = vmatprep.subr.mxu0 0.0
        %5606 = vmatpush1.msra.mxu0 %v5455
        %5607 = vmatprep.subr.mxu0 0.0
        %5608 = vmatpush1.msra.mxu0 %v5456
        %5609 = vmatprep.subr.mxu0 0.0
        %5610 = vmatpush1.msra.mxu0 %v5457
        %5611 = vmatprep.subr.mxu0 0.0
        %5612 = vmatpush1.msra.mxu0 %v5458
        %5613 = vmatprep.subr.mxu0 0.0
        %5614 = vmatpush1.msra.mxu0 %v5459
        %5615 = vmatprep.subr.mxu0 0.0
        %5616 = vmatpush1.msra.mxu0 %v5460
        %5617 = vmatprep.subr.mxu0 0.0
        %5618 = vmatpush1.msra.mxu0 %v5461
        %5619 = vmatprep.subr.mxu0 0.0
        %5620 = vmatpush1.msra.mxu0 %v5462
        %5621 = vmatprep.subr.mxu0 0.0
        %5622 = vmatpush1.msra.mxu0 %v5463
        %5623 = vmatprep.subr.mxu0 0.0
        %5624 = vmatpush1.msra.mxu0 %v5464
        %5625 = vmatprep.subr.mxu0 0.0
        %5626 = vmatpush1.msra.mxu0 %v5465
        %5627 = vmatprep.subr.mxu0 0.0
        %5628 = vmatpush1.msra.mxu0 %v5466
        %5629 = vmatprep.subr.mxu0 0.0
        %5630 = vmatpush1.msra.mxu0 %v5467
        %5631 = vmatprep.subr.mxu0 0.0
        %5632 = vmatpush1.msra.mxu0 %v5468
        %5633 = vmatprep.subr.mxu0 0.0
        %5634 = vmatpush1.msra.mxu0 %v5469
        %5635 = vmatprep.subr.mxu0 0.0
        %5636 = vmatpush1.msra.mxu0 %v5470
        %5637 = vmatprep.subr.mxu0 0.0
        %5638 = vmatpush1.msra.mxu0 %v5471
        %5639 = vmatprep.subr.mxu0 0.0
        %5640 = vmatpush1.msra.mxu0 %v5472
        %5641 = vmatprep.subr.mxu0 0.0
        %5642 = vmatpush1.msra.mxu0 %v5473
        %5643 = vmatprep.subr.mxu0 0.0
        %5644 = vmatpush1.msra.mxu0 %v5474
        %5645 = vmatprep.subr.mxu0 0.0
        %5646 = vmatpush1.msra.mxu0 %v5475
        %5647 = vmatprep.subr.mxu0 0.0
        %5648 = vmatpush1.msra.mxu0 %v5476
        %5649 = vmatprep.subr.mxu0 0.0
        %5650 = vmatpush1.msra.mxu0 %v5477
        %5651 = vmatprep.subr.mxu0 0.0
        %5652 = vmatpush1.msra.mxu0 %v5478
        %5653 = vmatprep.subr.mxu0 0.0
        %5654 = vmatpush1.msra.mxu0 %v5479
        %5655 = vmatprep.subr.mxu0 0.0
        %5656 = vmatpush1.msra.mxu0 %v5480
        %5657 = vmatprep.mubr.f32.mxu0 %v5388
        %5658 = vmatmul.mubr.f32.gmra.mrb[0].mxu0 %v5387
        %v5659 = vpop.f32.mrb[0].mxu0
        %v5660 = vadd.f32 %v5555, %v5659
        %v5661 = vpop.f32.mrb[0].mxu0
        %5662 = vmatprep.mubr.f32.mxu0 %v5392
        %5663 = vmatmul.mubr.f32.gmra.mrb[0].mxu0 %v5391
        %v5664 = vpop.f32.mrb[0].mxu0
        %v5665 = vadd.f32 %v5560, %v5664
        %v5666 = vpop.f32.mrb[0].mxu0
        %5667 = vmatprep.mubr.f32.mxu0 %v5396
        %5668 = vmatmul.mubr.f32.gmra.mrb[0].mxu0 %v5395
        %v5669 = vpop.f32.mrb[0].mxu0
        %v5670 = vadd.f32 %v5565, %v5669
        %v5671 = vpop.f32.mrb[0].mxu0
        %5672 = vmatprep.mubr.f32.mxu0 %v5400
        %5673 = vmatmul.mubr.f32.gmra.mrb[0].mxu0 %v5399
        %v5674 = vpop.f32.mrb[0].mxu0
        %v5675 = vadd.f32 %v5570, %v5674
        %v5676 = vpop.f32.mrb[0].mxu0
        %5677 = vmatprep.mubr.f32.mxu0 %v5404
        %5678 = vmatmul.mubr.f32.gmra.mrb[0].mxu0 %v5403
        %v5679 = vpop.f32.mrb[0].mxu0
        %v5680 = vadd.f32 %v5575, %v5679
        %v5681 = vpop.f32.mrb[0].mxu0
        %5682 = vmatprep.mubr.f32.mxu0 %v5408
        %5683 = vmatmul.mubr.f32.gmra.mrb[0].mxu0 %v5407
        %v5684 = vpop.f32.mrb[0].mxu0
        %v5685 = vadd.f32 %v5580, %v5684
        %v5686 = vpop.f32.mrb[0].mxu0
        %5687 = vmatprep.mubr.f32.mxu0 %v5412
        %5688 = vmatmul.mubr.f32.gmra.mrb[0].mxu0 %v5411
        %v5689 = vpop.f32.mrb[0].mxu0
        %v5690 = vadd.f32 %v5585, %v5689
        %v5691 = vpop.f32.mrb[0].mxu0
        %5692 = vmatprep.mubr.f32.mxu0 %v5416
        %5693 = vmatmul.mubr.f32.gmra.mrb[0].mxu0 %v5415
        %v5694 = vpop.f32.mrb[0].mxu0
        %v5695 = vadd.f32 %v5590, %v5694
        %v5696 = vpop.f32.mrb[0].mxu0
        %5697 = vdwg.mxu0
        %v5698 = vadd.f32 %v4691, %v5660
        %v5699 = vadd.f32 %v4692, %v5665
        %v5700 = vadd.f32 %v4693, %v5670
        %v5701 = vadd.f32 %v4694, %v5675
        %v5702 = vadd.f32 %v4695, %v5680
        %v5703 = vadd.f32 %v4696, %v5685
        %v5704 = vadd.f32 %v4697, %v5690
        %v5705 = vadd.f32 %v4698, %v5695
        %5706 = vst [vmem:[%s433] sm:$0xff] %v5698
        %5707 = vst [vmem:[%s433 + $0x8] sm:$0xff] %v5699
        %5708 = vst [vmem:[%s433 + $0x10] sm:$0xff] %v5700
        %5709 = vst [vmem:[%s433 + $0x18] sm:$0xff] %v5701
        %5710 = vst [vmem:[%s433 + $0x20] sm:$0xff] %v5702
        %5711 = vst [vmem:[%s433 + $0x28] sm:$0xff] %v5703
        %5712 = vst [vmem:[%s433 + $0x30] sm:$0xff] %v5704
        %5713 = vst [vmem:[%s433 + $0x38] sm:$0xff] %v5705
        %s5714 = sand.u32 %s313, 1
        %s5715 = scalar_lea.sflag [#allocation3], %s5714
        %s5716 = sand.u32 %s313, 1
        %s5717 = smul.addr %s5716, 64
        %s5718 = scalar_lea.vmem [#allocation2], %s5717
        // Predicated region
        $region73: #{transformer_forward.1} parent=71 // pred_check
          %p5719 = pneg %p323
        $region74: #{transformer_forward.1} parent=71 // pred_check_branch
          %5721 = sbr.rel (%p5719) target = $region76
        $region75: #{transformer_forward.1} parent=71 // pred_region
          %s5723 = ssub.s32 1024, 1024
          %5724 = vsyncadd %s5715, %s5723
          %s5725 = smul.addr %s27, 8
          %s5726 = smul.addr %s5725, 128
          %s5727 = scalar_lea.hbm %s13, %s5726
          %s5728 = sshll.u32 %s5718, 4
          %s5729 = int_to_ptr.vmem [resolvable:$true] %s5728
          %5734 = dma.vmem_to_hbm [thread:$0]  %s5729, 1024, %s5727, %s5715, 128, 128, 8
        $region76: #{transformer_forward.1} parent=71 // pred_fallthru
          _
      $region72: #{transformer_forward.1} parent=5 // pred_fallthru
        _
      %p5735 = scmp.le.s32.totalorder 2, %s22
      // Predicated region
      $region77: #{transformer_forward.1} parent=5 // pred_check
        %p5736 = pneg %p5735
      $region78: #{transformer_forward.1} parent=5 // pred_check_branch
        %5738 = sbr.rel (%p5736) target = $region80
      $region79: #{transformer_forward.1} parent=5 // pred_region
        %s5739 = ssub.s32 %s22, 2
        // Predicated region
        $region81: #{transformer_forward.1} parent=79 // pred_check
          %p5740 = pneg %p329
        $region82: #{transformer_forward.1} parent=79 // pred_check_branch
          %5742 = sbr.rel (%p5740) target = $region84
        $region83: #{transformer_forward.1} parent=79 // pred_region
          %s5743 = sand.u32 %s314, 1
          %s5744 = scalar_lea.sflag [#allocation3], %s5743
          %s5745 = sand.u32 %s314, 1
          %s5746 = smul.addr %s5745, 64
          %s5747 = scalar_lea.vmem [#allocation2], %s5746
          %5748 = dma.done %s5744, 1024
        $region84: #{transformer_forward.1} parent=79 // pred_fallthru
          _
      $region80: #{transformer_forward.1} parent=5 // pred_fallthru
        _
    $region6: #{transformer_forward.1} parent=1 // loop_footer
      %s26 = sadd.s32 1, %s22
    $region7: #{transformer_forward.1} parent=1 // loop_footer_branch
      %21 = sbr.rel target = $region3
    $region8: #{transformer_forward.1} parent=1 // loop_exit
      _
    %5749 = vsyncpa [#allocation3], 1
    %s5750 = scalar_lea.sflag [#allocation3], 1
    %5751 = vsyncpa %s5750, 1

</llo_original>
